<compile_context>
chip_gen: v7x
topology: tpu7x:2x2x1
jax: 0.10.0
libtpu: 0.0.40
codegen_flags: <defaults>
</compile_context>

<pallas_src>
import functools

import jax
import jax.numpy as jnp
from jax.experimental import pallas as pl
from jax.experimental.pallas import tpu as pltpu


def upsample_kernel(x_ref, w_ref, b_ref, r_ref, fm_ref, o_ref, *, precision):
    # x_ref : (C,  tg, kW)        input row-groups at original resolution (VMEM)
    # w_ref : (Cout*C,)           1x1-conv weight, flattened scalars (SMEM)
    # b_ref : (Cout,)             conv bias (SMEM)
    # r_ref : (kW, 4*kW)          0/1 H+W replication matrix (VMEM, resident)
    # fm_ref: (Cf, tg, 4*kW)      skip feature row-groups (H2/W2 folded to lanes)
    # o_ref : (Cout+Cf, tg, 4*kW) output row-groups (H2/W2 folded to lanes)
    cin = x_ref.shape[0]
    cf = fm_ref.shape[0]
    cout = o_ref.shape[0] - cf

    # TODO(synk): for large channel counts (C >= ~32) switch the 1x1 conv to a
    # channels-on-lanes MXU matmul instead of the per-channel VPU sums below.
    for o in range(cout):
        # 1x1 conv for output channel o at original resolution (VPU). x planes
        # are re-read per output channel: vld slots are idle and this keeps the
        # f32 live ranges short (no long-lived preloaded plane list).
        acc = w_ref[o * cin] * x_ref[0].astype(jnp.float32)
        for c in range(1, cin):
            acc = acc + w_ref[o * cin + c] * x_ref[c].astype(jnp.float32)
        acc = acc + b_ref[o]

        # Fused nearest-x2 in H AND W: one 0/1 replication matmul on the MXU
        # (every output column of R' has exactly one nonzero -> exact), then a
        # single dense full-width store for this channel.
        up = jnp.dot(acc.astype(r_ref.dtype), r_ref[...],
                     precision=precision,
                     preferred_element_type=jnp.float32)
        o_ref[o] = up.astype(o_ref.dtype)

    # Channel concat: the skip connection occupies the trailing channels.
    # TODO(synk): if the downstream consumer can accept conv-out and
    # feature_map separately, dropping this passthrough halves the HBM traffic
    # of this mem-bound kernel.
    o_ref[cout:, :, :] = fm_ref[...].astype(o_ref.dtype)


def _pick_fold(H, W, max_lanes=512):
    """Number of original rows folded into the lane axis.

    Prefers the smallest k dividing H with k*W a multiple of 128 (lane-dense x
    block, small resident R'), else the smallest k with k*W >= 128.
    """
    for k in range(1, H + 1):
        if H % k == 0 and (k * W) % 128 == 0 and k * W <= max_lanes:
            return k
    for k in range(1, H + 1):
        if H % k == 0 and 128 <= k * W <= max_lanes:
            return k
    if W >= 128:
        # TODO(synk): for very large W (>~1k) the resident (W,4W) R' gets big;
        # a (W,2W) width-only matmul + two dense half stores would be better.
        return 1
    return H  # tiny inputs: fold everything (last dim == full array dim, legal)


def _pick_group_tile(Hg, bytes_per_group, budget_bytes, min_steps=1):
    """Largest legal row-group tile under the VMEM budget.

    Legal tiles are divisors of Hg that are multiples of 8, plus Hg itself
    (second-to-last block dim must be a multiple of 8 or the full dim).
    """
    valid = {Hg}
    t = 8
    while t < Hg:
        if Hg % t == 0:
            valid.add(t)
        t += 8
    ordered = sorted(valid, reverse=True)
    for t in ordered:                        # under budget AND enough grid steps
        if t * bytes_per_group <= budget_bytes and Hg // t >= min_steps:
            return t
    for t in ordered:                        # under budget only
        if t * bytes_per_group <= budget_bytes:
            return t
    return min(ordered)                      # best effort: smallest legal tile


def upsample_forward(x, feature_map, weight, bias):
    """Equivalent of UpSample.forward.

    x           : (N, C, H, W)        NCHW
    feature_map : (N, C//2, 2H, 2W)   NCHW
    weight      : (C//2, C, 1, 1)     Conv2d(C, C//2, 1, 1) weight
    bias        : (C//2,)             Conv2d bias
    returns     : (N, C, 2H, 2W)      NCHW
    """
    N, C, H, W = x.shape
    Cout = weight.shape[0]
    Cf = feature_map.shape[1]
    H2, W2 = 2 * H, 2 * W
    Ct = Cout + Cf
    out_dtype = x.dtype

    # ---- lane-dense folding: k original rows -> lane axis (free reshapes) ----
    k = _pick_fold(H, W)
    kW = k * W
    Hg = H // k

    x_v = x.reshape(N, C, Hg, kW)                    # (N, C, Hg, kW)
    fm_v = feature_map.reshape(N, Cf, Hg, 4 * kW)    # (N, Cf, Hg, 4kW)

    # ---- combined HxW nearest-x2 replication matrix R' (kW, 4kW) ----------
    # R'[j*W + w, r*2W + w'] = 1  iff  r // 2 == j  and  w' // 2 == w
    # (block-diagonal: each input row j feeds output rows 2j, 2j+1 of width 2W)
    use_bf16_mxu = (jnp.dtype(x.dtype) == jnp.bfloat16)
    r_dtype = jnp.bfloat16 if use_bf16_mxu else jnp.float32
    precision = (jax.lax.Precision.DEFAULT if use_bf16_mxu
                 else jax.lax.Precision.HIGHEST)
    rows = jnp.arange(kW)
    cols = jnp.arange(4 * kW)
    r_mat = (((cols[None, :] // (2 * W)) // 2 == rows[:, None] // W) &
             ((cols[None, :] % (2 * W)) // 2 == rows[:, None] % W)).astype(r_dtype)

    # ---- conv parameters as SMEM scalars (C is small for this module) ------
    w_flat = weight.reshape(Cout * C).astype(jnp.float32)
    b_flat = bias.reshape(Cout).astype(jnp.float32)

    # ---- per-generation VMEM budget -> row-group tile size -----------------
    try:
        vmem_cap = int(pltpu.get_tpu_info().vmem_capacity_bytes)
    except Exception:
        vmem_cap = 64 * 1024 * 1024          # conservative (v7x-sized) fallback
    vmem_limit = max(32 * 1024 * 1024,
                     min(int(vmem_cap * 0.75), 100 * 1024 * 1024))
    r_bytes = int(r_mat.size) * jnp.dtype(r_dtype).itemsize
    x_isz = jnp.dtype(x.dtype).itemsize
    fm_isz = jnp.dtype(feature_map.dtype).itemsize
    out_isz = jnp.dtype(out_dtype).itemsize
    # Streamed bytes per row-group (x + fm + out blocks); the /6 covers
    # double-buffering of all three streams plus in-kernel f32 temporaries.
    bytes_per_group = (C * kW * x_isz
                       + Cf * 4 * kW * fm_isz
                       + Ct * 4 * kW * out_isz)
    block_budget = max(1 * 1024 * 1024, (vmem_limit - r_bytes) // 6)
    min_steps = 1 if N >= 2 else 2           # keep both v7x TCs busy when N == 1
    tg = _pick_group_tile(Hg, bytes_per_group, block_budget, min_steps)
    grid = (N, Hg // tg)

    flops = 2 * N * H * W * C * Cout + 8 * N * H * W * kW * Cout
    bytes_accessed = (N * C * H * W * x_isz
                      + N * Cf * H2 * W2 * fm_isz
                      + N * Ct * H2 * W2 * out_isz)
    cost = pl.CostEstimate(flops=flops, transcendentals=0,
                           bytes_accessed=bytes_accessed)

    kernel = functools.partial(upsample_kernel, precision=precision)

    out_v = pl.pallas_call(
        kernel,
        out_shape=jax.ShapeDtypeStruct((N, Ct, Hg, 4 * kW), out_dtype),
        grid_spec=pltpu.PrefetchScalarGridSpec(
            num_scalar_prefetch=0,
            grid=grid,
            in_specs=[
                # input row-groups at original resolution (batch dim squeezed)
                pl.BlockSpec((None, C, tg, kW), lambda n, i: (n, 0, i, 0)),
                # conv weight / bias as SMEM scalars
                pl.BlockSpec(memory_space=pltpu.MemorySpace.SMEM),
                pl.BlockSpec(memory_space=pltpu.MemorySpace.SMEM),
                # resident combined H+W replication matrix
                pl.BlockSpec((kW, 4 * kW), lambda n, i: (0, 0)),
                # skip feature row-groups (H2/W2 folded into lanes)
                pl.BlockSpec((None, Cf, tg, 4 * kW), lambda n, i: (n, 0, i, 0)),
            ],
            out_specs=pl.BlockSpec((None, Ct, tg, 4 * kW),
                                   lambda n, i: (n, 0, i, 0)),
        ),
        compiler_params=pltpu.CompilerParams(
            dimension_semantics=("parallel", "parallel"),
            vmem_limit_bytes=int(vmem_limit),
        ),
        cost_estimate=cost,
    )(x_v, w_flat, b_flat, r_mat, fm_v)

    # Unfold the row-groups: (N, Ct, Hg, 4*kW) -> (N, Ct, 2H, 2W)  (free reshape)
    return out_v.reshape(N, Ct, H2, W2)


def reference_forward(x, feature_map, weight, bias):
    """Pure-JAX reference matching the PyTorch module semantics."""
    C = x.shape[1]
    Cout = weight.shape[0]
    up = jnp.repeat(jnp.repeat(x, 2, axis=2), 2, axis=3)
    w2d = weight.reshape(Cout, C).astype(jnp.float32)
    conv = jnp.einsum('nchw,oc->nohw', up.astype(jnp.float32), w2d,
                      precision='highest')
    conv = conv + bias.astype(jnp.float32)[None, :, None, None]
    return jnp.concatenate([conv.astype(x.dtype), feature_map], axis=1)


if __name__ == "__main__":
    key = jax.random.PRNGKey(0)
    k_x, k_fm, k_w, k_b = jax.random.split(key, 4)

    N, C, H, W = 2, 4, 16, 16            # channel=4 -> Conv2d(4, 2, 1, 1)
    Cout = C // 2

    x = jax.random.normal(k_x, (N, C, H, W), dtype=jnp.float32)
    feature_map = jax.random.normal(k_fm, (N, Cout, 2 * H, 2 * W),
                                    dtype=jnp.float32)

    # deterministic synthetic Conv2d(channel, channel//2, 1, 1) parameters
    weight = jax.random.normal(k_w, (Cout, C, 1, 1), dtype=jnp.float32) * 0.1
    bias = jax.random.normal(k_b, (Cout,), dtype=jnp.float32) * 0.1

    fwd = jax.jit(upsample_forward)
    out = jax.block_until_ready(fwd(x, feature_map, weight, bias))

    ref = reference_forward(x, feature_map, weight, bias)
    assert out.shape == (N, C, 2 * H, 2 * W), out.shape
    assert jnp.allclose(out, ref, atol=1e-5, rtol=1e-5), "mismatch vs reference"

    print("KERNEL_OK")
</pallas_src>

<mosaic_0001>
module attributes {stable_mosaic.version = 11 : i64} {
  func.func @upsample_kernel(%arg0: i32, %arg1: i32, %arg2: memref<1x4x2x128xf32, #tpu.memory_space<vmem>>, %arg3: memref<8xf32, #tpu.memory_space<smem>>, %arg4: memref<2xf32, #tpu.memory_space<smem>>, %arg5: memref<128x512xf32, #tpu.memory_space<vmem>>, %arg6: memref<1x2x2x512xf32, #tpu.memory_space<vmem>>, %arg7: memref<1x4x2x512xf32, #tpu.memory_space<vmem>>) attributes {dimension_semantics = [#tpu.dimension_semantics<parallel>, #tpu.dimension_semantics<parallel>], iteration_bounds = array<i64: 2, 1>, scalar_prefetch = 0 : i64, scratch_operands = 0 : i64, tpu.core_type = #tpu.core_type<tc>, window_params = [{transform_indices = @transform_0, window_bounds = array<i64: 1, 4, 2, 128>}, {transform_indices = @transform_1, window_bounds = array<i64: 8>}, {transform_indices = @transform_2, window_bounds = array<i64: 2>}, {pipeline_mode = #tpu.pipeline_mode<synchronous>, transform_indices = @transform_3, window_bounds = array<i64: 128, 512>}, {transform_indices = @transform_4, window_bounds = array<i64: 1, 2, 2, 512>}, {transform_indices = @transform_5, window_bounds = array<i64: 1, 4, 2, 512>}]} {
    %c0 = arith.constant 0 : index
    %0 = memref.load %arg3[%c0] : memref<8xf32, #tpu.memory_space<smem>>
    %c0_0 = arith.constant 0 : index
    %c0_1 = arith.constant 0 : index
    %c0_2 = arith.constant 0 : index
    %c0_3 = arith.constant 0 : index
    %1 = vector.load %arg2[%c0_0, %c0_1, %c0_2, %c0_3] : memref<1x4x2x128xf32, #tpu.memory_space<vmem>>, vector<1x1x2x128xf32>
    %2 = vector.shape_cast %1 : vector<1x1x2x128xf32> to vector<2x128xf32>
    %3 = vector.broadcast %0 : f32 to vector<2x128xf32>
    %4 = arith.mulf %3, %2 : vector<2x128xf32>
    %c1 = arith.constant 1 : index
    %5 = memref.load %arg3[%c1] : memref<8xf32, #tpu.memory_space<smem>>
    %c0_4 = arith.constant 0 : index
    %c1_5 = arith.constant 1 : index
    %c0_6 = arith.constant 0 : index
    %c0_7 = arith.constant 0 : index
    %6 = vector.load %arg2[%c0_4, %c1_5, %c0_6, %c0_7] : memref<1x4x2x128xf32, #tpu.memory_space<vmem>>, vector<1x1x2x128xf32>
    %7 = vector.shape_cast %6 : vector<1x1x2x128xf32> to vector<2x128xf32>
    %8 = vector.broadcast %5 : f32 to vector<2x128xf32>
    %9 = arith.mulf %8, %7 : vector<2x128xf32>
    %10 = arith.addf %4, %9 : vector<2x128xf32>
    %c2 = arith.constant 2 : index
    %11 = memref.load %arg3[%c2] : memref<8xf32, #tpu.memory_space<smem>>
    %c0_8 = arith.constant 0 : index
    %c2_9 = arith.constant 2 : index
    %c0_10 = arith.constant 0 : index
    %c0_11 = arith.constant 0 : index
    %12 = vector.load %arg2[%c0_8, %c2_9, %c0_10, %c0_11] : memref<1x4x2x128xf32, #tpu.memory_space<vmem>>, vector<1x1x2x128xf32>
    %13 = vector.shape_cast %12 : vector<1x1x2x128xf32> to vector<2x128xf32>
    %14 = vector.broadcast %11 : f32 to vector<2x128xf32>
    %15 = arith.mulf %14, %13 : vector<2x128xf32>
    %16 = arith.addf %10, %15 : vector<2x128xf32>
    %c3 = arith.constant 3 : index
    %17 = memref.load %arg3[%c3] : memref<8xf32, #tpu.memory_space<smem>>
    %c0_12 = arith.constant 0 : index
    %c3_13 = arith.constant 3 : index
    %c0_14 = arith.constant 0 : index
    %c0_15 = arith.constant 0 : index
    %18 = vector.load %arg2[%c0_12, %c3_13, %c0_14, %c0_15] : memref<1x4x2x128xf32, #tpu.memory_space<vmem>>, vector<1x1x2x128xf32>
    %19 = vector.shape_cast %18 : vector<1x1x2x128xf32> to vector<2x128xf32>
    %20 = vector.broadcast %17 : f32 to vector<2x128xf32>
    %21 = arith.mulf %20, %19 : vector<2x128xf32>
    %22 = arith.addf %16, %21 : vector<2x128xf32>
    %c0_16 = arith.constant 0 : index
    %23 = memref.load %arg4[%c0_16] : memref<2xf32, #tpu.memory_space<smem>>
    %24 = vector.broadcast %23 : f32 to vector<2x128xf32>
    %25 = arith.addf %22, %24 : vector<2x128xf32>
    %c0_17 = arith.constant 0 : index
    %c0_18 = arith.constant 0 : index
    %26 = vector.load %arg5[%c0_17, %c0_18] : memref<128x512xf32, #tpu.memory_space<vmem>>, vector<128x512xf32>
    %cst = arith.constant dense<0.000000e+00> : vector<2x512xf32>
    %27 = tpu.matmul %25, %26, %cst {dimension_numbers = #tpu.dot_dimension_numbers<[1], [0], [0], [1], [0, 0, 1, 1], [], []>, precision = #tpu.contract_precision<fp32>} : vector<2x128xf32>, vector<128x512xf32>, vector<2x512xf32> -> vector<2x512xf32>
    %c0_19 = arith.constant 0 : index
    %c0_20 = arith.constant 0 : index
    %c0_21 = arith.constant 0 : index
    %c0_22 = arith.constant 0 : index
    %28 = vector.load %arg7[%c0_19, %c0_20, %c0_21, %c0_22] : memref<1x4x2x512xf32, #tpu.memory_space<vmem>>, vector<1x1x2x512xf32>
    %29 = vector.shape_cast %28 : vector<1x1x2x512xf32> to vector<2x512xf32>
    %30 = vector.shape_cast %27 : vector<2x512xf32> to vector<1x1x2x512xf32>
    tpu.vector_store %arg7[%c0_19, %c0_20, %c0_21, %c0_22], %30 {strides = array<i32>} : memref<1x4x2x512xf32, #tpu.memory_space<vmem>>, vector<1x1x2x512xf32>,
    %c4 = arith.constant 4 : index
    %31 = memref.load %arg3[%c4] : memref<8xf32, #tpu.memory_space<smem>>
    %c0_23 = arith.constant 0 : index
    %c0_24 = arith.constant 0 : index
    %c0_25 = arith.constant 0 : index
    %c0_26 = arith.constant 0 : index
    %32 = vector.load %arg2[%c0_23, %c0_24, %c0_25, %c0_26] : memref<1x4x2x128xf32, #tpu.memory_space<vmem>>, vector<1x1x2x128xf32>
    %33 = vector.shape_cast %32 : vector<1x1x2x128xf32> to vector<2x128xf32>
    %34 = vector.broadcast %31 : f32 to vector<2x128xf32>
    %35 = arith.mulf %34, %33 : vector<2x128xf32>
    %c5 = arith.constant 5 : index
    %36 = memref.load %arg3[%c5] : memref<8xf32, #tpu.memory_space<smem>>
    %c0_27 = arith.constant 0 : index
    %c1_28 = arith.constant 1 : index
    %c0_29 = arith.constant 0 : index
    %c0_30 = arith.constant 0 : index
    %37 = vector.load %arg2[%c0_27, %c1_28, %c0_29, %c0_30] : memref<1x4x2x128xf32, #tpu.memory_space<vmem>>, vector<1x1x2x128xf32>
    %38 = vector.shape_cast %37 : vector<1x1x2x128xf32> to vector<2x128xf32>
    %39 = vector.broadcast %36 : f32 to vector<2x128xf32>
    %40 = arith.mulf %39, %38 : vector<2x128xf32>
    %41 = arith.addf %35, %40 : vector<2x128xf32>
    %c6 = arith.constant 6 : index
    %42 = memref.load %arg3[%c6] : memref<8xf32, #tpu.memory_space<smem>>
    %c0_31 = arith.constant 0 : index
    %c2_32 = arith.constant 2 : index
    %c0_33 = arith.constant 0 : index
    %c0_34 = arith.constant 0 : index
    %43 = vector.load %arg2[%c0_31, %c2_32, %c0_33, %c0_34] : memref<1x4x2x128xf32, #tpu.memory_space<vmem>>, vector<1x1x2x128xf32>
    %44 = vector.shape_cast %43 : vector<1x1x2x128xf32> to vector<2x128xf32>
    %45 = vector.broadcast %42 : f32 to vector<2x128xf32>
    %46 = arith.mulf %45, %44 : vector<2x128xf32>
    %47 = arith.addf %41, %46 : vector<2x128xf32>
    %c7 = arith.constant 7 : index
    %48 = memref.load %arg3[%c7] : memref<8xf32, #tpu.memory_space<smem>>
    %c0_35 = arith.constant 0 : index
    %c3_36 = arith.constant 3 : index
    %c0_37 = arith.constant 0 : index
    %c0_38 = arith.constant 0 : index
    %49 = vector.load %arg2[%c0_35, %c3_36, %c0_37, %c0_38] : memref<1x4x2x128xf32, #tpu.memory_space<vmem>>, vector<1x1x2x128xf32>
    %50 = vector.shape_cast %49 : vector<1x1x2x128xf32> to vector<2x128xf32>
    %51 = vector.broadcast %48 : f32 to vector<2x128xf32>
    %52 = arith.mulf %51, %50 : vector<2x128xf32>
    %53 = arith.addf %47, %52 : vector<2x128xf32>
    %c1_39 = arith.constant 1 : index
    %54 = memref.load %arg4[%c1_39] : memref<2xf32, #tpu.memory_space<smem>>
    %55 = vector.broadcast %54 : f32 to vector<2x128xf32>
    %56 = arith.addf %53, %55 : vector<2x128xf32>
    %c0_40 = arith.constant 0 : index
    %c0_41 = arith.constant 0 : index
    %57 = vector.load %arg5[%c0_40, %c0_41] : memref<128x512xf32, #tpu.memory_space<vmem>>, vector<128x512xf32>
    %cst_42 = arith.constant dense<0.000000e+00> : vector<2x512xf32>
    %58 = tpu.matmul %56, %57, %cst_42 {dimension_numbers = #tpu.dot_dimension_numbers<[1], [0], [0], [1], [0, 0, 1, 1], [], []>, precision = #tpu.contract_precision<fp32>} : vector<2x128xf32>, vector<128x512xf32>, vector<2x512xf32> -> vector<2x512xf32>
    %c0_43 = arith.constant 0 : index
    %c1_44 = arith.constant 1 : index
    %c0_45 = arith.constant 0 : index
    %c0_46 = arith.constant 0 : index
    %59 = vector.load %arg7[%c0_43, %c1_44, %c0_45, %c0_46] : memref<1x4x2x512xf32, #tpu.memory_space<vmem>>, vector<1x1x2x512xf32>
    %60 = vector.shape_cast %59 : vector<1x1x2x512xf32> to vector<2x512xf32>
    %61 = vector.shape_cast %58 : vector<2x512xf32> to vector<1x1x2x512xf32>
    tpu.vector_store %arg7[%c0_43, %c1_44, %c0_45, %c0_46], %61 {strides = array<i32>} : memref<1x4x2x512xf32, #tpu.memory_space<vmem>>, vector<1x1x2x512xf32>,
    %c0_47 = arith.constant 0 : index
    %c0_48 = arith.constant 0 : index
    %c0_49 = arith.constant 0 : index
    %c0_50 = arith.constant 0 : index
    %62 = vector.load %arg6[%c0_47, %c0_48, %c0_49, %c0_50] : memref<1x2x2x512xf32, #tpu.memory_space<vmem>>, vector<1x2x2x512xf32>
    %63 = vector.shape_cast %62 : vector<1x2x2x512xf32> to vector<2x2x512xf32>
    %c0_51 = arith.constant 0 : index
    %c2_52 = arith.constant 2 : index
    %c0_53 = arith.constant 0 : index
    %c0_54 = arith.constant 0 : index
    %64 = vector.load %arg7[%c0_51, %c2_52, %c0_53, %c0_54] : memref<1x4x2x512xf32, #tpu.memory_space<vmem>>, vector<1x2x2x512xf32>
    %65 = vector.shape_cast %64 : vector<1x2x2x512xf32> to vector<2x2x512xf32>
    %66 = vector.shape_cast %63 : vector<2x2x512xf32> to vector<1x2x2x512xf32>
    tpu.vector_store %arg7[%c0_51, %c2_52, %c0_53, %c0_54], %66 {strides = array<i32>} : memref<1x4x2x512xf32, #tpu.memory_space<vmem>>, vector<1x2x2x512xf32>,
    return
  }
  func.func @transform_0(%arg0: i32, %arg1: i32) -> (i32, i32, i32, i32) {
    %c0_i32 = arith.constant 0 : i32
    %c0_i32_0 = arith.constant 0 : i32
    %c0_i32_1 = arith.constant 0 : i32
    return %arg0, %c0_i32, %arg1, %c0_i32_0 : i32, i32, i32, i32
  }
  func.func @transform_1(%arg0: i32, %arg1: i32) -> i32 {
    %c0_i32 = arith.constant 0 : i32
    %c0_i32_0 = arith.constant 0 : i32
    return %c0_i32 : i32
  }
  func.func @transform_2(%arg0: i32, %arg1: i32) -> i32 {
    %c0_i32 = arith.constant 0 : i32
    %c0_i32_0 = arith.constant 0 : i32
    return %c0_i32 : i32
  }
  func.func @transform_3(%arg0: i32, %arg1: i32) -> (i32, i32) {
    %c0_i32 = arith.constant 0 : i32
    %c0_i32_0 = arith.constant 0 : i32
    %c0_i32_1 = arith.constant 0 : i32
    return %c0_i32, %c0_i32_0 : i32, i32
  }
  func.func @transform_4(%arg0: i32, %arg1: i32) -> (i32, i32, i32, i32) {
    %c0_i32 = arith.constant 0 : i32
    %c0_i32_0 = arith.constant 0 : i32
    %c0_i32_1 = arith.constant 0 : i32
    return %arg0, %c0_i32, %arg1, %c0_i32_0 : i32, i32, i32, i32
  }
  func.func @transform_5(%arg0: i32, %arg1: i32) -> (i32, i32, i32, i32) {
    %c0_i32 = arith.constant 0 : i32
    %c0_i32_0 = arith.constant 0 : i32
    %c0_i32_1 = arith.constant 0 : i32
    return %arg0, %c0_i32, %arg1, %c0_i32_0 : i32, i32, i32, i32
  }
}

</mosaic_0001>

<llo_original>
// kernel: upsample_forward.1
$region0: #{upsample_forward.1}
  #allocation0 [shape = 'u32[]', space=smem, size = 0x4, offset = 0x4, fixed_abs, tag = 'smem constant byte address 0x4 - core index']
  #allocation1 [shape = 'u32[144,128]{1,0:T(1,128)}', space=vmem, size = 0x12000, scoped, tag = 'internal scratch']
  %s0 = inlined_call_operand.vmem [shape: f32[2,4,2,128], index: 0, kind: input, shape index: {}]
  %s1 = inlined_call_operand.vmem [shape: f32[8], index: 1, kind: input, shape index: {}]
  %s2 = inlined_call_operand.vmem [shape: f32[2], index: 2, kind: input, shape index: {}]
  %s3 = inlined_call_operand.vmem [shape: f32[128,512], index: 3, kind: input, shape index: {}]
  %s4 = inlined_call_operand.vmem [shape: f32[2,2,2,512], index: 4, kind: input, shape index: {}]
  %s5 = inlined_call_operand.vmem [shape: f32[2,4,2,512], index: 5, kind: output, shape index: {}]
  %s6 = sld [smem:[#allocation0]]
  $region61: #{upsample_forward.1} parent=0
    _
  %s8 = ssub.s32 1, %s6
  %s9 = scalar_select 0, %s8, %s6
  $region1: #{upsample_forward.1} parent=0
    #allocation2 [shape = 'u8[512]{0}', space=smem, size = 0x200, scoped, tag = 'input window, operand 1, single buffered']
    #allocation3 [shape = 's32[2]{0}', space=sflag, size = 0x8, scoped, tag = 'scoped memory for upsample_forward.1']
    #allocation4 [shape = 'u8[512]{0}', space=smem, size = 0x200, scoped, tag = 'input window, operand 2, single buffered']
    #allocation5 [shape = 's32[1]{0}', space=sflag, size = 0x4, scoped, tag = 'scoped memory for upsample_forward.1']
    %10 = vsyncpa [#allocation3], 0
    %11 = vsyncpa [#allocation5], 0
    loop: start=0, step=1, limit=4
    $region2: #{upsample_forward.1} parent=1 // loop_pre_header
      _
    $region3: #{upsample_forward.1} parent=1 // loop_header
      %s13 = sphi 0, %s17
      %p14 = scmp.ge.s32.totalorder %s13, 4
      %s20 = sphi 0, %s32
      %s21 = sphi 0, %s28
      %s22 = sphi 0, %s20
      %s23 = sphi 0, %s21
      %s24 = sphi 0, %s22
      %s25 = sphi 0, %s23
      %s37 = sphi 0, %s39
      %s40 = sphi 0, %s37
      %s41 = sphi 0, %s40
      %s57 = sphi 0, %s41
      %s61 = sphi 0, %s61
      %s63 = sphi 0, %s61
      %s64 = sphi 0, %s63
      %s78 = sphi 0, %s64
      %s82 = sphi 0, %s82
      %s84 = sphi 0, %s82
      %s85 = sphi 0, %s84
      %s99 = sphi 0, %s85
      %s103 = sphi 0, %s103
      %s105 = sphi 0, %s103
      %s106 = sphi 0, %s105
      %s120 = sphi 0, %s106
      %s128 = sphi 0, %s130
      %s131 = sphi 0, %s128
      %s132 = sphi 0, %s131
      %s148 = sphi 0, %s132
      %s156 = sphi 0, %s158
      %s159 = sphi 0, %s156
      %s160 = sphi 0, %s159
      %s176 = sphi 0, %s160
    $region4: #{upsample_forward.1} parent=1 // loop_header_branch
      %16 = sbr.rel (%p14) target = $region8
    $region5: #{upsample_forward.1} parent=1 // loop_body
      %s18 = ssub.s32 %s13, 1
      %s19 = ssub.s32 %s13, 2
      %s26 = sadd.s32 1, %s21
      %p27 = scmp.ge.s32.totalorder %s26, 1
      %s28 = scalar_select %p27, 0, %s26
      %s29 = sadd.s32 1, %s20
      %s30 = scalar_select %p27, %s29, %s20
      %p31 = scmp.ge.s32.totalorder %s30, 2
      %s32 = scalar_select %p31, 0, %s30
      %s33 = ssub.s32 %s20, %s32
      %s34 = ssub.s32 %s21, %s28
      %s35 = sor.u32 %s33, %s34
      %p36 = scmp.eq.s32.totalorder %s35, 0
      %s38 = sadd.s32 %s37, 1
      %s39 = scalar_select %p36, %s37, %s38
      %p42 = pneg %p36
      %p43 = scmp.eq.s32.totalorder %s13, 1
      %p44 = por %p42, %p43
      %p45 = scmp.ne.s32.totalorder %s37, %s40
      %p46 = scmp.eq.s32.totalorder %s13, 0
      %p47 = por %p45, %p46
      %p48 = scmp.ne.s32.totalorder %s37, %s40
      %p49 = scmp.eq.s32.totalorder %s18, 1
      %p50 = por %p48, %p49
      %p51 = scmp.ne.s32.totalorder %s40, %s41
      %p52 = scmp.eq.s32.totalorder %s18, 0
      %p53 = por %p51, %p52
      %p54 = scmp.ne.s32.totalorder %s40, %s41
      %p55 = scmp.eq.s32.totalorder %s19, 1
      %p56 = por %p54, %p55
      %p58 = scmp.ne.s32.totalorder %s41, %s57
      %p59 = scmp.eq.s32.totalorder %s19, 0
      %p60 = por %p58, %p59
      %s62 = sadd.s32 %s61, 1
      %p65 = scmp.eq.s32.totalorder %s13, 1
      %p66 = scmp.ne.s32.totalorder %s61, %s63
      %p67 = scmp.eq.s32.totalorder %s13, 0
      %p68 = por %p66, %p67
      %p69 = scmp.ne.s32.totalorder %s61, %s63
      %p70 = scmp.eq.s32.totalorder %s18, 1
      %p71 = por %p69, %p70
      %p72 = scmp.ne.s32.totalorder %s63, %s64
      %p73 = scmp.eq.s32.totalorder %s18, 0
      %p74 = por %p72, %p73
      %p75 = scmp.ne.s32.totalorder %s63, %s64
      %p76 = scmp.eq.s32.totalorder %s19, 1
      %p77 = por %p75, %p76
      %p79 = scmp.ne.s32.totalorder %s64, %s78
      %p80 = scmp.eq.s32.totalorder %s19, 0
      %p81 = por %p79, %p80
      %s83 = sadd.s32 %s82, 1
      %p86 = scmp.eq.s32.totalorder %s13, 1
      %p87 = scmp.ne.s32.totalorder %s82, %s84
      %p88 = scmp.eq.s32.totalorder %s13, 0
      %p89 = por %p87, %p88
      %p90 = scmp.ne.s32.totalorder %s82, %s84
      %p91 = scmp.eq.s32.totalorder %s18, 1
      %p92 = por %p90, %p91
      %p93 = scmp.ne.s32.totalorder %s84, %s85
      %p94 = scmp.eq.s32.totalorder %s18, 0
      %p95 = por %p93, %p94
      %p96 = scmp.ne.s32.totalorder %s84, %s85
      %p97 = scmp.eq.s32.totalorder %s19, 1
      %p98 = por %p96, %p97
      %p100 = scmp.ne.s32.totalorder %s85, %s99
      %p101 = scmp.eq.s32.totalorder %s19, 0
      %p102 = por %p100, %p101
      %s104 = sadd.s32 %s103, 1
      %p107 = scmp.eq.s32.totalorder %s13, 1
      %p108 = scmp.ne.s32.totalorder %s103, %s105
      %p109 = scmp.eq.s32.totalorder %s13, 0
      %p110 = por %p108, %p109
      %p111 = scmp.ne.s32.totalorder %s103, %s105
      %p112 = scmp.eq.s32.totalorder %s18, 1
      %p113 = por %p111, %p112
      %p114 = scmp.ne.s32.totalorder %s105, %s106
      %p115 = scmp.eq.s32.totalorder %s18, 0
      %p116 = por %p114, %p115
      %p117 = scmp.ne.s32.totalorder %s105, %s106
      %p118 = scmp.eq.s32.totalorder %s19, 1
      %p119 = por %p117, %p118
      %p121 = scmp.ne.s32.totalorder %s106, %s120
      %p122 = scmp.eq.s32.totalorder %s19, 0
      %p123 = por %p121, %p122
      %s124 = ssub.s32 %s20, %s32
      %s125 = ssub.s32 %s21, %s28
      %s126 = sor.u32 %s124, %s125
      %p127 = scmp.eq.s32.totalorder %s126, 0
      %s129 = sadd.s32 %s128, 1
      %s130 = scalar_select %p127, %s128, %s129
      %p133 = pneg %p127
      %p134 = scmp.eq.s32.totalorder %s13, 1
      %p135 = por %p133, %p134
      %p136 = scmp.ne.s32.totalorder %s128, %s131
      %p137 = scmp.eq.s32.totalorder %s13, 0
      %p138 = por %p136, %p137
      %p139 = scmp.ne.s32.totalorder %s128, %s131
      %p140 = scmp.eq.s32.totalorder %s18, 1
      %p141 = por %p139, %p140
      %p142 = scmp.ne.s32.totalorder %s131, %s132
      %p143 = scmp.eq.s32.totalorder %s18, 0
      %p144 = por %p142, %p143
      %p145 = scmp.ne.s32.totalorder %s131, %s132
      %p146 = scmp.eq.s32.totalorder %s19, 1
      %p147 = por %p145, %p146
      %p149 = scmp.ne.s32.totalorder %s132, %s148
      %p150 = scmp.eq.s32.totalorder %s19, 0
      %p151 = por %p149, %p150
      %s152 = ssub.s32 %s20, %s32
      %s153 = ssub.s32 %s21, %s28
      %s154 = sor.u32 %s152, %s153
      %p155 = scmp.eq.s32.totalorder %s154, 0
      %s157 = sadd.s32 %s156, 1
      %s158 = scalar_select %p155, %s156, %s157
      %p161 = pneg %p155
      %p162 = scmp.eq.s32.totalorder %s13, 1
      %p163 = por %p161, %p162
      %p164 = scmp.ne.s32.totalorder %s156, %s159
      %p165 = scmp.eq.s32.totalorder %s13, 0
      %p166 = por %p164, %p165
      %p167 = scmp.ne.s32.totalorder %s156, %s159
      %p168 = scmp.eq.s32.totalorder %s18, 1
      %p169 = por %p167, %p168
      %p170 = scmp.ne.s32.totalorder %s159, %s160
      %p171 = scmp.eq.s32.totalorder %s18, 0
      %p172 = por %p170, %p171
      %p173 = scmp.ne.s32.totalorder %s159, %s160
      %p174 = scmp.eq.s32.totalorder %s19, 1
      %p175 = por %p173, %p174
      %p177 = scmp.ne.s32.totalorder %s160, %s176
      %p178 = scmp.eq.s32.totalorder %s19, 0
      %p179 = por %p177, %p178
      %p180 = scmp.le.s32.totalorder 1, %s13
      %p181 = scmp.lt.s32.totalorder %s13, 3
      %p182 = pnand %p180, %p181
      %p183 = pneg %p182
      // Predicated region
      $region9: #{upsample_forward.1} parent=5 // pred_check
        _
      $region10: #{upsample_forward.1} parent=5 // pred_check_branch
        %185 = sbr.rel (%p182) target = $region12
      $region11: #{upsample_forward.1} parent=5 // pred_region
        %s186 = ssub.s32 %s13, 1
        // Predicated region
        $region13: #{upsample_forward.1} parent=11 // pred_check
          %p187 = pneg %p74
        $region14: #{upsample_forward.1} parent=11 // pred_check_branch
          %189 = sbr.rel (%p187) target = $region16
        $region15: #{upsample_forward.1} parent=11 // pred_region
          %s191 = ssub.s32 16, 16
          %192 = vsyncadd [#allocation3], %s191
          %s194 = sshll.u32 %s1, 4
          %s195 = int_to_ptr.vmem [resolvable:$true] %s194
          %197 = dma.vmem_to_smem %s195, 16, [#allocation2], [#allocation3]
        $region16: #{upsample_forward.1} parent=11 // pred_fallthru
          _
        // Predicated region
        $region17: #{upsample_forward.1} parent=11 // pred_check
          %p198 = pneg %p95
        $region18: #{upsample_forward.1} parent=11 // pred_check_branch
          %200 = sbr.rel (%p198) target = $region20
        $region19: #{upsample_forward.1} parent=11 // pred_region
          %s202 = ssub.s32 16, 16
          %203 = vsyncadd [#allocation5], %s202
          %s205 = sshll.u32 %s2, 4
          %s206 = int_to_ptr.vmem [resolvable:$true] %s205
          %208 = dma.vmem_to_smem %s206, 16, [#allocation4], [#allocation5]
        $region20: #{upsample_forward.1} parent=11 // pred_fallthru
          _
        // Predicated region
        $region21: #{upsample_forward.1} parent=11 // pred_check
          %p209 = pneg %p116
        $region22: #{upsample_forward.1} parent=11 // pred_check_branch
          %211 = sbr.rel (%p209) target = $region24
        $region23: #{upsample_forward.1} parent=11 // pred_region
          _
        $region24: #{upsample_forward.1} parent=11 // pred_fallthru
          _
      $region12: #{upsample_forward.1} parent=5 // pred_fallthru
        _
      %p212 = scmp.lt.s32.totalorder %s13, 2
      // Predicated region
      $region25: #{upsample_forward.1} parent=5 // pred_check
        %p213 = pneg %p212
      $region26: #{upsample_forward.1} parent=5 // pred_check_branch
        %215 = sbr.rel (%p213) target = $region28
      $region27: #{upsample_forward.1} parent=5 // pred_region
        // Predicated region
        $region29: #{upsample_forward.1} parent=27 // pred_check
          %p216 = pneg %p47
        $region30: #{upsample_forward.1} parent=27 // pred_check_branch
          %218 = sbr.rel (%p216) target = $region32
        $region31: #{upsample_forward.1} parent=27 // pred_region
          %p219 = scmp.lt.s32.totalorder %s20, 1
          %s220 = scalar_select %p219, %s20, 1
          %p221 = scmp.lt.s32.totalorder %s21, 0
          %s222 = scalar_select %p221, %s21, 0
          %s223 = smul.addr %s220, 4
          %s224 = sadd.s32 %s222, %s223
          %s225 = smul.addr %s224, 2
          %s226 = scalar_lea.vmem %s0, %s225
        $region32: #{upsample_forward.1} parent=27 // pred_fallthru
          _
        // Predicated region
        $region33: #{upsample_forward.1} parent=27 // pred_check
          %p227 = pneg %p138
        $region34: #{upsample_forward.1} parent=27 // pred_check_branch
          %229 = sbr.rel (%p227) target = $region36
        $region35: #{upsample_forward.1} parent=27 // pred_region
          %p230 = scmp.lt.s32.totalorder %s20, 1
          %s231 = scalar_select %p230, %s20, 1
          %p232 = scmp.lt.s32.totalorder %s21, 0
          %s233 = scalar_select %p232, %s21, 0
          %s234 = smul.addr %s233, 4
          %s235 = smul.addr %s231, 8
          %s236 = sadd.s32 %s234, %s235
          %s237 = smul.addr %s236, 2
          %s238 = scalar_lea.vmem %s4, %s237
        $region36: #{upsample_forward.1} parent=27 // pred_fallthru
          _
      $region28: #{upsample_forward.1} parent=5 // pred_fallthru
        _
      %p239 = scmp.le.s32.totalorder 1, %s13
      %p240 = scmp.lt.s32.totalorder %s13, 3
      %p241 = pnand %p239, %p240
      %p242 = pneg %p241
      // Predicated region
      $region37: #{upsample_forward.1} parent=5 // pred_check
        _
      $region38: #{upsample_forward.1} parent=5 // pred_check_branch
        %244 = sbr.rel (%p241) target = $region40
      $region39: #{upsample_forward.1} parent=5 // pred_region
        %s245 = ssub.s32 %s13, 1
        // Predicated region
        $region41: #{upsample_forward.1} parent=39 // pred_check
          %p246 = pneg %p74
        $region42: #{upsample_forward.1} parent=39 // pred_check_branch
          %248 = sbr.rel (%p246) target = $region44
        $region43: #{upsample_forward.1} parent=39 // pred_region
          %249 = dma.done [#allocation3], 16
        $region44: #{upsample_forward.1} parent=39 // pred_fallthru
          _
        // Predicated region
        $region45: #{upsample_forward.1} parent=39 // pred_check
          %p250 = pneg %p95
        $region46: #{upsample_forward.1} parent=39 // pred_check_branch
          %252 = sbr.rel (%p250) target = $region48
        $region47: #{upsample_forward.1} parent=39 // pred_region
          %253 = dma.done [#allocation5], 16
        $region48: #{upsample_forward.1} parent=39 // pred_fallthru
          _
        %254 = sfence
        %p255 = scmp.lt.s32.totalorder %s22, 1
        %s256 = scalar_select %p255, %s22, 1
        %p257 = scmp.lt.s32.totalorder %s23, 0
        %s258 = scalar_select %p257, %s23, 0
        %s259 = smul.addr %s256, 4
        %s260 = sadd.s32 %s258, %s259
        %s261 = smul.addr %s260, 2
        %s262 = scalar_lea.vmem %s0, %s261
        %p263 = pneg %p53
        %p264 = pneg %p50
        %p265 = pneg %p74
        %p266 = pneg %p71
        %p267 = pneg %p95
        %p268 = pneg %p92
        %p269 = pneg %p116
        %p270 = pneg %p113
        %p271 = scmp.lt.s32.totalorder %s22, 1
        %s272 = scalar_select %p271, %s22, 1
        %p273 = scmp.lt.s32.totalorder %s23, 0
        %s274 = scalar_select %p273, %s23, 0
        %s275 = smul.addr %s274, 4
        %s276 = smul.addr %s272, 8
        %s277 = sadd.s32 %s275, %s276
        %s278 = smul.addr %s277, 2
        %s279 = scalar_lea.vmem %s4, %s278
        %p280 = pneg %p144
        %p281 = pneg %p141
        %p282 = pneg %p172
        %p283 = pneg %p169
        %p284 = scmp.lt.s32.totalorder %s22, 1
        %s285 = scalar_select %p284, %s22, 1
        %p286 = scmp.lt.s32.totalorder %s23, 0
        %s287 = scalar_select %p286, %s23, 0
        %s288 = smul.addr %s287, 4
        %s289 = smul.addr %s285, 16
        %s290 = sadd.s32 %s288, %s289
        %s291 = smul.addr %s290, 2
        %s292 = scalar_lea.vmem %s5, %s291
        %p293 = scmp.lt.s32.totalorder %s22, 1
        %s294 = scalar_select %p293, %s22, 1
        %p295 = scmp.lt.s32.totalorder %s23, 0
        %s296 = scalar_select %p295, %s23, 0
        %s297 = smul.addr %s294, 4
        %s298 = sadd.s32 %s296, %s297
        %s299 = smul.addr %s298, 2
        %s300 = scalar_lea.vmem %s0, %s299
        %p301 = scmp.lt.s32.totalorder %s22, 1
        %s302 = scalar_select %p301, %s22, 1
        %p303 = scmp.lt.s32.totalorder %s23, 0
        %s304 = scalar_select %p303, %s23, 0
        %s305 = smul.addr %s304, 4
        %s306 = smul.addr %s302, 8
        %s307 = sadd.s32 %s305, %s306
        %s308 = smul.addr %s307, 2
        %s309 = scalar_lea.vmem %s4, %s308
        %p310 = scmp.lt.s32.totalorder %s22, 1
        %s311 = scalar_select %p310, %s22, 1
        %p312 = scmp.lt.s32.totalorder %s23, 0
        %s313 = scalar_select %p312, %s23, 0
        %s314 = smul.addr %s313, 4
        %s315 = smul.addr %s311, 16
        %s316 = sadd.s32 %s314, %s315
        %s317 = smul.addr %s316, 2
        %s318 = scalar_lea.vmem %s5, %s317
        %s319 = sld [smem:[#allocation2]]
        %v320 = vld [vmem:[%s300] sm:$0x3]
        %v321 = vstv %s319
        %v322 = vmul.f32 %v321, %v320
        %s323 = sld [smem:[#allocation2 + $0x1]]
        %s324 = scalar_lea.vmem %s300, 2
        %v325 = vld [vmem:[%s324] sm:$0x3]
        %v326 = vstv %s323
        %v327 = vmul.f32 %v326, %v325
        %v328 = vadd.f32 %v322, %v327
        %s329 = sld [smem:[#allocation2 + $0x2]]
        %s330 = scalar_lea.vmem %s300, 4
        %v331 = vld [vmem:[%s330] sm:$0x3]
        %v332 = vstv %s329
        %v333 = vmul.f32 %v332, %v331
        %v334 = vadd.f32 %v328, %v333
        %s335 = sld [smem:[#allocation2 + $0x3]]
        %s336 = scalar_lea.vmem %s300, 6
        %v337 = vld [vmem:[%s336] sm:$0x3]
        %v338 = vstv %s335
        %v339 = vmul.f32 %v338, %v337
        %v340 = vadd.f32 %v334, %v339
        %s341 = sld [smem:[#allocation4]]
        %v342 = vstv %s341
        %v343 = vadd.f32 %v340, %v342
        %v344 = vld [vmem:[%s3] sm:$0xff]
        %v345 = vld [vmem:[%s3 + $0x8] sm:$0xff]
        %v346 = vld [vmem:[%s3 + $0x10] sm:$0xff]
        %v347 = vld [vmem:[%s3 + $0x18] sm:$0xff]
        %v348 = vld [vmem:[%s3 + $0x20] sm:$0xff]
        %v349 = vld [vmem:[%s3 + $0x28] sm:$0xff]
        %v350 = vld [vmem:[%s3 + $0x30] sm:$0xff]
        %v351 = vld [vmem:[%s3 + $0x38] sm:$0xff]
        %v352 = vld [vmem:[%s3 + $0x40] sm:$0xff]
        %v353 = vld [vmem:[%s3 + $0x48] sm:$0xff]
        %v354 = vld [vmem:[%s3 + $0x50] sm:$0xff]
        %v355 = vld [vmem:[%s3 + $0x58] sm:$0xff]
        %v356 = vld [vmem:[%s3 + $0x60] sm:$0xff]
        %v357 = vld [vmem:[%s3 + $0x68] sm:$0xff]
        %v358 = vld [vmem:[%s3 + $0x70] sm:$0xff]
        %v359 = vld [vmem:[%s3 + $0x78] sm:$0xff]
        %v360 = vld [vmem:[%s3 + $0x80] sm:$0xff]
        %v361 = vld [vmem:[%s3 + $0x88] sm:$0xff]
        %v362 = vld [vmem:[%s3 + $0x90] sm:$0xff]
        %v363 = vld [vmem:[%s3 + $0x98] sm:$0xff]
        %v364 = vld [vmem:[%s3 + $0xa0] sm:$0xff]
        %v365 = vld [vmem:[%s3 + $0xa8] sm:$0xff]
        %v366 = vld [vmem:[%s3 + $0xb0] sm:$0xff]
        %v367 = vld [vmem:[%s3 + $0xb8] sm:$0xff]
        %v368 = vld [vmem:[%s3 + $0xc0] sm:$0xff]
        %v369 = vld [vmem:[%s3 + $0xc8] sm:$0xff]
        %v370 = vld [vmem:[%s3 + $0xd0] sm:$0xff]
        %v371 = vld [vmem:[%s3 + $0xd8] sm:$0xff]
        %v372 = vld [vmem:[%s3 + $0xe0] sm:$0xff]
        %v373 = vld [vmem:[%s3 + $0xe8] sm:$0xff]
        %v374 = vld [vmem:[%s3 + $0xf0] sm:$0xff]
        %v375 = vld [vmem:[%s3 + $0xf8] sm:$0xff]
        %v376 = vld [vmem:[%s3 + $0x100] sm:$0xff]
        %v377 = vld [vmem:[%s3 + $0x108] sm:$0xff]
        %v378 = vld [vmem:[%s3 + $0x110] sm:$0xff]
        %v379 = vld [vmem:[%s3 + $0x118] sm:$0xff]
        %v380 = vld [vmem:[%s3 + $0x120] sm:$0xff]
        %v381 = vld [vmem:[%s3 + $0x128] sm:$0xff]
        %v382 = vld [vmem:[%s3 + $0x130] sm:$0xff]
        %v383 = vld [vmem:[%s3 + $0x138] sm:$0xff]
        %v384 = vld [vmem:[%s3 + $0x140] sm:$0xff]
        %v385 = vld [vmem:[%s3 + $0x148] sm:$0xff]
        %v386 = vld [vmem:[%s3 + $0x150] sm:$0xff]
        %v387 = vld [vmem:[%s3 + $0x158] sm:$0xff]
        %v388 = vld [vmem:[%s3 + $0x160] sm:$0xff]
        %v389 = vld [vmem:[%s3 + $0x168] sm:$0xff]
        %v390 = vld [vmem:[%s3 + $0x170] sm:$0xff]
        %v391 = vld [vmem:[%s3 + $0x178] sm:$0xff]
        %v392 = vld [vmem:[%s3 + $0x180] sm:$0xff]
        %v393 = vld [vmem:[%s3 + $0x188] sm:$0xff]
        %v394 = vld [vmem:[%s3 + $0x190] sm:$0xff]
        %v395 = vld [vmem:[%s3 + $0x198] sm:$0xff]
        %v396 = vld [vmem:[%s3 + $0x1a0] sm:$0xff]
        %v397 = vld [vmem:[%s3 + $0x1a8] sm:$0xff]
        %v398 = vld [vmem:[%s3 + $0x1b0] sm:$0xff]
        %v399 = vld [vmem:[%s3 + $0x1b8] sm:$0xff]
        %v400 = vld [vmem:[%s3 + $0x1c0] sm:$0xff]
        %v401 = vld [vmem:[%s3 + $0x1c8] sm:$0xff]
        %v402 = vld [vmem:[%s3 + $0x1d0] sm:$0xff]
        %v403 = vld [vmem:[%s3 + $0x1d8] sm:$0xff]
        %v404 = vld [vmem:[%s3 + $0x1e0] sm:$0xff]
        %v405 = vld [vmem:[%s3 + $0x1e8] sm:$0xff]
        %v406 = vld [vmem:[%s3 + $0x1f0] sm:$0xff]
        %v407 = vld [vmem:[%s3 + $0x1f8] sm:$0xff]
        %v408 = vand.u32 %v345, 4294901760
        %409 = vmatprep.subr.mxu0 %v408
        %v410 = vand.u32 %v344, 4294901760
        %411 = vmatpush1.msra.mxu0 %v410
        %v412 = vand.u32 %v349, 4294901760
        %413 = vmatprep.subr.mxu0 %v412
        %v414 = vand.u32 %v348, 4294901760
        %415 = vmatpush1.msra.mxu0 %v414
        %v416 = vand.u32 %v353, 4294901760
        %417 = vmatprep.subr.mxu0 %v416
        %v418 = vand.u32 %v352, 4294901760
        %419 = vmatpush1.msra.mxu0 %v418
        %v420 = vand.u32 %v357, 4294901760
        %421 = vmatprep.subr.mxu0 %v420
        %v422 = vand.u32 %v356, 4294901760
        %423 = vmatpush1.msra.mxu0 %v422
        %v424 = vand.u32 %v361, 4294901760
        %425 = vmatprep.subr.mxu0 %v424
        %v426 = vand.u32 %v360, 4294901760
        %427 = vmatpush1.msra.mxu0 %v426
        %v428 = vand.u32 %v365, 4294901760
        %429 = vmatprep.subr.mxu0 %v428
        %v430 = vand.u32 %v364, 4294901760
        %431 = vmatpush1.msra.mxu0 %v430
        %v432 = vand.u32 %v369, 4294901760
        %433 = vmatprep.subr.mxu0 %v432
        %v434 = vand.u32 %v368, 4294901760
        %435 = vmatpush1.msra.mxu0 %v434
        %v436 = vand.u32 %v373, 4294901760
        %437 = vmatprep.subr.mxu0 %v436
        %v438 = vand.u32 %v372, 4294901760
        %439 = vmatpush1.msra.mxu0 %v438
        %v440 = vand.u32 %v377, 4294901760
        %441 = vmatprep.subr.mxu0 %v440
        %v442 = vand.u32 %v376, 4294901760
        %443 = vmatpush1.msra.mxu0 %v442
        %v444 = vand.u32 %v381, 4294901760
        %445 = vmatprep.subr.mxu0 %v444
        %v446 = vand.u32 %v380, 4294901760
        %447 = vmatpush1.msra.mxu0 %v446
        %v448 = vand.u32 %v385, 4294901760
        %449 = vmatprep.subr.mxu0 %v448
        %v450 = vand.u32 %v384, 4294901760
        %451 = vmatpush1.msra.mxu0 %v450
        %v452 = vand.u32 %v389, 4294901760
        %453 = vmatprep.subr.mxu0 %v452
        %v454 = vand.u32 %v388, 4294901760
        %455 = vmatpush1.msra.mxu0 %v454
        %v456 = vand.u32 %v393, 4294901760
        %457 = vmatprep.subr.mxu0 %v456
        %v458 = vand.u32 %v392, 4294901760
        %459 = vmatpush1.msra.mxu0 %v458
        %v460 = vand.u32 %v397, 4294901760
        %461 = vmatprep.subr.mxu0 %v460
        %v462 = vand.u32 %v396, 4294901760
        %463 = vmatpush1.msra.mxu0 %v462
        %v464 = vand.u32 %v401, 4294901760
        %465 = vmatprep.subr.mxu0 %v464
        %v466 = vand.u32 %v400, 4294901760
        %467 = vmatpush1.msra.mxu0 %v466
        %v468 = vand.u32 %v405, 4294901760
        %469 = vmatprep.subr.mxu0 %v468
        %v470 = vand.u32 %v404, 4294901760
        %471 = vmatpush1.msra.mxu0 %v470
        %472 = vmatprep.subr.mxu0 0.0
        %473 = vmatpush1.msra.mxu0 0.0
        %474 = vmatprep.subr.mxu0 0.0
        %475 = vmatpush1.msra.mxu0 0.0
        %476 = vmatprep.subr.mxu0 0.0
        %477 = vmatpush1.msra.mxu0 0.0
        %478 = vmatprep.subr.mxu0 0.0
        %479 = vmatpush1.msra.mxu0 0.0
        %480 = vmatprep.subr.mxu0 0.0
        %481 = vmatpush1.msra.mxu0 0.0
        %482 = vmatprep.subr.mxu0 0.0
        %483 = vmatpush1.msra.mxu0 0.0
        %484 = vmatprep.subr.mxu0 0.0
        %485 = vmatpush1.msra.mxu0 0.0
        %486 = vmatprep.subr.mxu0 0.0
        %487 = vmatpush1.msra.mxu0 0.0
        %488 = vmatprep.subr.mxu0 0.0
        %489 = vmatpush1.msra.mxu0 0.0
        %490 = vmatprep.subr.mxu0 0.0
        %491 = vmatpush1.msra.mxu0 0.0
        %492 = vmatprep.subr.mxu0 0.0
        %493 = vmatpush1.msra.mxu0 0.0
        %494 = vmatprep.subr.mxu0 0.0
        %495 = vmatpush1.msra.mxu0 0.0
        %496 = vmatprep.subr.mxu0 0.0
        %497 = vmatpush1.msra.mxu0 0.0
        %498 = vmatprep.subr.mxu0 0.0
        %499 = vmatpush1.msra.mxu0 0.0
        %500 = vmatprep.subr.mxu0 0.0
        %501 = vmatpush1.msra.mxu0 0.0
        %502 = vmatprep.subr.mxu0 0.0
        %503 = vmatpush1.msra.mxu0 0.0
        %504 = vmatprep.mubr.f32.mxu0 0.0
        %v505 = vand.u32 %v343, 4294901760
        %v506 = vsub.f32 %v343, %v505
        %v507 = vand.u32 %v506, 4294901760
        %v508 = vsub.f32 %v506, %v507
        %v509 = vand.u32 %v508, 4294901760
        %510 = vmatmul.mubr.f32.gmra.mrb[0].mxu0 %v509
        %v511 = vpop.f32.mrb[0].mxu0
        %v512 = vadd.f32 0.0, %v511
        %v513 = vpop.f32.mrb[0].mxu0
        %v514 = vadd.f32 0.0, %v513
        %515 = vdwg.mxu0
        %v516 = vand.u32 %v345, 4294901760
        %v517 = vsub.f32 %v345, %v516
        %v518 = vand.u32 %v517, 4294901760
        %v519 = vsub.f32 %v517, %v518
        %v520 = vand.u32 %v519, 4294901760
        %521 = vmatprep.subr.mxu0 %v520
        %v522 = vand.u32 %v344, 4294901760
        %v523 = vsub.f32 %v344, %v522
        %v524 = vand.u32 %v523, 4294901760
        %v525 = vsub.f32 %v523, %v524
        %v526 = vand.u32 %v525, 4294901760
        %527 = vmatpush1.msra.mxu0 %v526
        %v528 = vand.u32 %v349, 4294901760
        %v529 = vsub.f32 %v349, %v528
        %v530 = vand.u32 %v529, 4294901760
        %v531 = vsub.f32 %v529, %v530
        %v532 = vand.u32 %v531, 4294901760
        %533 = vmatprep.subr.mxu0 %v532
        %v534 = vand.u32 %v348, 4294901760
        %v535 = vsub.f32 %v348, %v534
        %v536 = vand.u32 %v535, 4294901760
        %v537 = vsub.f32 %v535, %v536
        %v538 = vand.u32 %v537, 4294901760
        %539 = vmatpush1.msra.mxu0 %v538
        %v540 = vand.u32 %v353, 4294901760
        %v541 = vsub.f32 %v353, %v540
        %v542 = vand.u32 %v541, 4294901760
        %v543 = vsub.f32 %v541, %v542
        %v544 = vand.u32 %v543, 4294901760
        %545 = vmatprep.subr.mxu0 %v544
        %v546 = vand.u32 %v352, 4294901760
        %v547 = vsub.f32 %v352, %v546
        %v548 = vand.u32 %v547, 4294901760
        %v549 = vsub.f32 %v547, %v548
        %v550 = vand.u32 %v549, 4294901760
        %551 = vmatpush1.msra.mxu0 %v550
        %v552 = vand.u32 %v357, 4294901760
        %v553 = vsub.f32 %v357, %v552
        %v554 = vand.u32 %v553, 4294901760
        %v555 = vsub.f32 %v553, %v554
        %v556 = vand.u32 %v555, 4294901760
        %557 = vmatprep.subr.mxu0 %v556
        %v558 = vand.u32 %v356, 4294901760
        %v559 = vsub.f32 %v356, %v558
        %v560 = vand.u32 %v559, 4294901760
        %v561 = vsub.f32 %v559, %v560
        %v562 = vand.u32 %v561, 4294901760
        %563 = vmatpush1.msra.mxu0 %v562
        %v564 = vand.u32 %v361, 4294901760
        %v565 = vsub.f32 %v361, %v564
        %v566 = vand.u32 %v565, 4294901760
        %v567 = vsub.f32 %v565, %v566
        %v568 = vand.u32 %v567, 4294901760
        %569 = vmatprep.subr.mxu0 %v568
        %v570 = vand.u32 %v360, 4294901760
        %v571 = vsub.f32 %v360, %v570
        %v572 = vand.u32 %v571, 4294901760
        %v573 = vsub.f32 %v571, %v572
        %v574 = vand.u32 %v573, 4294901760
        %575 = vmatpush1.msra.mxu0 %v574
        %v576 = vand.u32 %v365, 4294901760
        %v577 = vsub.f32 %v365, %v576
        %v578 = vand.u32 %v577, 4294901760
        %v579 = vsub.f32 %v577, %v578
        %v580 = vand.u32 %v579, 4294901760
        %581 = vmatprep.subr.mxu0 %v580
        %v582 = vand.u32 %v364, 4294901760
        %v583 = vsub.f32 %v364, %v582
        %v584 = vand.u32 %v583, 4294901760
        %v585 = vsub.f32 %v583, %v584
        %v586 = vand.u32 %v585, 4294901760
        %587 = vmatpush1.msra.mxu0 %v586
        %v588 = vand.u32 %v369, 4294901760
        %v589 = vsub.f32 %v369, %v588
        %v590 = vand.u32 %v589, 4294901760
        %v591 = vsub.f32 %v589, %v590
        %v592 = vand.u32 %v591, 4294901760
        %593 = vmatprep.subr.mxu0 %v592
        %v594 = vand.u32 %v368, 4294901760
        %v595 = vsub.f32 %v368, %v594
        %v596 = vand.u32 %v595, 4294901760
        %v597 = vsub.f32 %v595, %v596
        %v598 = vand.u32 %v597, 4294901760
        %599 = vmatpush1.msra.mxu0 %v598
        %v600 = vand.u32 %v373, 4294901760
        %v601 = vsub.f32 %v373, %v600
        %v602 = vand.u32 %v601, 4294901760
        %v603 = vsub.f32 %v601, %v602
        %v604 = vand.u32 %v603, 4294901760
        %605 = vmatprep.subr.mxu0 %v604
        %v606 = vand.u32 %v372, 4294901760
        %v607 = vsub.f32 %v372, %v606
        %v608 = vand.u32 %v607, 4294901760
        %v609 = vsub.f32 %v607, %v608
        %v610 = vand.u32 %v609, 4294901760
        %611 = vmatpush1.msra.mxu0 %v610
        %v612 = vand.u32 %v377, 4294901760
        %v613 = vsub.f32 %v377, %v612
        %v614 = vand.u32 %v613, 4294901760
        %v615 = vsub.f32 %v613, %v614
        %v616 = vand.u32 %v615, 4294901760
        %617 = vmatprep.subr.mxu0 %v616
        %v618 = vand.u32 %v376, 4294901760
        %v619 = vsub.f32 %v376, %v618
        %v620 = vand.u32 %v619, 4294901760
        %v621 = vsub.f32 %v619, %v620
        %v622 = vand.u32 %v621, 4294901760
        %623 = vmatpush1.msra.mxu0 %v622
        %v624 = vand.u32 %v381, 4294901760
        %v625 = vsub.f32 %v381, %v624
        %v626 = vand.u32 %v625, 4294901760
        %v627 = vsub.f32 %v625, %v626
        %v628 = vand.u32 %v627, 4294901760
        %629 = vmatprep.subr.mxu0 %v628
        %v630 = vand.u32 %v380, 4294901760
        %v631 = vsub.f32 %v380, %v630
        %v632 = vand.u32 %v631, 4294901760
        %v633 = vsub.f32 %v631, %v632
        %v634 = vand.u32 %v633, 4294901760
        %635 = vmatpush1.msra.mxu0 %v634
        %v636 = vand.u32 %v385, 4294901760
        %v637 = vsub.f32 %v385, %v636
        %v638 = vand.u32 %v637, 4294901760
        %v639 = vsub.f32 %v637, %v638
        %v640 = vand.u32 %v639, 4294901760
        %641 = vmatprep.subr.mxu0 %v640
        %v642 = vand.u32 %v384, 4294901760
        %v643 = vsub.f32 %v384, %v642
        %v644 = vand.u32 %v643, 4294901760
        %v645 = vsub.f32 %v643, %v644
        %v646 = vand.u32 %v645, 4294901760
        %647 = vmatpush1.msra.mxu0 %v646
        %v648 = vand.u32 %v389, 4294901760
        %v649 = vsub.f32 %v389, %v648
        %v650 = vand.u32 %v649, 4294901760
        %v651 = vsub.f32 %v649, %v650
        %v652 = vand.u32 %v651, 4294901760
        %653 = vmatprep.subr.mxu0 %v652
        %v654 = vand.u32 %v388, 4294901760
        %v655 = vsub.f32 %v388, %v654
        %v656 = vand.u32 %v655, 4294901760
        %v657 = vsub.f32 %v655, %v656
        %v658 = vand.u32 %v657, 4294901760
        %659 = vmatpush1.msra.mxu0 %v658
        %v660 = vand.u32 %v393, 4294901760
        %v661 = vsub.f32 %v393, %v660
        %v662 = vand.u32 %v661, 4294901760
        %v663 = vsub.f32 %v661, %v662
        %v664 = vand.u32 %v663, 4294901760
        %665 = vmatprep.subr.mxu0 %v664
        %v666 = vand.u32 %v392, 4294901760
        %v667 = vsub.f32 %v392, %v666
        %v668 = vand.u32 %v667, 4294901760
        %v669 = vsub.f32 %v667, %v668
        %v670 = vand.u32 %v669, 4294901760
        %671 = vmatpush1.msra.mxu0 %v670
        %v672 = vand.u32 %v397, 4294901760
        %v673 = vsub.f32 %v397, %v672
        %v674 = vand.u32 %v673, 4294901760
        %v675 = vsub.f32 %v673, %v674
        %v676 = vand.u32 %v675, 4294901760
        %677 = vmatprep.subr.mxu0 %v676
        %v678 = vand.u32 %v396, 4294901760
        %v679 = vsub.f32 %v396, %v678
        %v680 = vand.u32 %v679, 4294901760
        %v681 = vsub.f32 %v679, %v680
        %v682 = vand.u32 %v681, 4294901760
        %683 = vmatpush1.msra.mxu0 %v682
        %v684 = vand.u32 %v401, 4294901760
        %v685 = vsub.f32 %v401, %v684
        %v686 = vand.u32 %v685, 4294901760
        %v687 = vsub.f32 %v685, %v686
        %v688 = vand.u32 %v687, 4294901760
        %689 = vmatprep.subr.mxu0 %v688
        %v690 = vand.u32 %v400, 4294901760
        %v691 = vsub.f32 %v400, %v690
        %v692 = vand.u32 %v691, 4294901760
        %v693 = vsub.f32 %v691, %v692
        %v694 = vand.u32 %v693, 4294901760
        %695 = vmatpush1.msra.mxu0 %v694
        %v696 = vand.u32 %v405, 4294901760
        %v697 = vsub.f32 %v405, %v696
        %v698 = vand.u32 %v697, 4294901760
        %v699 = vsub.f32 %v697, %v698
        %v700 = vand.u32 %v699, 4294901760
        %701 = vmatprep.subr.mxu0 %v700
        %v702 = vand.u32 %v404, 4294901760
        %v703 = vsub.f32 %v404, %v702
        %v704 = vand.u32 %v703, 4294901760
        %v705 = vsub.f32 %v703, %v704
        %v706 = vand.u32 %v705, 4294901760
        %707 = vmatpush1.msra.mxu0 %v706
        %708 = vmatprep.subr.mxu0 0.0
        %709 = vmatpush1.msra.mxu0 0.0
        %710 = vmatprep.subr.mxu0 0.0
        %711 = vmatpush1.msra.mxu0 0.0
        %712 = vmatprep.subr.mxu0 0.0
        %713 = vmatpush1.msra.mxu0 0.0
        %714 = vmatprep.subr.mxu0 0.0
        %715 = vmatpush1.msra.mxu0 0.0
        %716 = vmatprep.subr.mxu0 0.0
        %717 = vmatpush1.msra.mxu0 0.0
        %718 = vmatprep.subr.mxu0 0.0
        %719 = vmatpush1.msra.mxu0 0.0
        %720 = vmatprep.subr.mxu0 0.0
        %721 = vmatpush1.msra.mxu0 0.0
        %722 = vmatprep.subr.mxu0 0.0
        %723 = vmatpush1.msra.mxu0 0.0
        %724 = vmatprep.subr.mxu0 0.0
        %725 = vmatpush1.msra.mxu0 0.0
        %726 = vmatprep.subr.mxu0 0.0
        %727 = vmatpush1.msra.mxu0 0.0
        %728 = vmatprep.subr.mxu0 0.0
        %729 = vmatpush1.msra.mxu0 0.0
        %730 = vmatprep.subr.mxu0 0.0
        %731 = vmatpush1.msra.mxu0 0.0
        %732 = vmatprep.subr.mxu0 0.0
        %733 = vmatpush1.msra.mxu0 0.0
        %734 = vmatprep.subr.mxu0 0.0
        %735 = vmatpush1.msra.mxu0 0.0
        %736 = vmatprep.subr.mxu0 0.0
        %737 = vmatpush1.msra.mxu0 0.0
        %738 = vmatprep.subr.mxu0 0.0
        %739 = vmatpush1.msra.mxu0 0.0
        %740 = vmatprep.mubr.f32.mxu0 0.0
        %v741 = vand.u32 %v343, 4294901760
        %742 = vmatmul.mubr.f32.gmra.mrb[0].mxu0 %v741
        %v743 = vpop.f32.mrb[0].mxu0
        %v744 = vadd.f32 %v512, %v743
        %v745 = vpop.f32.mrb[0].mxu0
        %v746 = vadd.f32 %v514, %v745
        %747 = vdwg.mxu0
        %v748 = vand.u32 %v345, 4294901760
        %v749 = vsub.f32 %v345, %v748
        %750 = vmatprep.subr.mxu0 %v749
        %v751 = vand.u32 %v344, 4294901760
        %v752 = vsub.f32 %v344, %v751
        %753 = vmatpush1.msra.mxu0 %v752
        %v754 = vand.u32 %v349, 4294901760
        %v755 = vsub.f32 %v349, %v754
        %756 = vmatprep.subr.mxu0 %v755
        %v757 = vand.u32 %v348, 4294901760
        %v758 = vsub.f32 %v348, %v757
        %759 = vmatpush1.msra.mxu0 %v758
        %v760 = vand.u32 %v353, 4294901760
        %v761 = vsub.f32 %v353, %v760
        %762 = vmatprep.subr.mxu0 %v761
        %v763 = vand.u32 %v352, 4294901760
        %v764 = vsub.f32 %v352, %v763
        %765 = vmatpush1.msra.mxu0 %v764
        %v766 = vand.u32 %v357, 4294901760
        %v767 = vsub.f32 %v357, %v766
        %768 = vmatprep.subr.mxu0 %v767
        %v769 = vand.u32 %v356, 4294901760
        %v770 = vsub.f32 %v356, %v769
        %771 = vmatpush1.msra.mxu0 %v770
        %v772 = vand.u32 %v361, 4294901760
        %v773 = vsub.f32 %v361, %v772
        %774 = vmatprep.subr.mxu0 %v773
        %v775 = vand.u32 %v360, 4294901760
        %v776 = vsub.f32 %v360, %v775
        %777 = vmatpush1.msra.mxu0 %v776
        %v778 = vand.u32 %v365, 4294901760
        %v779 = vsub.f32 %v365, %v778
        %780 = vmatprep.subr.mxu0 %v779
        %v781 = vand.u32 %v364, 4294901760
        %v782 = vsub.f32 %v364, %v781
        %783 = vmatpush1.msra.mxu0 %v782
        %v784 = vand.u32 %v369, 4294901760
        %v785 = vsub.f32 %v369, %v784
        %786 = vmatprep.subr.mxu0 %v785
        %v787 = vand.u32 %v368, 4294901760
        %v788 = vsub.f32 %v368, %v787
        %789 = vmatpush1.msra.mxu0 %v788
        %v790 = vand.u32 %v373, 4294901760
        %v791 = vsub.f32 %v373, %v790
        %792 = vmatprep.subr.mxu0 %v791
        %v793 = vand.u32 %v372, 4294901760
        %v794 = vsub.f32 %v372, %v793
        %795 = vmatpush1.msra.mxu0 %v794
        %v796 = vand.u32 %v377, 4294901760
        %v797 = vsub.f32 %v377, %v796
        %798 = vmatprep.subr.mxu0 %v797
        %v799 = vand.u32 %v376, 4294901760
        %v800 = vsub.f32 %v376, %v799
        %801 = vmatpush1.msra.mxu0 %v800
        %v802 = vand.u32 %v381, 4294901760
        %v803 = vsub.f32 %v381, %v802
        %804 = vmatprep.subr.mxu0 %v803
        %v805 = vand.u32 %v380, 4294901760
        %v806 = vsub.f32 %v380, %v805
        %807 = vmatpush1.msra.mxu0 %v806
        %v808 = vand.u32 %v385, 4294901760
        %v809 = vsub.f32 %v385, %v808
        %810 = vmatprep.subr.mxu0 %v809
        %v811 = vand.u32 %v384, 4294901760
        %v812 = vsub.f32 %v384, %v811
        %813 = vmatpush1.msra.mxu0 %v812
        %v814 = vand.u32 %v389, 4294901760
        %v815 = vsub.f32 %v389, %v814
        %816 = vmatprep.subr.mxu0 %v815
        %v817 = vand.u32 %v388, 4294901760
        %v818 = vsub.f32 %v388, %v817
        %819 = vmatpush1.msra.mxu0 %v818
        %v820 = vand.u32 %v393, 4294901760
        %v821 = vsub.f32 %v393, %v820
        %822 = vmatprep.subr.mxu0 %v821
        %v823 = vand.u32 %v392, 4294901760
        %v824 = vsub.f32 %v392, %v823
        %825 = vmatpush1.msra.mxu0 %v824
        %v826 = vand.u32 %v397, 4294901760
        %v827 = vsub.f32 %v397, %v826
        %828 = vmatprep.subr.mxu0 %v827
        %v829 = vand.u32 %v396, 4294901760
        %v830 = vsub.f32 %v396, %v829
        %831 = vmatpush1.msra.mxu0 %v830
        %v832 = vand.u32 %v401, 4294901760
        %v833 = vsub.f32 %v401, %v832
        %834 = vmatprep.subr.mxu0 %v833
        %v835 = vand.u32 %v400, 4294901760
        %v836 = vsub.f32 %v400, %v835
        %837 = vmatpush1.msra.mxu0 %v836
        %v838 = vand.u32 %v405, 4294901760
        %v839 = vsub.f32 %v405, %v838
        %840 = vmatprep.subr.mxu0 %v839
        %v841 = vand.u32 %v404, 4294901760
        %v842 = vsub.f32 %v404, %v841
        %843 = vmatpush1.msra.mxu0 %v842
        %844 = vmatprep.subr.mxu0 0.0
        %845 = vmatpush1.msra.mxu0 0.0
        %846 = vmatprep.subr.mxu0 0.0
        %847 = vmatpush1.msra.mxu0 0.0
        %848 = vmatprep.subr.mxu0 0.0
        %849 = vmatpush1.msra.mxu0 0.0
        %850 = vmatprep.subr.mxu0 0.0
        %851 = vmatpush1.msra.mxu0 0.0
        %852 = vmatprep.subr.mxu0 0.0
        %853 = vmatpush1.msra.mxu0 0.0
        %854 = vmatprep.subr.mxu0 0.0
        %855 = vmatpush1.msra.mxu0 0.0
        %856 = vmatprep.subr.mxu0 0.0
        %857 = vmatpush1.msra.mxu0 0.0
        %858 = vmatprep.subr.mxu0 0.0
        %859 = vmatpush1.msra.mxu0 0.0
        %860 = vmatprep.subr.mxu0 0.0
        %861 = vmatpush1.msra.mxu0 0.0
        %862 = vmatprep.subr.mxu0 0.0
        %863 = vmatpush1.msra.mxu0 0.0
        %864 = vmatprep.subr.mxu0 0.0
        %865 = vmatpush1.msra.mxu0 0.0
        %866 = vmatprep.subr.mxu0 0.0
        %867 = vmatpush1.msra.mxu0 0.0
        %868 = vmatprep.subr.mxu0 0.0
        %869 = vmatpush1.msra.mxu0 0.0
        %870 = vmatprep.subr.mxu0 0.0
        %871 = vmatpush1.msra.mxu0 0.0
        %872 = vmatprep.subr.mxu0 0.0
        %873 = vmatpush1.msra.mxu0 0.0
        %874 = vmatprep.subr.mxu0 0.0
        %875 = vmatpush1.msra.mxu0 0.0
        %876 = vmatprep.mubr.f32.mxu0 0.0
        %v877 = vand.u32 %v343, 4294901760
        %v878 = vsub.f32 %v343, %v877
        %879 = vmatmul.mubr.f32.gmra.mrb[0].mxu0 %v878
        %v880 = vpop.f32.mrb[0].mxu0
        %v881 = vadd.f32 %v744, %v880
        %v882 = vpop.f32.mrb[0].mxu0
        %v883 = vadd.f32 %v746, %v882
        %884 = vdwg.mxu0
        %v885 = vand.u32 %v345, 4294901760
        %886 = vmatprep.subr.mxu0 %v885
        %v887 = vand.u32 %v344, 4294901760
        %888 = vmatpush1.msra.mxu0 %v887
        %v889 = vand.u32 %v349, 4294901760
        %890 = vmatprep.subr.mxu0 %v889
        %v891 = vand.u32 %v348, 4294901760
        %892 = vmatpush1.msra.mxu0 %v891
        %v893 = vand.u32 %v353, 4294901760
        %894 = vmatprep.subr.mxu0 %v893
        %v895 = vand.u32 %v352, 4294901760
        %896 = vmatpush1.msra.mxu0 %v895
        %v897 = vand.u32 %v357, 4294901760
        %898 = vmatprep.subr.mxu0 %v897
        %v899 = vand.u32 %v356, 4294901760
        %900 = vmatpush1.msra.mxu0 %v899
        %v901 = vand.u32 %v361, 4294901760
        %902 = vmatprep.subr.mxu0 %v901
        %v903 = vand.u32 %v360, 4294901760
        %904 = vmatpush1.msra.mxu0 %v903
        %v905 = vand.u32 %v365, 4294901760
        %906 = vmatprep.subr.mxu0 %v905
        %v907 = vand.u32 %v364, 4294901760
        %908 = vmatpush1.msra.mxu0 %v907
        %v909 = vand.u32 %v369, 4294901760
        %910 = vmatprep.subr.mxu0 %v909
        %v911 = vand.u32 %v368, 4294901760
        %912 = vmatpush1.msra.mxu0 %v911
        %v913 = vand.u32 %v373, 4294901760
        %914 = vmatprep.subr.mxu0 %v913
        %v915 = vand.u32 %v372, 4294901760
        %916 = vmatpush1.msra.mxu0 %v915
        %v917 = vand.u32 %v377, 4294901760
        %918 = vmatprep.subr.mxu0 %v917
        %v919 = vand.u32 %v376, 4294901760
        %920 = vmatpush1.msra.mxu0 %v919
        %v921 = vand.u32 %v381, 4294901760
        %922 = vmatprep.subr.mxu0 %v921
        %v923 = vand.u32 %v380, 4294901760
        %924 = vmatpush1.msra.mxu0 %v923
        %v925 = vand.u32 %v385, 4294901760
        %926 = vmatprep.subr.mxu0 %v925
        %v927 = vand.u32 %v384, 4294901760
        %928 = vmatpush1.msra.mxu0 %v927
        %v929 = vand.u32 %v389, 4294901760
        %930 = vmatprep.subr.mxu0 %v929
        %v931 = vand.u32 %v388, 4294901760
        %932 = vmatpush1.msra.mxu0 %v931
        %v933 = vand.u32 %v393, 4294901760
        %934 = vmatprep.subr.mxu0 %v933
        %v935 = vand.u32 %v392, 4294901760
        %936 = vmatpush1.msra.mxu0 %v935
        %v937 = vand.u32 %v397, 4294901760
        %938 = vmatprep.subr.mxu0 %v937
        %v939 = vand.u32 %v396, 4294901760
        %940 = vmatpush1.msra.mxu0 %v939
        %v941 = vand.u32 %v401, 4294901760
        %942 = vmatprep.subr.mxu0 %v941
        %v943 = vand.u32 %v400, 4294901760
        %944 = vmatpush1.msra.mxu0 %v943
        %v945 = vand.u32 %v405, 4294901760
        %946 = vmatprep.subr.mxu0 %v945
        %v947 = vand.u32 %v404, 4294901760
        %948 = vmatpush1.msra.mxu0 %v947
        %949 = vmatprep.subr.mxu0 0.0
        %950 = vmatpush1.msra.mxu0 0.0
        %951 = vmatprep.subr.mxu0 0.0
        %952 = vmatpush1.msra.mxu0 0.0
        %953 = vmatprep.subr.mxu0 0.0
        %954 = vmatpush1.msra.mxu0 0.0
        %955 = vmatprep.subr.mxu0 0.0
        %956 = vmatpush1.msra.mxu0 0.0
        %957 = vmatprep.subr.mxu0 0.0
        %958 = vmatpush1.msra.mxu0 0.0
        %959 = vmatprep.subr.mxu0 0.0
        %960 = vmatpush1.msra.mxu0 0.0
        %961 = vmatprep.subr.mxu0 0.0
        %962 = vmatpush1.msra.mxu0 0.0
        %963 = vmatprep.subr.mxu0 0.0
        %964 = vmatpush1.msra.mxu0 0.0
        %965 = vmatprep.subr.mxu0 0.0
        %966 = vmatpush1.msra.mxu0 0.0
        %967 = vmatprep.subr.mxu0 0.0
        %968 = vmatpush1.msra.mxu0 0.0
        %969 = vmatprep.subr.mxu0 0.0
        %970 = vmatpush1.msra.mxu0 0.0
        %971 = vmatprep.subr.mxu0 0.0
        %972 = vmatpush1.msra.mxu0 0.0
        %973 = vmatprep.subr.mxu0 0.0
        %974 = vmatpush1.msra.mxu0 0.0
        %975 = vmatprep.subr.mxu0 0.0
        %976 = vmatpush1.msra.mxu0 0.0
        %977 = vmatprep.subr.mxu0 0.0
        %978 = vmatpush1.msra.mxu0 0.0
        %979 = vmatprep.subr.mxu0 0.0
        %980 = vmatpush1.msra.mxu0 0.0
        %981 = vmatprep.mubr.f32.mxu0 0.0
        %v982 = vand.u32 %v343, 4294901760
        %v983 = vsub.f32 %v343, %v982
        %v984 = vand.u32 %v983, 4294901760
        %985 = vmatmul.mubr.f32.gmra.mrb[0].mxu0 %v984
        %v986 = vpop.f32.mrb[0].mxu0
        %v987 = vadd.f32 %v881, %v986
        %v988 = vpop.f32.mrb[0].mxu0
        %v989 = vadd.f32 %v883, %v988
        %990 = vdwg.mxu0
        %v991 = vand.u32 %v345, 4294901760
        %v992 = vsub.f32 %v345, %v991
        %v993 = vand.u32 %v992, 4294901760
        %994 = vmatprep.subr.mxu0 %v993
        %v995 = vand.u32 %v344, 4294901760
        %v996 = vsub.f32 %v344, %v995
        %v997 = vand.u32 %v996, 4294901760
        %998 = vmatpush1.msra.mxu0 %v997
        %v999 = vand.u32 %v349, 4294901760
        %v1000 = vsub.f32 %v349, %v999
        %v1001 = vand.u32 %v1000, 4294901760
        %1002 = vmatprep.subr.mxu0 %v1001
        %v1003 = vand.u32 %v348, 4294901760
        %v1004 = vsub.f32 %v348, %v1003
        %v1005 = vand.u32 %v1004, 4294901760
        %1006 = vmatpush1.msra.mxu0 %v1005
        %v1007 = vand.u32 %v353, 4294901760
        %v1008 = vsub.f32 %v353, %v1007
        %v1009 = vand.u32 %v1008, 4294901760
        %1010 = vmatprep.subr.mxu0 %v1009
        %v1011 = vand.u32 %v352, 4294901760
        %v1012 = vsub.f32 %v352, %v1011
        %v1013 = vand.u32 %v1012, 4294901760
        %1014 = vmatpush1.msra.mxu0 %v1013
        %v1015 = vand.u32 %v357, 4294901760
        %v1016 = vsub.f32 %v357, %v1015
        %v1017 = vand.u32 %v1016, 4294901760
        %1018 = vmatprep.subr.mxu0 %v1017
        %v1019 = vand.u32 %v356, 4294901760
        %v1020 = vsub.f32 %v356, %v1019
        %v1021 = vand.u32 %v1020, 4294901760
        %1022 = vmatpush1.msra.mxu0 %v1021
        %v1023 = vand.u32 %v361, 4294901760
        %v1024 = vsub.f32 %v361, %v1023
        %v1025 = vand.u32 %v1024, 4294901760
        %1026 = vmatprep.subr.mxu0 %v1025
        %v1027 = vand.u32 %v360, 4294901760
        %v1028 = vsub.f32 %v360, %v1027
        %v1029 = vand.u32 %v1028, 4294901760
        %1030 = vmatpush1.msra.mxu0 %v1029
        %v1031 = vand.u32 %v365, 4294901760
        %v1032 = vsub.f32 %v365, %v1031
        %v1033 = vand.u32 %v1032, 4294901760
        %1034 = vmatprep.subr.mxu0 %v1033
        %v1035 = vand.u32 %v364, 4294901760
        %v1036 = vsub.f32 %v364, %v1035
        %v1037 = vand.u32 %v1036, 4294901760
        %1038 = vmatpush1.msra.mxu0 %v1037
        %v1039 = vand.u32 %v369, 4294901760
        %v1040 = vsub.f32 %v369, %v1039
        %v1041 = vand.u32 %v1040, 4294901760
        %1042 = vmatprep.subr.mxu0 %v1041
        %v1043 = vand.u32 %v368, 4294901760
        %v1044 = vsub.f32 %v368, %v1043
        %v1045 = vand.u32 %v1044, 4294901760
        %1046 = vmatpush1.msra.mxu0 %v1045
        %v1047 = vand.u32 %v373, 4294901760
        %v1048 = vsub.f32 %v373, %v1047
        %v1049 = vand.u32 %v1048, 4294901760
        %1050 = vmatprep.subr.mxu0 %v1049
        %v1051 = vand.u32 %v372, 4294901760
        %v1052 = vsub.f32 %v372, %v1051
        %v1053 = vand.u32 %v1052, 4294901760
        %1054 = vmatpush1.msra.mxu0 %v1053
        %v1055 = vand.u32 %v377, 4294901760
        %v1056 = vsub.f32 %v377, %v1055
        %v1057 = vand.u32 %v1056, 4294901760
        %1058 = vmatprep.subr.mxu0 %v1057
        %v1059 = vand.u32 %v376, 4294901760
        %v1060 = vsub.f32 %v376, %v1059
        %v1061 = vand.u32 %v1060, 4294901760
        %1062 = vmatpush1.msra.mxu0 %v1061
        %v1063 = vand.u32 %v381, 4294901760
        %v1064 = vsub.f32 %v381, %v1063
        %v1065 = vand.u32 %v1064, 4294901760
        %1066 = vmatprep.subr.mxu0 %v1065
        %v1067 = vand.u32 %v380, 4294901760
        %v1068 = vsub.f32 %v380, %v1067
        %v1069 = vand.u32 %v1068, 4294901760
        %1070 = vmatpush1.msra.mxu0 %v1069
        %v1071 = vand.u32 %v385, 4294901760
        %v1072 = vsub.f32 %v385, %v1071
        %v1073 = vand.u32 %v1072, 4294901760
        %1074 = vmatprep.subr.mxu0 %v1073
        %v1075 = vand.u32 %v384, 4294901760
        %v1076 = vsub.f32 %v384, %v1075
        %v1077 = vand.u32 %v1076, 4294901760
        %1078 = vmatpush1.msra.mxu0 %v1077
        %v1079 = vand.u32 %v389, 4294901760
        %v1080 = vsub.f32 %v389, %v1079
        %v1081 = vand.u32 %v1080, 4294901760
        %1082 = vmatprep.subr.mxu0 %v1081
        %v1083 = vand.u32 %v388, 4294901760
        %v1084 = vsub.f32 %v388, %v1083
        %v1085 = vand.u32 %v1084, 4294901760
        %1086 = vmatpush1.msra.mxu0 %v1085
        %v1087 = vand.u32 %v393, 4294901760
        %v1088 = vsub.f32 %v393, %v1087
        %v1089 = vand.u32 %v1088, 4294901760
        %1090 = vmatprep.subr.mxu0 %v1089
        %v1091 = vand.u32 %v392, 4294901760
        %v1092 = vsub.f32 %v392, %v1091
        %v1093 = vand.u32 %v1092, 4294901760
        %1094 = vmatpush1.msra.mxu0 %v1093
        %v1095 = vand.u32 %v397, 4294901760
        %v1096 = vsub.f32 %v397, %v1095
        %v1097 = vand.u32 %v1096, 4294901760
        %1098 = vmatprep.subr.mxu0 %v1097
        %v1099 = vand.u32 %v396, 4294901760
        %v1100 = vsub.f32 %v396, %v1099
        %v1101 = vand.u32 %v1100, 4294901760
        %1102 = vmatpush1.msra.mxu0 %v1101
        %v1103 = vand.u32 %v401, 4294901760
        %v1104 = vsub.f32 %v401, %v1103
        %v1105 = vand.u32 %v1104, 4294901760
        %1106 = vmatprep.subr.mxu0 %v1105
        %v1107 = vand.u32 %v400, 4294901760
        %v1108 = vsub.f32 %v400, %v1107
        %v1109 = vand.u32 %v1108, 4294901760
        %1110 = vmatpush1.msra.mxu0 %v1109
        %v1111 = vand.u32 %v405, 4294901760
        %v1112 = vsub.f32 %v405, %v1111
        %v1113 = vand.u32 %v1112, 4294901760
        %1114 = vmatprep.subr.mxu0 %v1113
        %v1115 = vand.u32 %v404, 4294901760
        %v1116 = vsub.f32 %v404, %v1115
        %v1117 = vand.u32 %v1116, 4294901760
        %1118 = vmatpush1.msra.mxu0 %v1117
        %1119 = vmatprep.subr.mxu0 0.0
        %1120 = vmatpush1.msra.mxu0 0.0
        %1121 = vmatprep.subr.mxu0 0.0
        %1122 = vmatpush1.msra.mxu0 0.0
        %1123 = vmatprep.subr.mxu0 0.0
        %1124 = vmatpush1.msra.mxu0 0.0
        %1125 = vmatprep.subr.mxu0 0.0
        %1126 = vmatpush1.msra.mxu0 0.0
        %1127 = vmatprep.subr.mxu0 0.0
        %1128 = vmatpush1.msra.mxu0 0.0
        %1129 = vmatprep.subr.mxu0 0.0
        %1130 = vmatpush1.msra.mxu0 0.0
        %1131 = vmatprep.subr.mxu0 0.0
        %1132 = vmatpush1.msra.mxu0 0.0
        %1133 = vmatprep.subr.mxu0 0.0
        %1134 = vmatpush1.msra.mxu0 0.0
        %1135 = vmatprep.subr.mxu0 0.0
        %1136 = vmatpush1.msra.mxu0 0.0
        %1137 = vmatprep.subr.mxu0 0.0
        %1138 = vmatpush1.msra.mxu0 0.0
        %1139 = vmatprep.subr.mxu0 0.0
        %1140 = vmatpush1.msra.mxu0 0.0
        %1141 = vmatprep.subr.mxu0 0.0
        %1142 = vmatpush1.msra.mxu0 0.0
        %1143 = vmatprep.subr.mxu0 0.0
        %1144 = vmatpush1.msra.mxu0 0.0
        %1145 = vmatprep.subr.mxu0 0.0
        %1146 = vmatpush1.msra.mxu0 0.0
        %1147 = vmatprep.subr.mxu0 0.0
        %1148 = vmatpush1.msra.mxu0 0.0
        %1149 = vmatprep.subr.mxu0 0.0
        %1150 = vmatpush1.msra.mxu0 0.0
        %1151 = vmatprep.mubr.f32.mxu0 0.0
        %v1152 = vand.u32 %v343, 4294901760
        %1153 = vmatmul.mubr.f32.gmra.mrb[0].mxu0 %v1152
        %v1154 = vpop.f32.mrb[0].mxu0
        %v1155 = vadd.f32 %v987, %v1154
        %v1156 = vpop.f32.mrb[0].mxu0
        %v1157 = vadd.f32 %v989, %v1156
        %1158 = vdwg.mxu0
        %v1159 = vand.u32 %v345, 4294901760
        %1160 = vmatprep.subr.mxu0 %v1159
        %v1161 = vand.u32 %v344, 4294901760
        %1162 = vmatpush1.msra.mxu0 %v1161
        %v1163 = vand.u32 %v349, 4294901760
        %1164 = vmatprep.subr.mxu0 %v1163
        %v1165 = vand.u32 %v348, 4294901760
        %1166 = vmatpush1.msra.mxu0 %v1165
        %v1167 = vand.u32 %v353, 4294901760
        %1168 = vmatprep.subr.mxu0 %v1167
        %v1169 = vand.u32 %v352, 4294901760
        %1170 = vmatpush1.msra.mxu0 %v1169
        %v1171 = vand.u32 %v357, 4294901760
        %1172 = vmatprep.subr.mxu0 %v1171
        %v1173 = vand.u32 %v356, 4294901760
        %1174 = vmatpush1.msra.mxu0 %v1173
        %v1175 = vand.u32 %v361, 4294901760
        %1176 = vmatprep.subr.mxu0 %v1175
        %v1177 = vand.u32 %v360, 4294901760
        %1178 = vmatpush1.msra.mxu0 %v1177
        %v1179 = vand.u32 %v365, 4294901760
        %1180 = vmatprep.subr.mxu0 %v1179
        %v1181 = vand.u32 %v364, 4294901760
        %1182 = vmatpush1.msra.mxu0 %v1181
        %v1183 = vand.u32 %v369, 4294901760
        %1184 = vmatprep.subr.mxu0 %v1183
        %v1185 = vand.u32 %v368, 4294901760
        %1186 = vmatpush1.msra.mxu0 %v1185
        %v1187 = vand.u32 %v373, 4294901760
        %1188 = vmatprep.subr.mxu0 %v1187
        %v1189 = vand.u32 %v372, 4294901760
        %1190 = vmatpush1.msra.mxu0 %v1189
        %v1191 = vand.u32 %v377, 4294901760
        %1192 = vmatprep.subr.mxu0 %v1191
        %v1193 = vand.u32 %v376, 4294901760
        %1194 = vmatpush1.msra.mxu0 %v1193
        %v1195 = vand.u32 %v381, 4294901760
        %1196 = vmatprep.subr.mxu0 %v1195
        %v1197 = vand.u32 %v380, 4294901760
        %1198 = vmatpush1.msra.mxu0 %v1197
        %v1199 = vand.u32 %v385, 4294901760
        %1200 = vmatprep.subr.mxu0 %v1199
        %v1201 = vand.u32 %v384, 4294901760
        %1202 = vmatpush1.msra.mxu0 %v1201
        %v1203 = vand.u32 %v389, 4294901760
        %1204 = vmatprep.subr.mxu0 %v1203
        %v1205 = vand.u32 %v388, 4294901760
        %1206 = vmatpush1.msra.mxu0 %v1205
        %v1207 = vand.u32 %v393, 4294901760
        %1208 = vmatprep.subr.mxu0 %v1207
        %v1209 = vand.u32 %v392, 4294901760
        %1210 = vmatpush1.msra.mxu0 %v1209
        %v1211 = vand.u32 %v397, 4294901760
        %1212 = vmatprep.subr.mxu0 %v1211
        %v1213 = vand.u32 %v396, 4294901760
        %1214 = vmatpush1.msra.mxu0 %v1213
        %v1215 = vand.u32 %v401, 4294901760
        %1216 = vmatprep.subr.mxu0 %v1215
        %v1217 = vand.u32 %v400, 4294901760
        %1218 = vmatpush1.msra.mxu0 %v1217
        %v1219 = vand.u32 %v405, 4294901760
        %1220 = vmatprep.subr.mxu0 %v1219
        %v1221 = vand.u32 %v404, 4294901760
        %1222 = vmatpush1.msra.mxu0 %v1221
        %1223 = vmatprep.subr.mxu0 0.0
        %1224 = vmatpush1.msra.mxu0 0.0
        %1225 = vmatprep.subr.mxu0 0.0
        %1226 = vmatpush1.msra.mxu0 0.0
        %1227 = vmatprep.subr.mxu0 0.0
        %1228 = vmatpush1.msra.mxu0 0.0
        %1229 = vmatprep.subr.mxu0 0.0
        %1230 = vmatpush1.msra.mxu0 0.0
        %1231 = vmatprep.subr.mxu0 0.0
        %1232 = vmatpush1.msra.mxu0 0.0
        %1233 = vmatprep.subr.mxu0 0.0
        %1234 = vmatpush1.msra.mxu0 0.0
        %1235 = vmatprep.subr.mxu0 0.0
        %1236 = vmatpush1.msra.mxu0 0.0
        %1237 = vmatprep.subr.mxu0 0.0
        %1238 = vmatpush1.msra.mxu0 0.0
        %1239 = vmatprep.subr.mxu0 0.0
        %1240 = vmatpush1.msra.mxu0 0.0
        %1241 = vmatprep.subr.mxu0 0.0
        %1242 = vmatpush1.msra.mxu0 0.0
        %1243 = vmatprep.subr.mxu0 0.0
        %1244 = vmatpush1.msra.mxu0 0.0
        %1245 = vmatprep.subr.mxu0 0.0
        %1246 = vmatpush1.msra.mxu0 0.0
        %1247 = vmatprep.subr.mxu0 0.0
        %1248 = vmatpush1.msra.mxu0 0.0
        %1249 = vmatprep.subr.mxu0 0.0
        %1250 = vmatpush1.msra.mxu0 0.0
        %1251 = vmatprep.subr.mxu0 0.0
        %1252 = vmatpush1.msra.mxu0 0.0
        %1253 = vmatprep.subr.mxu0 0.0
        %1254 = vmatpush1.msra.mxu0 0.0
        %1255 = vmatprep.mubr.f32.mxu0 0.0
        %v1256 = vand.u32 %v343, 4294901760
        %1257 = vmatmul.mubr.f32.gmra.mrb[0].mxu0 %v1256
        %v1258 = vpop.f32.mrb[0].mxu0
        %v1259 = vadd.f32 %v1155, %v1258
        %v1260 = vpop.f32.mrb[0].mxu0
        %v1261 = vadd.f32 %v1157, %v1260
        %1262 = vdwg.mxu0
        %v1263 = vand.u32 %v347, 4294901760
        %1264 = vmatprep.subr.mxu0 %v1263
        %v1265 = vand.u32 %v346, 4294901760
        %1266 = vmatpush1.msra.mxu0 %v1265
        %v1267 = vand.u32 %v351, 4294901760
        %1268 = vmatprep.subr.mxu0 %v1267
        %v1269 = vand.u32 %v350, 4294901760
        %1270 = vmatpush1.msra.mxu0 %v1269
        %v1271 = vand.u32 %v355, 4294901760
        %1272 = vmatprep.subr.mxu0 %v1271
        %v1273 = vand.u32 %v354, 4294901760
        %1274 = vmatpush1.msra.mxu0 %v1273
        %v1275 = vand.u32 %v359, 4294901760
        %1276 = vmatprep.subr.mxu0 %v1275
        %v1277 = vand.u32 %v358, 4294901760
        %1278 = vmatpush1.msra.mxu0 %v1277
        %v1279 = vand.u32 %v363, 4294901760
        %1280 = vmatprep.subr.mxu0 %v1279
        %v1281 = vand.u32 %v362, 4294901760
        %1282 = vmatpush1.msra.mxu0 %v1281
        %v1283 = vand.u32 %v367, 4294901760
        %1284 = vmatprep.subr.mxu0 %v1283
        %v1285 = vand.u32 %v366, 4294901760
        %1286 = vmatpush1.msra.mxu0 %v1285
        %v1287 = vand.u32 %v371, 4294901760
        %1288 = vmatprep.subr.mxu0 %v1287
        %v1289 = vand.u32 %v370, 4294901760
        %1290 = vmatpush1.msra.mxu0 %v1289
        %v1291 = vand.u32 %v375, 4294901760
        %1292 = vmatprep.subr.mxu0 %v1291
        %v1293 = vand.u32 %v374, 4294901760
        %1294 = vmatpush1.msra.mxu0 %v1293
        %v1295 = vand.u32 %v379, 4294901760
        %1296 = vmatprep.subr.mxu0 %v1295
        %v1297 = vand.u32 %v378, 4294901760
        %1298 = vmatpush1.msra.mxu0 %v1297
        %v1299 = vand.u32 %v383, 4294901760
        %1300 = vmatprep.subr.mxu0 %v1299
        %v1301 = vand.u32 %v382, 4294901760
        %1302 = vmatpush1.msra.mxu0 %v1301
        %v1303 = vand.u32 %v387, 4294901760
        %1304 = vmatprep.subr.mxu0 %v1303
        %v1305 = vand.u32 %v386, 4294901760
        %1306 = vmatpush1.msra.mxu0 %v1305
        %v1307 = vand.u32 %v391, 4294901760
        %1308 = vmatprep.subr.mxu0 %v1307
        %v1309 = vand.u32 %v390, 4294901760
        %1310 = vmatpush1.msra.mxu0 %v1309
        %v1311 = vand.u32 %v395, 4294901760
        %1312 = vmatprep.subr.mxu0 %v1311
        %v1313 = vand.u32 %v394, 4294901760
        %1314 = vmatpush1.msra.mxu0 %v1313
        %v1315 = vand.u32 %v399, 4294901760
        %1316 = vmatprep.subr.mxu0 %v1315
        %v1317 = vand.u32 %v398, 4294901760
        %1318 = vmatpush1.msra.mxu0 %v1317
        %v1319 = vand.u32 %v403, 4294901760
        %1320 = vmatprep.subr.mxu0 %v1319
        %v1321 = vand.u32 %v402, 4294901760
        %1322 = vmatpush1.msra.mxu0 %v1321
        %v1323 = vand.u32 %v407, 4294901760
        %1324 = vmatprep.subr.mxu0 %v1323
        %v1325 = vand.u32 %v406, 4294901760
        %1326 = vmatpush1.msra.mxu0 %v1325
        %1327 = vmatprep.subr.mxu0 0.0
        %1328 = vmatpush1.msra.mxu0 0.0
        %1329 = vmatprep.subr.mxu0 0.0
        %1330 = vmatpush1.msra.mxu0 0.0
        %1331 = vmatprep.subr.mxu0 0.0
        %1332 = vmatpush1.msra.mxu0 0.0
        %1333 = vmatprep.subr.mxu0 0.0
        %1334 = vmatpush1.msra.mxu0 0.0
        %1335 = vmatprep.subr.mxu0 0.0
        %1336 = vmatpush1.msra.mxu0 0.0
        %1337 = vmatprep.subr.mxu0 0.0
        %1338 = vmatpush1.msra.mxu0 0.0
        %1339 = vmatprep.subr.mxu0 0.0
        %1340 = vmatpush1.msra.mxu0 0.0
        %1341 = vmatprep.subr.mxu0 0.0
        %1342 = vmatpush1.msra.mxu0 0.0
        %1343 = vmatprep.subr.mxu0 0.0
        %1344 = vmatpush1.msra.mxu0 0.0
        %1345 = vmatprep.subr.mxu0 0.0
        %1346 = vmatpush1.msra.mxu0 0.0
        %1347 = vmatprep.subr.mxu0 0.0
        %1348 = vmatpush1.msra.mxu0 0.0
        %1349 = vmatprep.subr.mxu0 0.0
        %1350 = vmatpush1.msra.mxu0 0.0
        %1351 = vmatprep.subr.mxu0 0.0
        %1352 = vmatpush1.msra.mxu0 0.0
        %1353 = vmatprep.subr.mxu0 0.0
        %1354 = vmatpush1.msra.mxu0 0.0
        %1355 = vmatprep.subr.mxu0 0.0
        %1356 = vmatpush1.msra.mxu0 0.0
        %1357 = vmatprep.subr.mxu0 0.0
        %1358 = vmatpush1.msra.mxu0 0.0
        %1359 = vmatprep.mubr.f32.mxu0 0.0
        %v1360 = vand.u32 %v343, 4294901760
        %v1361 = vsub.f32 %v343, %v1360
        %v1362 = vand.u32 %v1361, 4294901760
        %v1363 = vsub.f32 %v1361, %v1362
        %v1364 = vand.u32 %v1363, 4294901760
        %1365 = vmatmul.mubr.f32.gmra.mrb[0].mxu0 %v1364
        %v1366 = vpop.f32.mrb[0].mxu0
        %v1367 = vadd.f32 0.0, %v1366
        %v1368 = vpop.f32.mrb[0].mxu0
        %v1369 = vadd.f32 0.0, %v1368
        %1370 = vdwg.mxu0
        %v1371 = vand.u32 %v347, 4294901760
        %v1372 = vsub.f32 %v347, %v1371
        %v1373 = vand.u32 %v1372, 4294901760
        %v1374 = vsub.f32 %v1372, %v1373
        %v1375 = vand.u32 %v1374, 4294901760
        %1376 = vmatprep.subr.mxu0 %v1375
        %v1377 = vand.u32 %v346, 4294901760
        %v1378 = vsub.f32 %v346, %v1377
        %v1379 = vand.u32 %v1378, 4294901760
        %v1380 = vsub.f32 %v1378, %v1379
        %v1381 = vand.u32 %v1380, 4294901760
        %1382 = vmatpush1.msra.mxu0 %v1381
        %v1383 = vand.u32 %v351, 4294901760
        %v1384 = vsub.f32 %v351, %v1383
        %v1385 = vand.u32 %v1384, 4294901760
        %v1386 = vsub.f32 %v1384, %v1385
        %v1387 = vand.u32 %v1386, 4294901760
        %1388 = vmatprep.subr.mxu0 %v1387
        %v1389 = vand.u32 %v350, 4294901760
        %v1390 = vsub.f32 %v350, %v1389
        %v1391 = vand.u32 %v1390, 4294901760
        %v1392 = vsub.f32 %v1390, %v1391
        %v1393 = vand.u32 %v1392, 4294901760
        %1394 = vmatpush1.msra.mxu0 %v1393
        %v1395 = vand.u32 %v355, 4294901760
        %v1396 = vsub.f32 %v355, %v1395
        %v1397 = vand.u32 %v1396, 4294901760
        %v1398 = vsub.f32 %v1396, %v1397
        %v1399 = vand.u32 %v1398, 4294901760
        %1400 = vmatprep.subr.mxu0 %v1399
        %v1401 = vand.u32 %v354, 4294901760
        %v1402 = vsub.f32 %v354, %v1401
        %v1403 = vand.u32 %v1402, 4294901760
        %v1404 = vsub.f32 %v1402, %v1403
        %v1405 = vand.u32 %v1404, 4294901760
        %1406 = vmatpush1.msra.mxu0 %v1405
        %v1407 = vand.u32 %v359, 4294901760
        %v1408 = vsub.f32 %v359, %v1407
        %v1409 = vand.u32 %v1408, 4294901760
        %v1410 = vsub.f32 %v1408, %v1409
        %v1411 = vand.u32 %v1410, 4294901760
        %1412 = vmatprep.subr.mxu0 %v1411
        %v1413 = vand.u32 %v358, 4294901760
        %v1414 = vsub.f32 %v358, %v1413
        %v1415 = vand.u32 %v1414, 4294901760
        %v1416 = vsub.f32 %v1414, %v1415
        %v1417 = vand.u32 %v1416, 4294901760
        %1418 = vmatpush1.msra.mxu0 %v1417
        %v1419 = vand.u32 %v363, 4294901760
        %v1420 = vsub.f32 %v363, %v1419
        %v1421 = vand.u32 %v1420, 4294901760
        %v1422 = vsub.f32 %v1420, %v1421
        %v1423 = vand.u32 %v1422, 4294901760
        %1424 = vmatprep.subr.mxu0 %v1423
        %v1425 = vand.u32 %v362, 4294901760
        %v1426 = vsub.f32 %v362, %v1425
        %v1427 = vand.u32 %v1426, 4294901760
        %v1428 = vsub.f32 %v1426, %v1427
        %v1429 = vand.u32 %v1428, 4294901760
        %1430 = vmatpush1.msra.mxu0 %v1429
        %v1431 = vand.u32 %v367, 4294901760
        %v1432 = vsub.f32 %v367, %v1431
        %v1433 = vand.u32 %v1432, 4294901760
        %v1434 = vsub.f32 %v1432, %v1433
        %v1435 = vand.u32 %v1434, 4294901760
        %1436 = vmatprep.subr.mxu0 %v1435
        %v1437 = vand.u32 %v366, 4294901760
        %v1438 = vsub.f32 %v366, %v1437
        %v1439 = vand.u32 %v1438, 4294901760
        %v1440 = vsub.f32 %v1438, %v1439
        %v1441 = vand.u32 %v1440, 4294901760
        %1442 = vmatpush1.msra.mxu0 %v1441
        %v1443 = vand.u32 %v371, 4294901760
        %v1444 = vsub.f32 %v371, %v1443
        %v1445 = vand.u32 %v1444, 4294901760
        %v1446 = vsub.f32 %v1444, %v1445
        %v1447 = vand.u32 %v1446, 4294901760
        %1448 = vmatprep.subr.mxu0 %v1447
        %v1449 = vand.u32 %v370, 4294901760
        %v1450 = vsub.f32 %v370, %v1449
        %v1451 = vand.u32 %v1450, 4294901760
        %v1452 = vsub.f32 %v1450, %v1451
        %v1453 = vand.u32 %v1452, 4294901760
        %1454 = vmatpush1.msra.mxu0 %v1453
        %v1455 = vand.u32 %v375, 4294901760
        %v1456 = vsub.f32 %v375, %v1455
        %v1457 = vand.u32 %v1456, 4294901760
        %v1458 = vsub.f32 %v1456, %v1457
        %v1459 = vand.u32 %v1458, 4294901760
        %1460 = vmatprep.subr.mxu0 %v1459
        %v1461 = vand.u32 %v374, 4294901760
        %v1462 = vsub.f32 %v374, %v1461
        %v1463 = vand.u32 %v1462, 4294901760
        %v1464 = vsub.f32 %v1462, %v1463
        %v1465 = vand.u32 %v1464, 4294901760
        %1466 = vmatpush1.msra.mxu0 %v1465
        %v1467 = vand.u32 %v379, 4294901760
        %v1468 = vsub.f32 %v379, %v1467
        %v1469 = vand.u32 %v1468, 4294901760
        %v1470 = vsub.f32 %v1468, %v1469
        %v1471 = vand.u32 %v1470, 4294901760
        %1472 = vmatprep.subr.mxu0 %v1471
        %v1473 = vand.u32 %v378, 4294901760
        %v1474 = vsub.f32 %v378, %v1473
        %v1475 = vand.u32 %v1474, 4294901760
        %v1476 = vsub.f32 %v1474, %v1475
        %v1477 = vand.u32 %v1476, 4294901760
        %1478 = vmatpush1.msra.mxu0 %v1477
        %v1479 = vand.u32 %v383, 4294901760
        %v1480 = vsub.f32 %v383, %v1479
        %v1481 = vand.u32 %v1480, 4294901760
        %v1482 = vsub.f32 %v1480, %v1481
        %v1483 = vand.u32 %v1482, 4294901760
        %1484 = vmatprep.subr.mxu0 %v1483
        %v1485 = vand.u32 %v382, 4294901760
        %v1486 = vsub.f32 %v382, %v1485
        %v1487 = vand.u32 %v1486, 4294901760
        %v1488 = vsub.f32 %v1486, %v1487
        %v1489 = vand.u32 %v1488, 4294901760
        %1490 = vmatpush1.msra.mxu0 %v1489
        %v1491 = vand.u32 %v387, 4294901760
        %v1492 = vsub.f32 %v387, %v1491
        %v1493 = vand.u32 %v1492, 4294901760
        %v1494 = vsub.f32 %v1492, %v1493
        %v1495 = vand.u32 %v1494, 4294901760
        %1496 = vmatprep.subr.mxu0 %v1495
        %v1497 = vand.u32 %v386, 4294901760
        %v1498 = vsub.f32 %v386, %v1497
        %v1499 = vand.u32 %v1498, 4294901760
        %v1500 = vsub.f32 %v1498, %v1499
        %v1501 = vand.u32 %v1500, 4294901760
        %1502 = vmatpush1.msra.mxu0 %v1501
        %v1503 = vand.u32 %v391, 4294901760
        %v1504 = vsub.f32 %v391, %v1503
        %v1505 = vand.u32 %v1504, 4294901760
        %v1506 = vsub.f32 %v1504, %v1505
        %v1507 = vand.u32 %v1506, 4294901760
        %1508 = vmatprep.subr.mxu0 %v1507
        %v1509 = vand.u32 %v390, 4294901760
        %v1510 = vsub.f32 %v390, %v1509
        %v1511 = vand.u32 %v1510, 4294901760
        %v1512 = vsub.f32 %v1510, %v1511
        %v1513 = vand.u32 %v1512, 4294901760
        %1514 = vmatpush1.msra.mxu0 %v1513
        %v1515 = vand.u32 %v395, 4294901760
        %v1516 = vsub.f32 %v395, %v1515
        %v1517 = vand.u32 %v1516, 4294901760
        %v1518 = vsub.f32 %v1516, %v1517
        %v1519 = vand.u32 %v1518, 4294901760
        %1520 = vmatprep.subr.mxu0 %v1519
        %v1521 = vand.u32 %v394, 4294901760
        %v1522 = vsub.f32 %v394, %v1521
        %v1523 = vand.u32 %v1522, 4294901760
        %v1524 = vsub.f32 %v1522, %v1523
        %v1525 = vand.u32 %v1524, 4294901760
        %1526 = vmatpush1.msra.mxu0 %v1525
        %v1527 = vand.u32 %v399, 4294901760
        %v1528 = vsub.f32 %v399, %v1527
        %v1529 = vand.u32 %v1528, 4294901760
        %v1530 = vsub.f32 %v1528, %v1529
        %v1531 = vand.u32 %v1530, 4294901760
        %1532 = vmatprep.subr.mxu0 %v1531
        %v1533 = vand.u32 %v398, 4294901760
        %v1534 = vsub.f32 %v398, %v1533
        %v1535 = vand.u32 %v1534, 4294901760
        %v1536 = vsub.f32 %v1534, %v1535
        %v1537 = vand.u32 %v1536, 4294901760
        %1538 = vmatpush1.msra.mxu0 %v1537
        %v1539 = vand.u32 %v403, 4294901760
        %v1540 = vsub.f32 %v403, %v1539
        %v1541 = vand.u32 %v1540, 4294901760
        %v1542 = vsub.f32 %v1540, %v1541
        %v1543 = vand.u32 %v1542, 4294901760
        %1544 = vmatprep.subr.mxu0 %v1543
        %v1545 = vand.u32 %v402, 4294901760
        %v1546 = vsub.f32 %v402, %v1545
        %v1547 = vand.u32 %v1546, 4294901760
        %v1548 = vsub.f32 %v1546, %v1547
        %v1549 = vand.u32 %v1548, 4294901760
        %1550 = vmatpush1.msra.mxu0 %v1549
        %v1551 = vand.u32 %v407, 4294901760
        %v1552 = vsub.f32 %v407, %v1551
        %v1553 = vand.u32 %v1552, 4294901760
        %v1554 = vsub.f32 %v1552, %v1553
        %v1555 = vand.u32 %v1554, 4294901760
        %1556 = vmatprep.subr.mxu0 %v1555
        %v1557 = vand.u32 %v406, 4294901760
        %v1558 = vsub.f32 %v406, %v1557
        %v1559 = vand.u32 %v1558, 4294901760
        %v1560 = vsub.f32 %v1558, %v1559
        %v1561 = vand.u32 %v1560, 4294901760
        %1562 = vmatpush1.msra.mxu0 %v1561
        %1563 = vmatprep.subr.mxu0 0.0
        %1564 = vmatpush1.msra.mxu0 0.0
        %1565 = vmatprep.subr.mxu0 0.0
        %1566 = vmatpush1.msra.mxu0 0.0
        %1567 = vmatprep.subr.mxu0 0.0
        %1568 = vmatpush1.msra.mxu0 0.0
        %1569 = vmatprep.subr.mxu0 0.0
        %1570 = vmatpush1.msra.mxu0 0.0
        %1571 = vmatprep.subr.mxu0 0.0
        %1572 = vmatpush1.msra.mxu0 0.0
        %1573 = vmatprep.subr.mxu0 0.0
        %1574 = vmatpush1.msra.mxu0 0.0
        %1575 = vmatprep.subr.mxu0 0.0
        %1576 = vmatpush1.msra.mxu0 0.0
        %1577 = vmatprep.subr.mxu0 0.0
        %1578 = vmatpush1.msra.mxu0 0.0
        %1579 = vmatprep.subr.mxu0 0.0
        %1580 = vmatpush1.msra.mxu0 0.0
        %1581 = vmatprep.subr.mxu0 0.0
        %1582 = vmatpush1.msra.mxu0 0.0
        %1583 = vmatprep.subr.mxu0 0.0
        %1584 = vmatpush1.msra.mxu0 0.0
        %1585 = vmatprep.subr.mxu0 0.0
        %1586 = vmatpush1.msra.mxu0 0.0
        %1587 = vmatprep.subr.mxu0 0.0
        %1588 = vmatpush1.msra.mxu0 0.0
        %1589 = vmatprep.subr.mxu0 0.0
        %1590 = vmatpush1.msra.mxu0 0.0
        %1591 = vmatprep.subr.mxu0 0.0
        %1592 = vmatpush1.msra.mxu0 0.0
        %1593 = vmatprep.subr.mxu0 0.0
        %1594 = vmatpush1.msra.mxu0 0.0
        %1595 = vmatprep.mubr.f32.mxu0 0.0
        %v1596 = vand.u32 %v343, 4294901760
        %1597 = vmatmul.mubr.f32.gmra.mrb[0].mxu0 %v1596
        %v1598 = vpop.f32.mrb[0].mxu0
        %v1599 = vadd.f32 %v1367, %v1598
        %v1600 = vpop.f32.mrb[0].mxu0
        %v1601 = vadd.f32 %v1369, %v1600
        %1602 = vdwg.mxu0
        %v1603 = vand.u32 %v347, 4294901760
        %v1604 = vsub.f32 %v347, %v1603
        %1605 = vmatprep.subr.mxu0 %v1604
        %v1606 = vand.u32 %v346, 4294901760
        %v1607 = vsub.f32 %v346, %v1606
        %1608 = vmatpush1.msra.mxu0 %v1607
        %v1609 = vand.u32 %v351, 4294901760
        %v1610 = vsub.f32 %v351, %v1609
        %1611 = vmatprep.subr.mxu0 %v1610
        %v1612 = vand.u32 %v350, 4294901760
        %v1613 = vsub.f32 %v350, %v1612
        %1614 = vmatpush1.msra.mxu0 %v1613
        %v1615 = vand.u32 %v355, 4294901760
        %v1616 = vsub.f32 %v355, %v1615
        %1617 = vmatprep.subr.mxu0 %v1616
        %v1618 = vand.u32 %v354, 4294901760
        %v1619 = vsub.f32 %v354, %v1618
        %1620 = vmatpush1.msra.mxu0 %v1619
        %v1621 = vand.u32 %v359, 4294901760
        %v1622 = vsub.f32 %v359, %v1621
        %1623 = vmatprep.subr.mxu0 %v1622
        %v1624 = vand.u32 %v358, 4294901760
        %v1625 = vsub.f32 %v358, %v1624
        %1626 = vmatpush1.msra.mxu0 %v1625
        %v1627 = vand.u32 %v363, 4294901760
        %v1628 = vsub.f32 %v363, %v1627
        %1629 = vmatprep.subr.mxu0 %v1628
        %v1630 = vand.u32 %v362, 4294901760
        %v1631 = vsub.f32 %v362, %v1630
        %1632 = vmatpush1.msra.mxu0 %v1631
        %v1633 = vand.u32 %v367, 4294901760
        %v1634 = vsub.f32 %v367, %v1633
        %1635 = vmatprep.subr.mxu0 %v1634
        %v1636 = vand.u32 %v366, 4294901760
        %v1637 = vsub.f32 %v366, %v1636
        %1638 = vmatpush1.msra.mxu0 %v1637
        %v1639 = vand.u32 %v371, 4294901760
        %v1640 = vsub.f32 %v371, %v1639
        %1641 = vmatprep.subr.mxu0 %v1640
        %v1642 = vand.u32 %v370, 4294901760
        %v1643 = vsub.f32 %v370, %v1642
        %1644 = vmatpush1.msra.mxu0 %v1643
        %v1645 = vand.u32 %v375, 4294901760
        %v1646 = vsub.f32 %v375, %v1645
        %1647 = vmatprep.subr.mxu0 %v1646
        %v1648 = vand.u32 %v374, 4294901760
        %v1649 = vsub.f32 %v374, %v1648
        %1650 = vmatpush1.msra.mxu0 %v1649
        %v1651 = vand.u32 %v379, 4294901760
        %v1652 = vsub.f32 %v379, %v1651
        %1653 = vmatprep.subr.mxu0 %v1652
        %v1654 = vand.u32 %v378, 4294901760
        %v1655 = vsub.f32 %v378, %v1654
        %1656 = vmatpush1.msra.mxu0 %v1655
        %v1657 = vand.u32 %v383, 4294901760
        %v1658 = vsub.f32 %v383, %v1657
        %1659 = vmatprep.subr.mxu0 %v1658
        %v1660 = vand.u32 %v382, 4294901760
        %v1661 = vsub.f32 %v382, %v1660
        %1662 = vmatpush1.msra.mxu0 %v1661
        %v1663 = vand.u32 %v387, 4294901760
        %v1664 = vsub.f32 %v387, %v1663
        %1665 = vmatprep.subr.mxu0 %v1664
        %v1666 = vand.u32 %v386, 4294901760
        %v1667 = vsub.f32 %v386, %v1666
        %1668 = vmatpush1.msra.mxu0 %v1667
        %v1669 = vand.u32 %v391, 4294901760
        %v1670 = vsub.f32 %v391, %v1669
        %1671 = vmatprep.subr.mxu0 %v1670
        %v1672 = vand.u32 %v390, 4294901760
        %v1673 = vsub.f32 %v390, %v1672
        %1674 = vmatpush1.msra.mxu0 %v1673
        %v1675 = vand.u32 %v395, 4294901760
        %v1676 = vsub.f32 %v395, %v1675
        %1677 = vmatprep.subr.mxu0 %v1676
        %v1678 = vand.u32 %v394, 4294901760
        %v1679 = vsub.f32 %v394, %v1678
        %1680 = vmatpush1.msra.mxu0 %v1679
        %v1681 = vand.u32 %v399, 4294901760
        %v1682 = vsub.f32 %v399, %v1681
        %1683 = vmatprep.subr.mxu0 %v1682
        %v1684 = vand.u32 %v398, 4294901760
        %v1685 = vsub.f32 %v398, %v1684
        %1686 = vmatpush1.msra.mxu0 %v1685
        %v1687 = vand.u32 %v403, 4294901760
        %v1688 = vsub.f32 %v403, %v1687
        %1689 = vmatprep.subr.mxu0 %v1688
        %v1690 = vand.u32 %v402, 4294901760
        %v1691 = vsub.f32 %v402, %v1690
        %1692 = vmatpush1.msra.mxu0 %v1691
        %v1693 = vand.u32 %v407, 4294901760
        %v1694 = vsub.f32 %v407, %v1693
        %1695 = vmatprep.subr.mxu0 %v1694
        %v1696 = vand.u32 %v406, 4294901760
        %v1697 = vsub.f32 %v406, %v1696
        %1698 = vmatpush1.msra.mxu0 %v1697
        %1699 = vmatprep.subr.mxu0 0.0
        %1700 = vmatpush1.msra.mxu0 0.0
        %1701 = vmatprep.subr.mxu0 0.0
        %1702 = vmatpush1.msra.mxu0 0.0
        %1703 = vmatprep.subr.mxu0 0.0
        %1704 = vmatpush1.msra.mxu0 0.0
        %1705 = vmatprep.subr.mxu0 0.0
        %1706 = vmatpush1.msra.mxu0 0.0
        %1707 = vmatprep.subr.mxu0 0.0
        %1708 = vmatpush1.msra.mxu0 0.0
        %1709 = vmatprep.subr.mxu0 0.0
        %1710 = vmatpush1.msra.mxu0 0.0
        %1711 = vmatprep.subr.mxu0 0.0
        %1712 = vmatpush1.msra.mxu0 0.0
        %1713 = vmatprep.subr.mxu0 0.0
        %1714 = vmatpush1.msra.mxu0 0.0
        %1715 = vmatprep.subr.mxu0 0.0
        %1716 = vmatpush1.msra.mxu0 0.0
        %1717 = vmatprep.subr.mxu0 0.0
        %1718 = vmatpush1.msra.mxu0 0.0
        %1719 = vmatprep.subr.mxu0 0.0
        %1720 = vmatpush1.msra.mxu0 0.0
        %1721 = vmatprep.subr.mxu0 0.0
        %1722 = vmatpush1.msra.mxu0 0.0
        %1723 = vmatprep.subr.mxu0 0.0
        %1724 = vmatpush1.msra.mxu0 0.0
        %1725 = vmatprep.subr.mxu0 0.0
        %1726 = vmatpush1.msra.mxu0 0.0
        %1727 = vmatprep.subr.mxu0 0.0
        %1728 = vmatpush1.msra.mxu0 0.0
        %1729 = vmatprep.subr.mxu0 0.0
        %1730 = vmatpush1.msra.mxu0 0.0
        %1731 = vmatprep.mubr.f32.mxu0 0.0
        %v1732 = vand.u32 %v343, 4294901760
        %v1733 = vsub.f32 %v343, %v1732
        %1734 = vmatmul.mubr.f32.gmra.mrb[0].mxu0 %v1733
        %v1735 = vpop.f32.mrb[0].mxu0
        %v1736 = vadd.f32 %v1599, %v1735
        %v1737 = vpop.f32.mrb[0].mxu0
        %v1738 = vadd.f32 %v1601, %v1737
        %1739 = vdwg.mxu0
        %v1740 = vand.u32 %v347, 4294901760
        %1741 = vmatprep.subr.mxu0 %v1740
        %v1742 = vand.u32 %v346, 4294901760
        %1743 = vmatpush1.msra.mxu0 %v1742
        %v1744 = vand.u32 %v351, 4294901760
        %1745 = vmatprep.subr.mxu0 %v1744
        %v1746 = vand.u32 %v350, 4294901760
        %1747 = vmatpush1.msra.mxu0 %v1746
        %v1748 = vand.u32 %v355, 4294901760
        %1749 = vmatprep.subr.mxu0 %v1748
        %v1750 = vand.u32 %v354, 4294901760
        %1751 = vmatpush1.msra.mxu0 %v1750
        %v1752 = vand.u32 %v359, 4294901760
        %1753 = vmatprep.subr.mxu0 %v1752
        %v1754 = vand.u32 %v358, 4294901760
        %1755 = vmatpush1.msra.mxu0 %v1754
        %v1756 = vand.u32 %v363, 4294901760
        %1757 = vmatprep.subr.mxu0 %v1756
        %v1758 = vand.u32 %v362, 4294901760
        %1759 = vmatpush1.msra.mxu0 %v1758
        %v1760 = vand.u32 %v367, 4294901760
        %1761 = vmatprep.subr.mxu0 %v1760
        %v1762 = vand.u32 %v366, 4294901760
        %1763 = vmatpush1.msra.mxu0 %v1762
        %v1764 = vand.u32 %v371, 4294901760
        %1765 = vmatprep.subr.mxu0 %v1764
        %v1766 = vand.u32 %v370, 4294901760
        %1767 = vmatpush1.msra.mxu0 %v1766
        %v1768 = vand.u32 %v375, 4294901760
        %1769 = vmatprep.subr.mxu0 %v1768
        %v1770 = vand.u32 %v374, 4294901760
        %1771 = vmatpush1.msra.mxu0 %v1770
        %v1772 = vand.u32 %v379, 4294901760
        %1773 = vmatprep.subr.mxu0 %v1772
        %v1774 = vand.u32 %v378, 4294901760
        %1775 = vmatpush1.msra.mxu0 %v1774
        %v1776 = vand.u32 %v383, 4294901760
        %1777 = vmatprep.subr.mxu0 %v1776
        %v1778 = vand.u32 %v382, 4294901760
        %1779 = vmatpush1.msra.mxu0 %v1778
        %v1780 = vand.u32 %v387, 4294901760
        %1781 = vmatprep.subr.mxu0 %v1780
        %v1782 = vand.u32 %v386, 4294901760
        %1783 = vmatpush1.msra.mxu0 %v1782
        %v1784 = vand.u32 %v391, 4294901760
        %1785 = vmatprep.subr.mxu0 %v1784
        %v1786 = vand.u32 %v390, 4294901760
        %1787 = vmatpush1.msra.mxu0 %v1786
        %v1788 = vand.u32 %v395, 4294901760
        %1789 = vmatprep.subr.mxu0 %v1788
        %v1790 = vand.u32 %v394, 4294901760
        %1791 = vmatpush1.msra.mxu0 %v1790
        %v1792 = vand.u32 %v399, 4294901760
        %1793 = vmatprep.subr.mxu0 %v1792
        %v1794 = vand.u32 %v398, 4294901760
        %1795 = vmatpush1.msra.mxu0 %v1794
        %v1796 = vand.u32 %v403, 4294901760
        %1797 = vmatprep.subr.mxu0 %v1796
        %v1798 = vand.u32 %v402, 4294901760
        %1799 = vmatpush1.msra.mxu0 %v1798
        %v1800 = vand.u32 %v407, 4294901760
        %1801 = vmatprep.subr.mxu0 %v1800
        %v1802 = vand.u32 %v406, 4294901760
        %1803 = vmatpush1.msra.mxu0 %v1802
        %1804 = vmatprep.subr.mxu0 0.0
        %1805 = vmatpush1.msra.mxu0 0.0
        %1806 = vmatprep.subr.mxu0 0.0
        %1807 = vmatpush1.msra.mxu0 0.0
        %1808 = vmatprep.subr.mxu0 0.0
        %1809 = vmatpush1.msra.mxu0 0.0
        %1810 = vmatprep.subr.mxu0 0.0
        %1811 = vmatpush1.msra.mxu0 0.0
        %1812 = vmatprep.subr.mxu0 0.0
        %1813 = vmatpush1.msra.mxu0 0.0
        %1814 = vmatprep.subr.mxu0 0.0
        %1815 = vmatpush1.msra.mxu0 0.0
        %1816 = vmatprep.subr.mxu0 0.0
        %1817 = vmatpush1.msra.mxu0 0.0
        %1818 = vmatprep.subr.mxu0 0.0
        %1819 = vmatpush1.msra.mxu0 0.0
        %1820 = vmatprep.subr.mxu0 0.0
        %1821 = vmatpush1.msra.mxu0 0.0
        %1822 = vmatprep.subr.mxu0 0.0
        %1823 = vmatpush1.msra.mxu0 0.0
        %1824 = vmatprep.subr.mxu0 0.0
        %1825 = vmatpush1.msra.mxu0 0.0
        %1826 = vmatprep.subr.mxu0 0.0
        %1827 = vmatpush1.msra.mxu0 0.0
        %1828 = vmatprep.subr.mxu0 0.0
        %1829 = vmatpush1.msra.mxu0 0.0
        %1830 = vmatprep.subr.mxu0 0.0
        %1831 = vmatpush1.msra.mxu0 0.0
        %1832 = vmatprep.subr.mxu0 0.0
        %1833 = vmatpush1.msra.mxu0 0.0
        %1834 = vmatprep.subr.mxu0 0.0
        %1835 = vmatpush1.msra.mxu0 0.0
        %1836 = vmatprep.mubr.f32.mxu0 0.0
        %v1837 = vand.u32 %v343, 4294901760
        %v1838 = vsub.f32 %v343, %v1837
        %v1839 = vand.u32 %v1838, 4294901760
        %1840 = vmatmul.mubr.f32.gmra.mrb[0].mxu0 %v1839
        %v1841 = vpop.f32.mrb[0].mxu0
        %v1842 = vadd.f32 %v1736, %v1841
        %v1843 = vpop.f32.mrb[0].mxu0
        %v1844 = vadd.f32 %v1738, %v1843
        %1845 = vdwg.mxu0
        %v1846 = vand.u32 %v347, 4294901760
        %v1847 = vsub.f32 %v347, %v1846
        %v1848 = vand.u32 %v1847, 4294901760
        %1849 = vmatprep.subr.mxu0 %v1848
        %v1850 = vand.u32 %v346, 4294901760
        %v1851 = vsub.f32 %v346, %v1850
        %v1852 = vand.u32 %v1851, 4294901760
        %1853 = vmatpush1.msra.mxu0 %v1852
        %v1854 = vand.u32 %v351, 4294901760
        %v1855 = vsub.f32 %v351, %v1854
        %v1856 = vand.u32 %v1855, 4294901760
        %1857 = vmatprep.subr.mxu0 %v1856
        %v1858 = vand.u32 %v350, 4294901760
        %v1859 = vsub.f32 %v350, %v1858
        %v1860 = vand.u32 %v1859, 4294901760
        %1861 = vmatpush1.msra.mxu0 %v1860
        %v1862 = vand.u32 %v355, 4294901760
        %v1863 = vsub.f32 %v355, %v1862
        %v1864 = vand.u32 %v1863, 4294901760
        %1865 = vmatprep.subr.mxu0 %v1864
        %v1866 = vand.u32 %v354, 4294901760
        %v1867 = vsub.f32 %v354, %v1866
        %v1868 = vand.u32 %v1867, 4294901760
        %1869 = vmatpush1.msra.mxu0 %v1868
        %v1870 = vand.u32 %v359, 4294901760
        %v1871 = vsub.f32 %v359, %v1870
        %v1872 = vand.u32 %v1871, 4294901760
        %1873 = vmatprep.subr.mxu0 %v1872
        %v1874 = vand.u32 %v358, 4294901760
        %v1875 = vsub.f32 %v358, %v1874
        %v1876 = vand.u32 %v1875, 4294901760
        %1877 = vmatpush1.msra.mxu0 %v1876
        %v1878 = vand.u32 %v363, 4294901760
        %v1879 = vsub.f32 %v363, %v1878
        %v1880 = vand.u32 %v1879, 4294901760
        %1881 = vmatprep.subr.mxu0 %v1880
        %v1882 = vand.u32 %v362, 4294901760
        %v1883 = vsub.f32 %v362, %v1882
        %v1884 = vand.u32 %v1883, 4294901760
        %1885 = vmatpush1.msra.mxu0 %v1884
        %v1886 = vand.u32 %v367, 4294901760
        %v1887 = vsub.f32 %v367, %v1886
        %v1888 = vand.u32 %v1887, 4294901760
        %1889 = vmatprep.subr.mxu0 %v1888
        %v1890 = vand.u32 %v366, 4294901760
        %v1891 = vsub.f32 %v366, %v1890
        %v1892 = vand.u32 %v1891, 4294901760
        %1893 = vmatpush1.msra.mxu0 %v1892
        %v1894 = vand.u32 %v371, 4294901760
        %v1895 = vsub.f32 %v371, %v1894
        %v1896 = vand.u32 %v1895, 4294901760
        %1897 = vmatprep.subr.mxu0 %v1896
        %v1898 = vand.u32 %v370, 4294901760
        %v1899 = vsub.f32 %v370, %v1898
        %v1900 = vand.u32 %v1899, 4294901760
        %1901 = vmatpush1.msra.mxu0 %v1900
        %v1902 = vand.u32 %v375, 4294901760
        %v1903 = vsub.f32 %v375, %v1902
        %v1904 = vand.u32 %v1903, 4294901760
        %1905 = vmatprep.subr.mxu0 %v1904
        %v1906 = vand.u32 %v374, 4294901760
        %v1907 = vsub.f32 %v374, %v1906
        %v1908 = vand.u32 %v1907, 4294901760
        %1909 = vmatpush1.msra.mxu0 %v1908
        %v1910 = vand.u32 %v379, 4294901760
        %v1911 = vsub.f32 %v379, %v1910
        %v1912 = vand.u32 %v1911, 4294901760
        %1913 = vmatprep.subr.mxu0 %v1912
        %v1914 = vand.u32 %v378, 4294901760
        %v1915 = vsub.f32 %v378, %v1914
        %v1916 = vand.u32 %v1915, 4294901760
        %1917 = vmatpush1.msra.mxu0 %v1916
        %v1918 = vand.u32 %v383, 4294901760
        %v1919 = vsub.f32 %v383, %v1918
        %v1920 = vand.u32 %v1919, 4294901760
        %1921 = vmatprep.subr.mxu0 %v1920
        %v1922 = vand.u32 %v382, 4294901760
        %v1923 = vsub.f32 %v382, %v1922
        %v1924 = vand.u32 %v1923, 4294901760
        %1925 = vmatpush1.msra.mxu0 %v1924
        %v1926 = vand.u32 %v387, 4294901760
        %v1927 = vsub.f32 %v387, %v1926
        %v1928 = vand.u32 %v1927, 4294901760
        %1929 = vmatprep.subr.mxu0 %v1928
        %v1930 = vand.u32 %v386, 4294901760
        %v1931 = vsub.f32 %v386, %v1930
        %v1932 = vand.u32 %v1931, 4294901760
        %1933 = vmatpush1.msra.mxu0 %v1932
        %v1934 = vand.u32 %v391, 4294901760
        %v1935 = vsub.f32 %v391, %v1934
        %v1936 = vand.u32 %v1935, 4294901760
        %1937 = vmatprep.subr.mxu0 %v1936
        %v1938 = vand.u32 %v390, 4294901760
        %v1939 = vsub.f32 %v390, %v1938
        %v1940 = vand.u32 %v1939, 4294901760
        %1941 = vmatpush1.msra.mxu0 %v1940
        %v1942 = vand.u32 %v395, 4294901760
        %v1943 = vsub.f32 %v395, %v1942
        %v1944 = vand.u32 %v1943, 4294901760
        %1945 = vmatprep.subr.mxu0 %v1944
        %v1946 = vand.u32 %v394, 4294901760
        %v1947 = vsub.f32 %v394, %v1946
        %v1948 = vand.u32 %v1947, 4294901760
        %1949 = vmatpush1.msra.mxu0 %v1948
        %v1950 = vand.u32 %v399, 4294901760
        %v1951 = vsub.f32 %v399, %v1950
        %v1952 = vand.u32 %v1951, 4294901760
        %1953 = vmatprep.subr.mxu0 %v1952
        %v1954 = vand.u32 %v398, 4294901760
        %v1955 = vsub.f32 %v398, %v1954
        %v1956 = vand.u32 %v1955, 4294901760
        %1957 = vmatpush1.msra.mxu0 %v1956
        %v1958 = vand.u32 %v403, 4294901760
        %v1959 = vsub.f32 %v403, %v1958
        %v1960 = vand.u32 %v1959, 4294901760
        %1961 = vmatprep.subr.mxu0 %v1960
        %v1962 = vand.u32 %v402, 4294901760
        %v1963 = vsub.f32 %v402, %v1962
        %v1964 = vand.u32 %v1963, 4294901760
        %1965 = vmatpush1.msra.mxu0 %v1964
        %v1966 = vand.u32 %v407, 4294901760
        %v1967 = vsub.f32 %v407, %v1966
        %v1968 = vand.u32 %v1967, 4294901760
        %1969 = vmatprep.subr.mxu0 %v1968
        %v1970 = vand.u32 %v406, 4294901760
        %v1971 = vsub.f32 %v406, %v1970
        %v1972 = vand.u32 %v1971, 4294901760
        %1973 = vmatpush1.msra.mxu0 %v1972
        %1974 = vmatprep.subr.mxu0 0.0
        %1975 = vmatpush1.msra.mxu0 0.0
        %1976 = vmatprep.subr.mxu0 0.0
        %1977 = vmatpush1.msra.mxu0 0.0
        %1978 = vmatprep.subr.mxu0 0.0
        %1979 = vmatpush1.msra.mxu0 0.0
        %1980 = vmatprep.subr.mxu0 0.0
        %1981 = vmatpush1.msra.mxu0 0.0
        %1982 = vmatprep.subr.mxu0 0.0
        %1983 = vmatpush1.msra.mxu0 0.0
        %1984 = vmatprep.subr.mxu0 0.0
        %1985 = vmatpush1.msra.mxu0 0.0
        %1986 = vmatprep.subr.mxu0 0.0
        %1987 = vmatpush1.msra.mxu0 0.0
        %1988 = vmatprep.subr.mxu0 0.0
        %1989 = vmatpush1.msra.mxu0 0.0
        %1990 = vmatprep.subr.mxu0 0.0
        %1991 = vmatpush1.msra.mxu0 0.0
        %1992 = vmatprep.subr.mxu0 0.0
        %1993 = vmatpush1.msra.mxu0 0.0
        %1994 = vmatprep.subr.mxu0 0.0
        %1995 = vmatpush1.msra.mxu0 0.0
        %1996 = vmatprep.subr.mxu0 0.0
        %1997 = vmatpush1.msra.mxu0 0.0
        %1998 = vmatprep.subr.mxu0 0.0
        %1999 = vmatpush1.msra.mxu0 0.0
        %2000 = vmatprep.subr.mxu0 0.0
        %2001 = vmatpush1.msra.mxu0 0.0
        %2002 = vmatprep.subr.mxu0 0.0
        %2003 = vmatpush1.msra.mxu0 0.0
        %2004 = vmatprep.subr.mxu0 0.0
        %2005 = vmatpush1.msra.mxu0 0.0
        %2006 = vmatprep.mubr.f32.mxu0 0.0
        %v2007 = vand.u32 %v343, 4294901760
        %2008 = vmatmul.mubr.f32.gmra.mrb[0].mxu0 %v2007
        %v2009 = vpop.f32.mrb[0].mxu0
        %v2010 = vadd.f32 %v1842, %v2009
        %v2011 = vpop.f32.mrb[0].mxu0
        %v2012 = vadd.f32 %v1844, %v2011
        %2013 = vdwg.mxu0
        %v2014 = vand.u32 %v347, 4294901760
        %2015 = vmatprep.subr.mxu0 %v2014
        %v2016 = vand.u32 %v346, 4294901760
        %2017 = vmatpush1.msra.mxu0 %v2016
        %v2018 = vand.u32 %v351, 4294901760
        %2019 = vmatprep.subr.mxu0 %v2018
        %v2020 = vand.u32 %v350, 4294901760
        %2021 = vmatpush1.msra.mxu0 %v2020
        %v2022 = vand.u32 %v355, 4294901760
        %2023 = vmatprep.subr.mxu0 %v2022
        %v2024 = vand.u32 %v354, 4294901760
        %2025 = vmatpush1.msra.mxu0 %v2024
        %v2026 = vand.u32 %v359, 4294901760
        %2027 = vmatprep.subr.mxu0 %v2026
        %v2028 = vand.u32 %v358, 4294901760
        %2029 = vmatpush1.msra.mxu0 %v2028
        %v2030 = vand.u32 %v363, 4294901760
        %2031 = vmatprep.subr.mxu0 %v2030
        %v2032 = vand.u32 %v362, 4294901760
        %2033 = vmatpush1.msra.mxu0 %v2032
        %v2034 = vand.u32 %v367, 4294901760
        %2035 = vmatprep.subr.mxu0 %v2034
        %v2036 = vand.u32 %v366, 4294901760
        %2037 = vmatpush1.msra.mxu0 %v2036
        %v2038 = vand.u32 %v371, 4294901760
        %2039 = vmatprep.subr.mxu0 %v2038
        %v2040 = vand.u32 %v370, 4294901760
        %2041 = vmatpush1.msra.mxu0 %v2040
        %v2042 = vand.u32 %v375, 4294901760
        %2043 = vmatprep.subr.mxu0 %v2042
        %v2044 = vand.u32 %v374, 4294901760
        %2045 = vmatpush1.msra.mxu0 %v2044
        %v2046 = vand.u32 %v379, 4294901760
        %2047 = vmatprep.subr.mxu0 %v2046
        %v2048 = vand.u32 %v378, 4294901760
        %2049 = vmatpush1.msra.mxu0 %v2048
        %v2050 = vand.u32 %v383, 4294901760
        %2051 = vmatprep.subr.mxu0 %v2050
        %v2052 = vand.u32 %v382, 4294901760
        %2053 = vmatpush1.msra.mxu0 %v2052
        %v2054 = vand.u32 %v387, 4294901760
        %2055 = vmatprep.subr.mxu0 %v2054
        %v2056 = vand.u32 %v386, 4294901760
        %2057 = vmatpush1.msra.mxu0 %v2056
        %v2058 = vand.u32 %v391, 4294901760
        %2059 = vmatprep.subr.mxu0 %v2058
        %v2060 = vand.u32 %v390, 4294901760
        %2061 = vmatpush1.msra.mxu0 %v2060
        %v2062 = vand.u32 %v395, 4294901760
        %2063 = vmatprep.subr.mxu0 %v2062
        %v2064 = vand.u32 %v394, 4294901760
        %2065 = vmatpush1.msra.mxu0 %v2064
        %v2066 = vand.u32 %v399, 4294901760
        %2067 = vmatprep.subr.mxu0 %v2066
        %v2068 = vand.u32 %v398, 4294901760
        %2069 = vmatpush1.msra.mxu0 %v2068
        %v2070 = vand.u32 %v403, 4294901760
        %2071 = vmatprep.subr.mxu0 %v2070
        %v2072 = vand.u32 %v402, 4294901760
        %2073 = vmatpush1.msra.mxu0 %v2072
        %v2074 = vand.u32 %v407, 4294901760
        %2075 = vmatprep.subr.mxu0 %v2074
        %v2076 = vand.u32 %v406, 4294901760
        %2077 = vmatpush1.msra.mxu0 %v2076
        %2078 = vmatprep.subr.mxu0 0.0
        %2079 = vmatpush1.msra.mxu0 0.0
        %2080 = vmatprep.subr.mxu0 0.0
        %2081 = vmatpush1.msra.mxu0 0.0
        %2082 = vmatprep.subr.mxu0 0.0
        %2083 = vmatpush1.msra.mxu0 0.0
        %2084 = vmatprep.subr.mxu0 0.0
        %2085 = vmatpush1.msra.mxu0 0.0
        %2086 = vmatprep.subr.mxu0 0.0
        %2087 = vmatpush1.msra.mxu0 0.0
        %2088 = vmatprep.subr.mxu0 0.0
        %2089 = vmatpush1.msra.mxu0 0.0
        %2090 = vmatprep.subr.mxu0 0.0
        %2091 = vmatpush1.msra.mxu0 0.0
        %2092 = vmatprep.subr.mxu0 0.0
        %2093 = vmatpush1.msra.mxu0 0.0
        %2094 = vmatprep.subr.mxu0 0.0
        %2095 = vmatpush1.msra.mxu0 0.0
        %2096 = vmatprep.subr.mxu0 0.0
        %2097 = vmatpush1.msra.mxu0 0.0
        %2098 = vmatprep.subr.mxu0 0.0
        %2099 = vmatpush1.msra.mxu0 0.0
        %2100 = vmatprep.subr.mxu0 0.0
        %2101 = vmatpush1.msra.mxu0 0.0
        %2102 = vmatprep.subr.mxu0 0.0
        %2103 = vmatpush1.msra.mxu0 0.0
        %2104 = vmatprep.subr.mxu0 0.0
        %2105 = vmatpush1.msra.mxu0 0.0
        %2106 = vmatprep.subr.mxu0 0.0
        %2107 = vmatpush1.msra.mxu0 0.0
        %2108 = vmatprep.subr.mxu0 0.0
        %2109 = vmatpush1.msra.mxu0 0.0
        %2110 = vmatprep.mubr.f32.mxu0 0.0
        %v2111 = vand.u32 %v343, 4294901760
        %2112 = vmatmul.mubr.f32.gmra.mrb[0].mxu0 %v2111
        %v2113 = vpop.f32.mrb[0].mxu0
        %v2114 = vadd.f32 %v2010, %v2113
        %v2115 = vpop.f32.mrb[0].mxu0
        %v2116 = vadd.f32 %v2012, %v2115
        %2117 = vdwg.mxu0
        %v2122 = vcombine.low %v1259, %v1261
        %v2123 = vcombine.low %v2114, %v2116
        %v2125 = vunpack.c.l.s4 1983009808
        %v2126 = vunpack.c.0.s8 %v2125
        %v2127 = vlaneseq
        %v2128 = vshrl.u32 %v2127, 7
        %v2129 = vsub.s32 %v2126, %v2128
        %v2130 = vrot.slane %v2122, %v2129
        %v2132 = vunpack.c.l.s4 1983009808
        %v2133 = vunpack.c.0.s8 %v2132
        %v2134 = vlaneseq
        %v2135 = vshrl.u32 %v2134, 7
        %v2136 = vsub.s32 %v2133, %v2135
        %v2137 = vrot.slane %v2123, %v2136
        %v2138 = vcombine.low %v2130, %v2137
        %2140 = vst [vmem:[%s318] sm:$0xff] %v2138
        %s2141 = sld [smem:[#allocation2 + $0x4]]
        %v2142 = vld [vmem:[%s300] sm:$0x3]
        %v2143 = vstv %s2141
        %v2144 = vmul.f32 %v2143, %v2142
        %s2145 = sld [smem:[#allocation2 + $0x5]]
        %v2146 = vld [vmem:[%s324] sm:$0x3]
        %v2147 = vstv %s2145
        %v2148 = vmul.f32 %v2147, %v2146
        %v2149 = vadd.f32 %v2144, %v2148
        %s2150 = sld [smem:[#allocation2 + $0x6]]
        %v2151 = vld [vmem:[%s330] sm:$0x3]
        %v2152 = vstv %s2150
        %v2153 = vmul.f32 %v2152, %v2151
        %v2154 = vadd.f32 %v2149, %v2153
        %s2155 = sld [smem:[#allocation2 + $0x7]]
        %v2156 = vld [vmem:[%s336] sm:$0x3]
        %v2157 = vstv %s2155
        %v2158 = vmul.f32 %v2157, %v2156
        %v2159 = vadd.f32 %v2154, %v2158
        %s2160 = sld [smem:[#allocation4 + $0x1]]
        %v2161 = vstv %s2160
        %v2162 = vadd.f32 %v2159, %v2161
        %v2163 = vld [vmem:[%s3] sm:$0xff]
        %v2164 = vld [vmem:[%s3 + $0x8] sm:$0xff]
        %v2165 = vld [vmem:[%s3 + $0x10] sm:$0xff]
        %v2166 = vld [vmem:[%s3 + $0x18] sm:$0xff]
        %v2167 = vld [vmem:[%s3 + $0x20] sm:$0xff]
        %v2168 = vld [vmem:[%s3 + $0x28] sm:$0xff]
        %v2169 = vld [vmem:[%s3 + $0x30] sm:$0xff]
        %v2170 = vld [vmem:[%s3 + $0x38] sm:$0xff]
        %v2171 = vld [vmem:[%s3 + $0x40] sm:$0xff]
        %v2172 = vld [vmem:[%s3 + $0x48] sm:$0xff]
        %v2173 = vld [vmem:[%s3 + $0x50] sm:$0xff]
        %v2174 = vld [vmem:[%s3 + $0x58] sm:$0xff]
        %v2175 = vld [vmem:[%s3 + $0x60] sm:$0xff]
        %v2176 = vld [vmem:[%s3 + $0x68] sm:$0xff]
        %v2177 = vld [vmem:[%s3 + $0x70] sm:$0xff]
        %v2178 = vld [vmem:[%s3 + $0x78] sm:$0xff]
        %v2179 = vld [vmem:[%s3 + $0x80] sm:$0xff]
        %v2180 = vld [vmem:[%s3 + $0x88] sm:$0xff]
        %v2181 = vld [vmem:[%s3 + $0x90] sm:$0xff]
        %v2182 = vld [vmem:[%s3 + $0x98] sm:$0xff]
        %v2183 = vld [vmem:[%s3 + $0xa0] sm:$0xff]
        %v2184 = vld [vmem:[%s3 + $0xa8] sm:$0xff]
        %v2185 = vld [vmem:[%s3 + $0xb0] sm:$0xff]
        %v2186 = vld [vmem:[%s3 + $0xb8] sm:$0xff]
        %v2187 = vld [vmem:[%s3 + $0xc0] sm:$0xff]
        %v2188 = vld [vmem:[%s3 + $0xc8] sm:$0xff]
        %v2189 = vld [vmem:[%s3 + $0xd0] sm:$0xff]
        %v2190 = vld [vmem:[%s3 + $0xd8] sm:$0xff]
        %v2191 = vld [vmem:[%s3 + $0xe0] sm:$0xff]
        %v2192 = vld [vmem:[%s3 + $0xe8] sm:$0xff]
        %v2193 = vld [vmem:[%s3 + $0xf0] sm:$0xff]
        %v2194 = vld [vmem:[%s3 + $0xf8] sm:$0xff]
        %v2195 = vld [vmem:[%s3 + $0x100] sm:$0xff]
        %v2196 = vld [vmem:[%s3 + $0x108] sm:$0xff]
        %v2197 = vld [vmem:[%s3 + $0x110] sm:$0xff]
        %v2198 = vld [vmem:[%s3 + $0x118] sm:$0xff]
        %v2199 = vld [vmem:[%s3 + $0x120] sm:$0xff]
        %v2200 = vld [vmem:[%s3 + $0x128] sm:$0xff]
        %v2201 = vld [vmem:[%s3 + $0x130] sm:$0xff]
        %v2202 = vld [vmem:[%s3 + $0x138] sm:$0xff]
        %v2203 = vld [vmem:[%s3 + $0x140] sm:$0xff]
        %v2204 = vld [vmem:[%s3 + $0x148] sm:$0xff]
        %v2205 = vld [vmem:[%s3 + $0x150] sm:$0xff]
        %v2206 = vld [vmem:[%s3 + $0x158] sm:$0xff]
        %v2207 = vld [vmem:[%s3 + $0x160] sm:$0xff]
        %v2208 = vld [vmem:[%s3 + $0x168] sm:$0xff]
        %v2209 = vld [vmem:[%s3 + $0x170] sm:$0xff]
        %v2210 = vld [vmem:[%s3 + $0x178] sm:$0xff]
        %v2211 = vld [vmem:[%s3 + $0x180] sm:$0xff]
        %v2212 = vld [vmem:[%s3 + $0x188] sm:$0xff]
        %v2213 = vld [vmem:[%s3 + $0x190] sm:$0xff]
        %v2214 = vld [vmem:[%s3 + $0x198] sm:$0xff]
        %v2215 = vld [vmem:[%s3 + $0x1a0] sm:$0xff]
        %v2216 = vld [vmem:[%s3 + $0x1a8] sm:$0xff]
        %v2217 = vld [vmem:[%s3 + $0x1b0] sm:$0xff]
        %v2218 = vld [vmem:[%s3 + $0x1b8] sm:$0xff]
        %v2219 = vld [vmem:[%s3 + $0x1c0] sm:$0xff]
        %v2220 = vld [vmem:[%s3 + $0x1c8] sm:$0xff]
        %v2221 = vld [vmem:[%s3 + $0x1d0] sm:$0xff]
        %v2222 = vld [vmem:[%s3 + $0x1d8] sm:$0xff]
        %v2223 = vld [vmem:[%s3 + $0x1e0] sm:$0xff]
        %v2224 = vld [vmem:[%s3 + $0x1e8] sm:$0xff]
        %v2225 = vld [vmem:[%s3 + $0x1f0] sm:$0xff]
        %v2226 = vld [vmem:[%s3 + $0x1f8] sm:$0xff]
        %v2227 = vand.u32 %v2164, 4294901760
        %2228 = vmatprep.subr.mxu0 %v2227
        %v2229 = vand.u32 %v2163, 4294901760
        %2230 = vmatpush1.msra.mxu0 %v2229
        %v2231 = vand.u32 %v2168, 4294901760
        %2232 = vmatprep.subr.mxu0 %v2231
        %v2233 = vand.u32 %v2167, 4294901760
        %2234 = vmatpush1.msra.mxu0 %v2233
        %v2235 = vand.u32 %v2172, 4294901760
        %2236 = vmatprep.subr.mxu0 %v2235
        %v2237 = vand.u32 %v2171, 4294901760
        %2238 = vmatpush1.msra.mxu0 %v2237
        %v2239 = vand.u32 %v2176, 4294901760
        %2240 = vmatprep.subr.mxu0 %v2239
        %v2241 = vand.u32 %v2175, 4294901760
        %2242 = vmatpush1.msra.mxu0 %v2241
        %v2243 = vand.u32 %v2180, 4294901760
        %2244 = vmatprep.subr.mxu0 %v2243
        %v2245 = vand.u32 %v2179, 4294901760
        %2246 = vmatpush1.msra.mxu0 %v2245
        %v2247 = vand.u32 %v2184, 4294901760
        %2248 = vmatprep.subr.mxu0 %v2247
        %v2249 = vand.u32 %v2183, 4294901760
        %2250 = vmatpush1.msra.mxu0 %v2249
        %v2251 = vand.u32 %v2188, 4294901760
        %2252 = vmatprep.subr.mxu0 %v2251
        %v2253 = vand.u32 %v2187, 4294901760
        %2254 = vmatpush1.msra.mxu0 %v2253
        %v2255 = vand.u32 %v2192, 4294901760
        %2256 = vmatprep.subr.mxu0 %v2255
        %v2257 = vand.u32 %v2191, 4294901760
        %2258 = vmatpush1.msra.mxu0 %v2257
        %v2259 = vand.u32 %v2196, 4294901760
        %2260 = vmatprep.subr.mxu0 %v2259
        %v2261 = vand.u32 %v2195, 4294901760
        %2262 = vmatpush1.msra.mxu0 %v2261
        %v2263 = vand.u32 %v2200, 4294901760
        %2264 = vmatprep.subr.mxu0 %v2263
        %v2265 = vand.u32 %v2199, 4294901760
        %2266 = vmatpush1.msra.mxu0 %v2265
        %v2267 = vand.u32 %v2204, 4294901760
        %2268 = vmatprep.subr.mxu0 %v2267
        %v2269 = vand.u32 %v2203, 4294901760
        %2270 = vmatpush1.msra.mxu0 %v2269
        %v2271 = vand.u32 %v2208, 4294901760
        %2272 = vmatprep.subr.mxu0 %v2271
        %v2273 = vand.u32 %v2207, 4294901760
        %2274 = vmatpush1.msra.mxu0 %v2273
        %v2275 = vand.u32 %v2212, 4294901760
        %2276 = vmatprep.subr.mxu0 %v2275
        %v2277 = vand.u32 %v2211, 4294901760
        %2278 = vmatpush1.msra.mxu0 %v2277
        %v2279 = vand.u32 %v2216, 4294901760
        %2280 = vmatprep.subr.mxu0 %v2279
        %v2281 = vand.u32 %v2215, 4294901760
        %2282 = vmatpush1.msra.mxu0 %v2281
        %v2283 = vand.u32 %v2220, 4294901760
        %2284 = vmatprep.subr.mxu0 %v2283
        %v2285 = vand.u32 %v2219, 4294901760
        %2286 = vmatpush1.msra.mxu0 %v2285
        %v2287 = vand.u32 %v2224, 4294901760
        %2288 = vmatprep.subr.mxu0 %v2287
        %v2289 = vand.u32 %v2223, 4294901760
        %2290 = vmatpush1.msra.mxu0 %v2289
        %2291 = vmatprep.subr.mxu0 0.0
        %2292 = vmatpush1.msra.mxu0 0.0
        %2293 = vmatprep.subr.mxu0 0.0
        %2294 = vmatpush1.msra.mxu0 0.0
        %2295 = vmatprep.subr.mxu0 0.0
        %2296 = vmatpush1.msra.mxu0 0.0
        %2297 = vmatprep.subr.mxu0 0.0
        %2298 = vmatpush1.msra.mxu0 0.0
        %2299 = vmatprep.subr.mxu0 0.0
        %2300 = vmatpush1.msra.mxu0 0.0
        %2301 = vmatprep.subr.mxu0 0.0
        %2302 = vmatpush1.msra.mxu0 0.0
        %2303 = vmatprep.subr.mxu0 0.0
        %2304 = vmatpush1.msra.mxu0 0.0
        %2305 = vmatprep.subr.mxu0 0.0
        %2306 = vmatpush1.msra.mxu0 0.0
        %2307 = vmatprep.subr.mxu0 0.0
        %2308 = vmatpush1.msra.mxu0 0.0
        %2309 = vmatprep.subr.mxu0 0.0
        %2310 = vmatpush1.msra.mxu0 0.0
        %2311 = vmatprep.subr.mxu0 0.0
        %2312 = vmatpush1.msra.mxu0 0.0
        %2313 = vmatprep.subr.mxu0 0.0
        %2314 = vmatpush1.msra.mxu0 0.0
        %2315 = vmatprep.subr.mxu0 0.0
        %2316 = vmatpush1.msra.mxu0 0.0
        %2317 = vmatprep.subr.mxu0 0.0
        %2318 = vmatpush1.msra.mxu0 0.0
        %2319 = vmatprep.subr.mxu0 0.0
        %2320 = vmatpush1.msra.mxu0 0.0
        %2321 = vmatprep.subr.mxu0 0.0
        %2322 = vmatpush1.msra.mxu0 0.0
        %2323 = vmatprep.mubr.f32.mxu0 0.0
        %v2324 = vand.u32 %v2162, 4294901760
        %v2325 = vsub.f32 %v2162, %v2324
        %v2326 = vand.u32 %v2325, 4294901760
        %v2327 = vsub.f32 %v2325, %v2326
        %v2328 = vand.u32 %v2327, 4294901760
        %2329 = vmatmul.mubr.f32.gmra.mrb[0].mxu0 %v2328
        %v2330 = vpop.f32.mrb[0].mxu0
        %v2331 = vadd.f32 0.0, %v2330
        %v2332 = vpop.f32.mrb[0].mxu0
        %v2333 = vadd.f32 0.0, %v2332
        %2334 = vdwg.mxu0
        %v2335 = vand.u32 %v2164, 4294901760
        %v2336 = vsub.f32 %v2164, %v2335
        %v2337 = vand.u32 %v2336, 4294901760
        %v2338 = vsub.f32 %v2336, %v2337
        %v2339 = vand.u32 %v2338, 4294901760
        %2340 = vmatprep.subr.mxu0 %v2339
        %v2341 = vand.u32 %v2163, 4294901760
        %v2342 = vsub.f32 %v2163, %v2341
        %v2343 = vand.u32 %v2342, 4294901760
        %v2344 = vsub.f32 %v2342, %v2343
        %v2345 = vand.u32 %v2344, 4294901760
        %2346 = vmatpush1.msra.mxu0 %v2345
        %v2347 = vand.u32 %v2168, 4294901760
        %v2348 = vsub.f32 %v2168, %v2347
        %v2349 = vand.u32 %v2348, 4294901760
        %v2350 = vsub.f32 %v2348, %v2349
        %v2351 = vand.u32 %v2350, 4294901760
        %2352 = vmatprep.subr.mxu0 %v2351
        %v2353 = vand.u32 %v2167, 4294901760
        %v2354 = vsub.f32 %v2167, %v2353
        %v2355 = vand.u32 %v2354, 4294901760
        %v2356 = vsub.f32 %v2354, %v2355
        %v2357 = vand.u32 %v2356, 4294901760
        %2358 = vmatpush1.msra.mxu0 %v2357
        %v2359 = vand.u32 %v2172, 4294901760
        %v2360 = vsub.f32 %v2172, %v2359
        %v2361 = vand.u32 %v2360, 4294901760
        %v2362 = vsub.f32 %v2360, %v2361
        %v2363 = vand.u32 %v2362, 4294901760
        %2364 = vmatprep.subr.mxu0 %v2363
        %v2365 = vand.u32 %v2171, 4294901760
        %v2366 = vsub.f32 %v2171, %v2365
        %v2367 = vand.u32 %v2366, 4294901760
        %v2368 = vsub.f32 %v2366, %v2367
        %v2369 = vand.u32 %v2368, 4294901760
        %2370 = vmatpush1.msra.mxu0 %v2369
        %v2371 = vand.u32 %v2176, 4294901760
        %v2372 = vsub.f32 %v2176, %v2371
        %v2373 = vand.u32 %v2372, 4294901760
        %v2374 = vsub.f32 %v2372, %v2373
        %v2375 = vand.u32 %v2374, 4294901760
        %2376 = vmatprep.subr.mxu0 %v2375
        %v2377 = vand.u32 %v2175, 4294901760
        %v2378 = vsub.f32 %v2175, %v2377
        %v2379 = vand.u32 %v2378, 4294901760
        %v2380 = vsub.f32 %v2378, %v2379
        %v2381 = vand.u32 %v2380, 4294901760
        %2382 = vmatpush1.msra.mxu0 %v2381
        %v2383 = vand.u32 %v2180, 4294901760
        %v2384 = vsub.f32 %v2180, %v2383
        %v2385 = vand.u32 %v2384, 4294901760
        %v2386 = vsub.f32 %v2384, %v2385
        %v2387 = vand.u32 %v2386, 4294901760
        %2388 = vmatprep.subr.mxu0 %v2387
        %v2389 = vand.u32 %v2179, 4294901760
        %v2390 = vsub.f32 %v2179, %v2389
        %v2391 = vand.u32 %v2390, 4294901760
        %v2392 = vsub.f32 %v2390, %v2391
        %v2393 = vand.u32 %v2392, 4294901760
        %2394 = vmatpush1.msra.mxu0 %v2393
        %v2395 = vand.u32 %v2184, 4294901760
        %v2396 = vsub.f32 %v2184, %v2395
        %v2397 = vand.u32 %v2396, 4294901760
        %v2398 = vsub.f32 %v2396, %v2397
        %v2399 = vand.u32 %v2398, 4294901760
        %2400 = vmatprep.subr.mxu0 %v2399
        %v2401 = vand.u32 %v2183, 4294901760
        %v2402 = vsub.f32 %v2183, %v2401
        %v2403 = vand.u32 %v2402, 4294901760
        %v2404 = vsub.f32 %v2402, %v2403
        %v2405 = vand.u32 %v2404, 4294901760
        %2406 = vmatpush1.msra.mxu0 %v2405
        %v2407 = vand.u32 %v2188, 4294901760
        %v2408 = vsub.f32 %v2188, %v2407
        %v2409 = vand.u32 %v2408, 4294901760
        %v2410 = vsub.f32 %v2408, %v2409
        %v2411 = vand.u32 %v2410, 4294901760
        %2412 = vmatprep.subr.mxu0 %v2411
        %v2413 = vand.u32 %v2187, 4294901760
        %v2414 = vsub.f32 %v2187, %v2413
        %v2415 = vand.u32 %v2414, 4294901760
        %v2416 = vsub.f32 %v2414, %v2415
        %v2417 = vand.u32 %v2416, 4294901760
        %2418 = vmatpush1.msra.mxu0 %v2417
        %v2419 = vand.u32 %v2192, 4294901760
        %v2420 = vsub.f32 %v2192, %v2419
        %v2421 = vand.u32 %v2420, 4294901760
        %v2422 = vsub.f32 %v2420, %v2421
        %v2423 = vand.u32 %v2422, 4294901760
        %2424 = vmatprep.subr.mxu0 %v2423
        %v2425 = vand.u32 %v2191, 4294901760
        %v2426 = vsub.f32 %v2191, %v2425
        %v2427 = vand.u32 %v2426, 4294901760
        %v2428 = vsub.f32 %v2426, %v2427
        %v2429 = vand.u32 %v2428, 4294901760
        %2430 = vmatpush1.msra.mxu0 %v2429
        %v2431 = vand.u32 %v2196, 4294901760
        %v2432 = vsub.f32 %v2196, %v2431
        %v2433 = vand.u32 %v2432, 4294901760
        %v2434 = vsub.f32 %v2432, %v2433
        %v2435 = vand.u32 %v2434, 4294901760
        %2436 = vmatprep.subr.mxu0 %v2435
        %v2437 = vand.u32 %v2195, 4294901760
        %v2438 = vsub.f32 %v2195, %v2437
        %v2439 = vand.u32 %v2438, 4294901760
        %v2440 = vsub.f32 %v2438, %v2439
        %v2441 = vand.u32 %v2440, 4294901760
        %2442 = vmatpush1.msra.mxu0 %v2441
        %v2443 = vand.u32 %v2200, 4294901760
        %v2444 = vsub.f32 %v2200, %v2443
        %v2445 = vand.u32 %v2444, 4294901760
        %v2446 = vsub.f32 %v2444, %v2445
        %v2447 = vand.u32 %v2446, 4294901760
        %2448 = vmatprep.subr.mxu0 %v2447
        %v2449 = vand.u32 %v2199, 4294901760
        %v2450 = vsub.f32 %v2199, %v2449
        %v2451 = vand.u32 %v2450, 4294901760
        %v2452 = vsub.f32 %v2450, %v2451
        %v2453 = vand.u32 %v2452, 4294901760
        %2454 = vmatpush1.msra.mxu0 %v2453
        %v2455 = vand.u32 %v2204, 4294901760
        %v2456 = vsub.f32 %v2204, %v2455
        %v2457 = vand.u32 %v2456, 4294901760
        %v2458 = vsub.f32 %v2456, %v2457
        %v2459 = vand.u32 %v2458, 4294901760
        %2460 = vmatprep.subr.mxu0 %v2459
        %v2461 = vand.u32 %v2203, 4294901760
        %v2462 = vsub.f32 %v2203, %v2461
        %v2463 = vand.u32 %v2462, 4294901760
        %v2464 = vsub.f32 %v2462, %v2463
        %v2465 = vand.u32 %v2464, 4294901760
        %2466 = vmatpush1.msra.mxu0 %v2465
        %v2467 = vand.u32 %v2208, 4294901760
        %v2468 = vsub.f32 %v2208, %v2467
        %v2469 = vand.u32 %v2468, 4294901760
        %v2470 = vsub.f32 %v2468, %v2469
        %v2471 = vand.u32 %v2470, 4294901760
        %2472 = vmatprep.subr.mxu0 %v2471
        %v2473 = vand.u32 %v2207, 4294901760
        %v2474 = vsub.f32 %v2207, %v2473
        %v2475 = vand.u32 %v2474, 4294901760
        %v2476 = vsub.f32 %v2474, %v2475
        %v2477 = vand.u32 %v2476, 4294901760
        %2478 = vmatpush1.msra.mxu0 %v2477
        %v2479 = vand.u32 %v2212, 4294901760
        %v2480 = vsub.f32 %v2212, %v2479
        %v2481 = vand.u32 %v2480, 4294901760
        %v2482 = vsub.f32 %v2480, %v2481
        %v2483 = vand.u32 %v2482, 4294901760
        %2484 = vmatprep.subr.mxu0 %v2483
        %v2485 = vand.u32 %v2211, 4294901760
        %v2486 = vsub.f32 %v2211, %v2485
        %v2487 = vand.u32 %v2486, 4294901760
        %v2488 = vsub.f32 %v2486, %v2487
        %v2489 = vand.u32 %v2488, 4294901760
        %2490 = vmatpush1.msra.mxu0 %v2489
        %v2491 = vand.u32 %v2216, 4294901760
        %v2492 = vsub.f32 %v2216, %v2491
        %v2493 = vand.u32 %v2492, 4294901760
        %v2494 = vsub.f32 %v2492, %v2493
        %v2495 = vand.u32 %v2494, 4294901760
        %2496 = vmatprep.subr.mxu0 %v2495
        %v2497 = vand.u32 %v2215, 4294901760
        %v2498 = vsub.f32 %v2215, %v2497
        %v2499 = vand.u32 %v2498, 4294901760
        %v2500 = vsub.f32 %v2498, %v2499
        %v2501 = vand.u32 %v2500, 4294901760
        %2502 = vmatpush1.msra.mxu0 %v2501
        %v2503 = vand.u32 %v2220, 4294901760
        %v2504 = vsub.f32 %v2220, %v2503
        %v2505 = vand.u32 %v2504, 4294901760
        %v2506 = vsub.f32 %v2504, %v2505
        %v2507 = vand.u32 %v2506, 4294901760
        %2508 = vmatprep.subr.mxu0 %v2507
        %v2509 = vand.u32 %v2219, 4294901760
        %v2510 = vsub.f32 %v2219, %v2509
        %v2511 = vand.u32 %v2510, 4294901760
        %v2512 = vsub.f32 %v2510, %v2511
        %v2513 = vand.u32 %v2512, 4294901760
        %2514 = vmatpush1.msra.mxu0 %v2513
        %v2515 = vand.u32 %v2224, 4294901760
        %v2516 = vsub.f32 %v2224, %v2515
        %v2517 = vand.u32 %v2516, 4294901760
        %v2518 = vsub.f32 %v2516, %v2517
        %v2519 = vand.u32 %v2518, 4294901760
        %2520 = vmatprep.subr.mxu0 %v2519
        %v2521 = vand.u32 %v2223, 4294901760
        %v2522 = vsub.f32 %v2223, %v2521
        %v2523 = vand.u32 %v2522, 4294901760
        %v2524 = vsub.f32 %v2522, %v2523
        %v2525 = vand.u32 %v2524, 4294901760
        %2526 = vmatpush1.msra.mxu0 %v2525
        %2527 = vmatprep.subr.mxu0 0.0
        %2528 = vmatpush1.msra.mxu0 0.0
        %2529 = vmatprep.subr.mxu0 0.0
        %2530 = vmatpush1.msra.mxu0 0.0
        %2531 = vmatprep.subr.mxu0 0.0
        %2532 = vmatpush1.msra.mxu0 0.0
        %2533 = vmatprep.subr.mxu0 0.0
        %2534 = vmatpush1.msra.mxu0 0.0
        %2535 = vmatprep.subr.mxu0 0.0
        %2536 = vmatpush1.msra.mxu0 0.0
        %2537 = vmatprep.subr.mxu0 0.0
        %2538 = vmatpush1.msra.mxu0 0.0
        %2539 = vmatprep.subr.mxu0 0.0
        %2540 = vmatpush1.msra.mxu0 0.0
        %2541 = vmatprep.subr.mxu0 0.0
        %2542 = vmatpush1.msra.mxu0 0.0
        %2543 = vmatprep.subr.mxu0 0.0
        %2544 = vmatpush1.msra.mxu0 0.0
        %2545 = vmatprep.subr.mxu0 0.0
        %2546 = vmatpush1.msra.mxu0 0.0
        %2547 = vmatprep.subr.mxu0 0.0
        %2548 = vmatpush1.msra.mxu0 0.0
        %2549 = vmatprep.subr.mxu0 0.0
        %2550 = vmatpush1.msra.mxu0 0.0
        %2551 = vmatprep.subr.mxu0 0.0
        %2552 = vmatpush1.msra.mxu0 0.0
        %2553 = vmatprep.subr.mxu0 0.0
        %2554 = vmatpush1.msra.mxu0 0.0
        %2555 = vmatprep.subr.mxu0 0.0
        %2556 = vmatpush1.msra.mxu0 0.0
        %2557 = vmatprep.subr.mxu0 0.0
        %2558 = vmatpush1.msra.mxu0 0.0
        %2559 = vmatprep.mubr.f32.mxu0 0.0
        %v2560 = vand.u32 %v2162, 4294901760
        %2561 = vmatmul.mubr.f32.gmra.mrb[0].mxu0 %v2560
        %v2562 = vpop.f32.mrb[0].mxu0
        %v2563 = vadd.f32 %v2331, %v2562
        %v2564 = vpop.f32.mrb[0].mxu0
        %v2565 = vadd.f32 %v2333, %v2564
        %2566 = vdwg.mxu0
        %v2567 = vand.u32 %v2164, 4294901760
        %v2568 = vsub.f32 %v2164, %v2567
        %2569 = vmatprep.subr.mxu0 %v2568
        %v2570 = vand.u32 %v2163, 4294901760
        %v2571 = vsub.f32 %v2163, %v2570
        %2572 = vmatpush1.msra.mxu0 %v2571
        %v2573 = vand.u32 %v2168, 4294901760
        %v2574 = vsub.f32 %v2168, %v2573
        %2575 = vmatprep.subr.mxu0 %v2574
        %v2576 = vand.u32 %v2167, 4294901760
        %v2577 = vsub.f32 %v2167, %v2576
        %2578 = vmatpush1.msra.mxu0 %v2577
        %v2579 = vand.u32 %v2172, 4294901760
        %v2580 = vsub.f32 %v2172, %v2579
        %2581 = vmatprep.subr.mxu0 %v2580
        %v2582 = vand.u32 %v2171, 4294901760
        %v2583 = vsub.f32 %v2171, %v2582
        %2584 = vmatpush1.msra.mxu0 %v2583
        %v2585 = vand.u32 %v2176, 4294901760
        %v2586 = vsub.f32 %v2176, %v2585
        %2587 = vmatprep.subr.mxu0 %v2586
        %v2588 = vand.u32 %v2175, 4294901760
        %v2589 = vsub.f32 %v2175, %v2588
        %2590 = vmatpush1.msra.mxu0 %v2589
        %v2591 = vand.u32 %v2180, 4294901760
        %v2592 = vsub.f32 %v2180, %v2591
        %2593 = vmatprep.subr.mxu0 %v2592
        %v2594 = vand.u32 %v2179, 4294901760
        %v2595 = vsub.f32 %v2179, %v2594
        %2596 = vmatpush1.msra.mxu0 %v2595
        %v2597 = vand.u32 %v2184, 4294901760
        %v2598 = vsub.f32 %v2184, %v2597
        %2599 = vmatprep.subr.mxu0 %v2598
        %v2600 = vand.u32 %v2183, 4294901760
        %v2601 = vsub.f32 %v2183, %v2600
        %2602 = vmatpush1.msra.mxu0 %v2601
        %v2603 = vand.u32 %v2188, 4294901760
        %v2604 = vsub.f32 %v2188, %v2603
        %2605 = vmatprep.subr.mxu0 %v2604
        %v2606 = vand.u32 %v2187, 4294901760
        %v2607 = vsub.f32 %v2187, %v2606
        %2608 = vmatpush1.msra.mxu0 %v2607
        %v2609 = vand.u32 %v2192, 4294901760
        %v2610 = vsub.f32 %v2192, %v2609
        %2611 = vmatprep.subr.mxu0 %v2610
        %v2612 = vand.u32 %v2191, 4294901760
        %v2613 = vsub.f32 %v2191, %v2612
        %2614 = vmatpush1.msra.mxu0 %v2613
        %v2615 = vand.u32 %v2196, 4294901760
        %v2616 = vsub.f32 %v2196, %v2615
        %2617 = vmatprep.subr.mxu0 %v2616
        %v2618 = vand.u32 %v2195, 4294901760
        %v2619 = vsub.f32 %v2195, %v2618
        %2620 = vmatpush1.msra.mxu0 %v2619
        %v2621 = vand.u32 %v2200, 4294901760
        %v2622 = vsub.f32 %v2200, %v2621
        %2623 = vmatprep.subr.mxu0 %v2622
        %v2624 = vand.u32 %v2199, 4294901760
        %v2625 = vsub.f32 %v2199, %v2624
        %2626 = vmatpush1.msra.mxu0 %v2625
        %v2627 = vand.u32 %v2204, 4294901760
        %v2628 = vsub.f32 %v2204, %v2627
        %2629 = vmatprep.subr.mxu0 %v2628
        %v2630 = vand.u32 %v2203, 4294901760
        %v2631 = vsub.f32 %v2203, %v2630
        %2632 = vmatpush1.msra.mxu0 %v2631
        %v2633 = vand.u32 %v2208, 4294901760
        %v2634 = vsub.f32 %v2208, %v2633
        %2635 = vmatprep.subr.mxu0 %v2634
        %v2636 = vand.u32 %v2207, 4294901760
        %v2637 = vsub.f32 %v2207, %v2636
        %2638 = vmatpush1.msra.mxu0 %v2637
        %v2639 = vand.u32 %v2212, 4294901760
        %v2640 = vsub.f32 %v2212, %v2639
        %2641 = vmatprep.subr.mxu0 %v2640
        %v2642 = vand.u32 %v2211, 4294901760
        %v2643 = vsub.f32 %v2211, %v2642
        %2644 = vmatpush1.msra.mxu0 %v2643
        %v2645 = vand.u32 %v2216, 4294901760
        %v2646 = vsub.f32 %v2216, %v2645
        %2647 = vmatprep.subr.mxu0 %v2646
        %v2648 = vand.u32 %v2215, 4294901760
        %v2649 = vsub.f32 %v2215, %v2648
        %2650 = vmatpush1.msra.mxu0 %v2649
        %v2651 = vand.u32 %v2220, 4294901760
        %v2652 = vsub.f32 %v2220, %v2651
        %2653 = vmatprep.subr.mxu0 %v2652
        %v2654 = vand.u32 %v2219, 4294901760
        %v2655 = vsub.f32 %v2219, %v2654
        %2656 = vmatpush1.msra.mxu0 %v2655
        %v2657 = vand.u32 %v2224, 4294901760
        %v2658 = vsub.f32 %v2224, %v2657
        %2659 = vmatprep.subr.mxu0 %v2658
        %v2660 = vand.u32 %v2223, 4294901760
        %v2661 = vsub.f32 %v2223, %v2660
        %2662 = vmatpush1.msra.mxu0 %v2661
        %2663 = vmatprep.subr.mxu0 0.0
        %2664 = vmatpush1.msra.mxu0 0.0
        %2665 = vmatprep.subr.mxu0 0.0
        %2666 = vmatpush1.msra.mxu0 0.0
        %2667 = vmatprep.subr.mxu0 0.0
        %2668 = vmatpush1.msra.mxu0 0.0
        %2669 = vmatprep.subr.mxu0 0.0
        %2670 = vmatpush1.msra.mxu0 0.0
        %2671 = vmatprep.subr.mxu0 0.0
        %2672 = vmatpush1.msra.mxu0 0.0
        %2673 = vmatprep.subr.mxu0 0.0
        %2674 = vmatpush1.msra.mxu0 0.0
        %2675 = vmatprep.subr.mxu0 0.0
        %2676 = vmatpush1.msra.mxu0 0.0
        %2677 = vmatprep.subr.mxu0 0.0
        %2678 = vmatpush1.msra.mxu0 0.0
        %2679 = vmatprep.subr.mxu0 0.0
        %2680 = vmatpush1.msra.mxu0 0.0
        %2681 = vmatprep.subr.mxu0 0.0
        %2682 = vmatpush1.msra.mxu0 0.0
        %2683 = vmatprep.subr.mxu0 0.0
        %2684 = vmatpush1.msra.mxu0 0.0
        %2685 = vmatprep.subr.mxu0 0.0
        %2686 = vmatpush1.msra.mxu0 0.0
        %2687 = vmatprep.subr.mxu0 0.0
        %2688 = vmatpush1.msra.mxu0 0.0
        %2689 = vmatprep.subr.mxu0 0.0
        %2690 = vmatpush1.msra.mxu0 0.0
        %2691 = vmatprep.subr.mxu0 0.0
        %2692 = vmatpush1.msra.mxu0 0.0
        %2693 = vmatprep.subr.mxu0 0.0
        %2694 = vmatpush1.msra.mxu0 0.0
        %2695 = vmatprep.mubr.f32.mxu0 0.0
        %v2696 = vand.u32 %v2162, 4294901760
        %v2697 = vsub.f32 %v2162, %v2696
        %2698 = vmatmul.mubr.f32.gmra.mrb[0].mxu0 %v2697
        %v2699 = vpop.f32.mrb[0].mxu0
        %v2700 = vadd.f32 %v2563, %v2699
        %v2701 = vpop.f32.mrb[0].mxu0
        %v2702 = vadd.f32 %v2565, %v2701
        %2703 = vdwg.mxu0
        %v2704 = vand.u32 %v2164, 4294901760
        %2705 = vmatprep.subr.mxu0 %v2704
        %v2706 = vand.u32 %v2163, 4294901760
        %2707 = vmatpush1.msra.mxu0 %v2706
        %v2708 = vand.u32 %v2168, 4294901760
        %2709 = vmatprep.subr.mxu0 %v2708
        %v2710 = vand.u32 %v2167, 4294901760
        %2711 = vmatpush1.msra.mxu0 %v2710
        %v2712 = vand.u32 %v2172, 4294901760
        %2713 = vmatprep.subr.mxu0 %v2712
        %v2714 = vand.u32 %v2171, 4294901760
        %2715 = vmatpush1.msra.mxu0 %v2714
        %v2716 = vand.u32 %v2176, 4294901760
        %2717 = vmatprep.subr.mxu0 %v2716
        %v2718 = vand.u32 %v2175, 4294901760
        %2719 = vmatpush1.msra.mxu0 %v2718
        %v2720 = vand.u32 %v2180, 4294901760
        %2721 = vmatprep.subr.mxu0 %v2720
        %v2722 = vand.u32 %v2179, 4294901760
        %2723 = vmatpush1.msra.mxu0 %v2722
        %v2724 = vand.u32 %v2184, 4294901760
        %2725 = vmatprep.subr.mxu0 %v2724
        %v2726 = vand.u32 %v2183, 4294901760
        %2727 = vmatpush1.msra.mxu0 %v2726
        %v2728 = vand.u32 %v2188, 4294901760
        %2729 = vmatprep.subr.mxu0 %v2728
        %v2730 = vand.u32 %v2187, 4294901760
        %2731 = vmatpush1.msra.mxu0 %v2730
        %v2732 = vand.u32 %v2192, 4294901760
        %2733 = vmatprep.subr.mxu0 %v2732
        %v2734 = vand.u32 %v2191, 4294901760
        %2735 = vmatpush1.msra.mxu0 %v2734
        %v2736 = vand.u32 %v2196, 4294901760
        %2737 = vmatprep.subr.mxu0 %v2736
        %v2738 = vand.u32 %v2195, 4294901760
        %2739 = vmatpush1.msra.mxu0 %v2738
        %v2740 = vand.u32 %v2200, 4294901760
        %2741 = vmatprep.subr.mxu0 %v2740
        %v2742 = vand.u32 %v2199, 4294901760
        %2743 = vmatpush1.msra.mxu0 %v2742
        %v2744 = vand.u32 %v2204, 4294901760
        %2745 = vmatprep.subr.mxu0 %v2744
        %v2746 = vand.u32 %v2203, 4294901760
        %2747 = vmatpush1.msra.mxu0 %v2746
        %v2748 = vand.u32 %v2208, 4294901760
        %2749 = vmatprep.subr.mxu0 %v2748
        %v2750 = vand.u32 %v2207, 4294901760
        %2751 = vmatpush1.msra.mxu0 %v2750
        %v2752 = vand.u32 %v2212, 4294901760
        %2753 = vmatprep.subr.mxu0 %v2752
        %v2754 = vand.u32 %v2211, 4294901760
        %2755 = vmatpush1.msra.mxu0 %v2754
        %v2756 = vand.u32 %v2216, 4294901760
        %2757 = vmatprep.subr.mxu0 %v2756
        %v2758 = vand.u32 %v2215, 4294901760
        %2759 = vmatpush1.msra.mxu0 %v2758
        %v2760 = vand.u32 %v2220, 4294901760
        %2761 = vmatprep.subr.mxu0 %v2760
        %v2762 = vand.u32 %v2219, 4294901760
        %2763 = vmatpush1.msra.mxu0 %v2762
        %v2764 = vand.u32 %v2224, 4294901760
        %2765 = vmatprep.subr.mxu0 %v2764
        %v2766 = vand.u32 %v2223, 4294901760
        %2767 = vmatpush1.msra.mxu0 %v2766
        %2768 = vmatprep.subr.mxu0 0.0
        %2769 = vmatpush1.msra.mxu0 0.0
        %2770 = vmatprep.subr.mxu0 0.0
        %2771 = vmatpush1.msra.mxu0 0.0
        %2772 = vmatprep.subr.mxu0 0.0
        %2773 = vmatpush1.msra.mxu0 0.0
        %2774 = vmatprep.subr.mxu0 0.0
        %2775 = vmatpush1.msra.mxu0 0.0
        %2776 = vmatprep.subr.mxu0 0.0
        %2777 = vmatpush1.msra.mxu0 0.0
        %2778 = vmatprep.subr.mxu0 0.0
        %2779 = vmatpush1.msra.mxu0 0.0
        %2780 = vmatprep.subr.mxu0 0.0
        %2781 = vmatpush1.msra.mxu0 0.0
        %2782 = vmatprep.subr.mxu0 0.0
        %2783 = vmatpush1.msra.mxu0 0.0
        %2784 = vmatprep.subr.mxu0 0.0
        %2785 = vmatpush1.msra.mxu0 0.0
        %2786 = vmatprep.subr.mxu0 0.0
        %2787 = vmatpush1.msra.mxu0 0.0
        %2788 = vmatprep.subr.mxu0 0.0
        %2789 = vmatpush1.msra.mxu0 0.0
        %2790 = vmatprep.subr.mxu0 0.0
        %2791 = vmatpush1.msra.mxu0 0.0
        %2792 = vmatprep.subr.mxu0 0.0
        %2793 = vmatpush1.msra.mxu0 0.0
        %2794 = vmatprep.subr.mxu0 0.0
        %2795 = vmatpush1.msra.mxu0 0.0
        %2796 = vmatprep.subr.mxu0 0.0
        %2797 = vmatpush1.msra.mxu0 0.0
        %2798 = vmatprep.subr.mxu0 0.0
        %2799 = vmatpush1.msra.mxu0 0.0
        %2800 = vmatprep.mubr.f32.mxu0 0.0
        %v2801 = vand.u32 %v2162, 4294901760
        %v2802 = vsub.f32 %v2162, %v2801
        %v2803 = vand.u32 %v2802, 4294901760
        %2804 = vmatmul.mubr.f32.gmra.mrb[0].mxu0 %v2803
        %v2805 = vpop.f32.mrb[0].mxu0
        %v2806 = vadd.f32 %v2700, %v2805
        %v2807 = vpop.f32.mrb[0].mxu0
        %v2808 = vadd.f32 %v2702, %v2807
        %2809 = vdwg.mxu0
        %v2810 = vand.u32 %v2164, 4294901760
        %v2811 = vsub.f32 %v2164, %v2810
        %v2812 = vand.u32 %v2811, 4294901760
        %2813 = vmatprep.subr.mxu0 %v2812
        %v2814 = vand.u32 %v2163, 4294901760
        %v2815 = vsub.f32 %v2163, %v2814
        %v2816 = vand.u32 %v2815, 4294901760
        %2817 = vmatpush1.msra.mxu0 %v2816
        %v2818 = vand.u32 %v2168, 4294901760
        %v2819 = vsub.f32 %v2168, %v2818
        %v2820 = vand.u32 %v2819, 4294901760
        %2821 = vmatprep.subr.mxu0 %v2820
        %v2822 = vand.u32 %v2167, 4294901760
        %v2823 = vsub.f32 %v2167, %v2822
        %v2824 = vand.u32 %v2823, 4294901760
        %2825 = vmatpush1.msra.mxu0 %v2824
        %v2826 = vand.u32 %v2172, 4294901760
        %v2827 = vsub.f32 %v2172, %v2826
        %v2828 = vand.u32 %v2827, 4294901760
        %2829 = vmatprep.subr.mxu0 %v2828
        %v2830 = vand.u32 %v2171, 4294901760
        %v2831 = vsub.f32 %v2171, %v2830
        %v2832 = vand.u32 %v2831, 4294901760
        %2833 = vmatpush1.msra.mxu0 %v2832
        %v2834 = vand.u32 %v2176, 4294901760
        %v2835 = vsub.f32 %v2176, %v2834
        %v2836 = vand.u32 %v2835, 4294901760
        %2837 = vmatprep.subr.mxu0 %v2836
        %v2838 = vand.u32 %v2175, 4294901760
        %v2839 = vsub.f32 %v2175, %v2838
        %v2840 = vand.u32 %v2839, 4294901760
        %2841 = vmatpush1.msra.mxu0 %v2840
        %v2842 = vand.u32 %v2180, 4294901760
        %v2843 = vsub.f32 %v2180, %v2842
        %v2844 = vand.u32 %v2843, 4294901760
        %2845 = vmatprep.subr.mxu0 %v2844
        %v2846 = vand.u32 %v2179, 4294901760
        %v2847 = vsub.f32 %v2179, %v2846
        %v2848 = vand.u32 %v2847, 4294901760
        %2849 = vmatpush1.msra.mxu0 %v2848
        %v2850 = vand.u32 %v2184, 4294901760
        %v2851 = vsub.f32 %v2184, %v2850
        %v2852 = vand.u32 %v2851, 4294901760
        %2853 = vmatprep.subr.mxu0 %v2852
        %v2854 = vand.u32 %v2183, 4294901760
        %v2855 = vsub.f32 %v2183, %v2854
        %v2856 = vand.u32 %v2855, 4294901760
        %2857 = vmatpush1.msra.mxu0 %v2856
        %v2858 = vand.u32 %v2188, 4294901760
        %v2859 = vsub.f32 %v2188, %v2858
        %v2860 = vand.u32 %v2859, 4294901760
        %2861 = vmatprep.subr.mxu0 %v2860
        %v2862 = vand.u32 %v2187, 4294901760
        %v2863 = vsub.f32 %v2187, %v2862
        %v2864 = vand.u32 %v2863, 4294901760
        %2865 = vmatpush1.msra.mxu0 %v2864
        %v2866 = vand.u32 %v2192, 4294901760
        %v2867 = vsub.f32 %v2192, %v2866
        %v2868 = vand.u32 %v2867, 4294901760
        %2869 = vmatprep.subr.mxu0 %v2868
        %v2870 = vand.u32 %v2191, 4294901760
        %v2871 = vsub.f32 %v2191, %v2870
        %v2872 = vand.u32 %v2871, 4294901760
        %2873 = vmatpush1.msra.mxu0 %v2872
        %v2874 = vand.u32 %v2196, 4294901760
        %v2875 = vsub.f32 %v2196, %v2874
        %v2876 = vand.u32 %v2875, 4294901760
        %2877 = vmatprep.subr.mxu0 %v2876
        %v2878 = vand.u32 %v2195, 4294901760
        %v2879 = vsub.f32 %v2195, %v2878
        %v2880 = vand.u32 %v2879, 4294901760
        %2881 = vmatpush1.msra.mxu0 %v2880
        %v2882 = vand.u32 %v2200, 4294901760
        %v2883 = vsub.f32 %v2200, %v2882
        %v2884 = vand.u32 %v2883, 4294901760
        %2885 = vmatprep.subr.mxu0 %v2884
        %v2886 = vand.u32 %v2199, 4294901760
        %v2887 = vsub.f32 %v2199, %v2886
        %v2888 = vand.u32 %v2887, 4294901760
        %2889 = vmatpush1.msra.mxu0 %v2888
        %v2890 = vand.u32 %v2204, 4294901760
        %v2891 = vsub.f32 %v2204, %v2890
        %v2892 = vand.u32 %v2891, 4294901760
        %2893 = vmatprep.subr.mxu0 %v2892
        %v2894 = vand.u32 %v2203, 4294901760
        %v2895 = vsub.f32 %v2203, %v2894
        %v2896 = vand.u32 %v2895, 4294901760
        %2897 = vmatpush1.msra.mxu0 %v2896
        %v2898 = vand.u32 %v2208, 4294901760
        %v2899 = vsub.f32 %v2208, %v2898
        %v2900 = vand.u32 %v2899, 4294901760
        %2901 = vmatprep.subr.mxu0 %v2900
        %v2902 = vand.u32 %v2207, 4294901760
        %v2903 = vsub.f32 %v2207, %v2902
        %v2904 = vand.u32 %v2903, 4294901760
        %2905 = vmatpush1.msra.mxu0 %v2904
        %v2906 = vand.u32 %v2212, 4294901760
        %v2907 = vsub.f32 %v2212, %v2906
        %v2908 = vand.u32 %v2907, 4294901760
        %2909 = vmatprep.subr.mxu0 %v2908
        %v2910 = vand.u32 %v2211, 4294901760
        %v2911 = vsub.f32 %v2211, %v2910
        %v2912 = vand.u32 %v2911, 4294901760
        %2913 = vmatpush1.msra.mxu0 %v2912
        %v2914 = vand.u32 %v2216, 4294901760
        %v2915 = vsub.f32 %v2216, %v2914
        %v2916 = vand.u32 %v2915, 4294901760
        %2917 = vmatprep.subr.mxu0 %v2916
        %v2918 = vand.u32 %v2215, 4294901760
        %v2919 = vsub.f32 %v2215, %v2918
        %v2920 = vand.u32 %v2919, 4294901760
        %2921 = vmatpush1.msra.mxu0 %v2920
        %v2922 = vand.u32 %v2220, 4294901760
        %v2923 = vsub.f32 %v2220, %v2922
        %v2924 = vand.u32 %v2923, 4294901760
        %2925 = vmatprep.subr.mxu0 %v2924
        %v2926 = vand.u32 %v2219, 4294901760
        %v2927 = vsub.f32 %v2219, %v2926
        %v2928 = vand.u32 %v2927, 4294901760
        %2929 = vmatpush1.msra.mxu0 %v2928
        %v2930 = vand.u32 %v2224, 4294901760
        %v2931 = vsub.f32 %v2224, %v2930
        %v2932 = vand.u32 %v2931, 4294901760
        %2933 = vmatprep.subr.mxu0 %v2932
        %v2934 = vand.u32 %v2223, 4294901760
        %v2935 = vsub.f32 %v2223, %v2934
        %v2936 = vand.u32 %v2935, 4294901760
        %2937 = vmatpush1.msra.mxu0 %v2936
        %2938 = vmatprep.subr.mxu0 0.0
        %2939 = vmatpush1.msra.mxu0 0.0
        %2940 = vmatprep.subr.mxu0 0.0
        %2941 = vmatpush1.msra.mxu0 0.0
        %2942 = vmatprep.subr.mxu0 0.0
        %2943 = vmatpush1.msra.mxu0 0.0
        %2944 = vmatprep.subr.mxu0 0.0
        %2945 = vmatpush1.msra.mxu0 0.0
        %2946 = vmatprep.subr.mxu0 0.0
        %2947 = vmatpush1.msra.mxu0 0.0
        %2948 = vmatprep.subr.mxu0 0.0
        %2949 = vmatpush1.msra.mxu0 0.0
        %2950 = vmatprep.subr.mxu0 0.0
        %2951 = vmatpush1.msra.mxu0 0.0
        %2952 = vmatprep.subr.mxu0 0.0
        %2953 = vmatpush1.msra.mxu0 0.0
        %2954 = vmatprep.subr.mxu0 0.0
        %2955 = vmatpush1.msra.mxu0 0.0
        %2956 = vmatprep.subr.mxu0 0.0
        %2957 = vmatpush1.msra.mxu0 0.0
        %2958 = vmatprep.subr.mxu0 0.0
        %2959 = vmatpush1.msra.mxu0 0.0
        %2960 = vmatprep.subr.mxu0 0.0
        %2961 = vmatpush1.msra.mxu0 0.0
        %2962 = vmatprep.subr.mxu0 0.0
        %2963 = vmatpush1.msra.mxu0 0.0
        %2964 = vmatprep.subr.mxu0 0.0
        %2965 = vmatpush1.msra.mxu0 0.0
        %2966 = vmatprep.subr.mxu0 0.0
        %2967 = vmatpush1.msra.mxu0 0.0
        %2968 = vmatprep.subr.mxu0 0.0
        %2969 = vmatpush1.msra.mxu0 0.0
        %2970 = vmatprep.mubr.f32.mxu0 0.0
        %v2971 = vand.u32 %v2162, 4294901760
        %2972 = vmatmul.mubr.f32.gmra.mrb[0].mxu0 %v2971
        %v2973 = vpop.f32.mrb[0].mxu0
        %v2974 = vadd.f32 %v2806, %v2973
        %v2975 = vpop.f32.mrb[0].mxu0
        %v2976 = vadd.f32 %v2808, %v2975
        %2977 = vdwg.mxu0
        %v2978 = vand.u32 %v2164, 4294901760
        %2979 = vmatprep.subr.mxu0 %v2978
        %v2980 = vand.u32 %v2163, 4294901760
        %2981 = vmatpush1.msra.mxu0 %v2980
        %v2982 = vand.u32 %v2168, 4294901760
        %2983 = vmatprep.subr.mxu0 %v2982
        %v2984 = vand.u32 %v2167, 4294901760
        %2985 = vmatpush1.msra.mxu0 %v2984
        %v2986 = vand.u32 %v2172, 4294901760
        %2987 = vmatprep.subr.mxu0 %v2986
        %v2988 = vand.u32 %v2171, 4294901760
        %2989 = vmatpush1.msra.mxu0 %v2988
        %v2990 = vand.u32 %v2176, 4294901760
        %2991 = vmatprep.subr.mxu0 %v2990
        %v2992 = vand.u32 %v2175, 4294901760
        %2993 = vmatpush1.msra.mxu0 %v2992
        %v2994 = vand.u32 %v2180, 4294901760
        %2995 = vmatprep.subr.mxu0 %v2994
        %v2996 = vand.u32 %v2179, 4294901760
        %2997 = vmatpush1.msra.mxu0 %v2996
        %v2998 = vand.u32 %v2184, 4294901760
        %2999 = vmatprep.subr.mxu0 %v2998
        %v3000 = vand.u32 %v2183, 4294901760
        %3001 = vmatpush1.msra.mxu0 %v3000
        %v3002 = vand.u32 %v2188, 4294901760
        %3003 = vmatprep.subr.mxu0 %v3002
        %v3004 = vand.u32 %v2187, 4294901760
        %3005 = vmatpush1.msra.mxu0 %v3004
        %v3006 = vand.u32 %v2192, 4294901760
        %3007 = vmatprep.subr.mxu0 %v3006
        %v3008 = vand.u32 %v2191, 4294901760
        %3009 = vmatpush1.msra.mxu0 %v3008
        %v3010 = vand.u32 %v2196, 4294901760
        %3011 = vmatprep.subr.mxu0 %v3010
        %v3012 = vand.u32 %v2195, 4294901760
        %3013 = vmatpush1.msra.mxu0 %v3012
        %v3014 = vand.u32 %v2200, 4294901760
        %3015 = vmatprep.subr.mxu0 %v3014
        %v3016 = vand.u32 %v2199, 4294901760
        %3017 = vmatpush1.msra.mxu0 %v3016
        %v3018 = vand.u32 %v2204, 4294901760
        %3019 = vmatprep.subr.mxu0 %v3018
        %v3020 = vand.u32 %v2203, 4294901760
        %3021 = vmatpush1.msra.mxu0 %v3020
        %v3022 = vand.u32 %v2208, 4294901760
        %3023 = vmatprep.subr.mxu0 %v3022
        %v3024 = vand.u32 %v2207, 4294901760
        %3025 = vmatpush1.msra.mxu0 %v3024
        %v3026 = vand.u32 %v2212, 4294901760
        %3027 = vmatprep.subr.mxu0 %v3026
        %v3028 = vand.u32 %v2211, 4294901760
        %3029 = vmatpush1.msra.mxu0 %v3028
        %v3030 = vand.u32 %v2216, 4294901760
        %3031 = vmatprep.subr.mxu0 %v3030
        %v3032 = vand.u32 %v2215, 4294901760
        %3033 = vmatpush1.msra.mxu0 %v3032
        %v3034 = vand.u32 %v2220, 4294901760
        %3035 = vmatprep.subr.mxu0 %v3034
        %v3036 = vand.u32 %v2219, 4294901760
        %3037 = vmatpush1.msra.mxu0 %v3036
        %v3038 = vand.u32 %v2224, 4294901760
        %3039 = vmatprep.subr.mxu0 %v3038
        %v3040 = vand.u32 %v2223, 4294901760
        %3041 = vmatpush1.msra.mxu0 %v3040
        %3042 = vmatprep.subr.mxu0 0.0
        %3043 = vmatpush1.msra.mxu0 0.0
        %3044 = vmatprep.subr.mxu0 0.0
        %3045 = vmatpush1.msra.mxu0 0.0
        %3046 = vmatprep.subr.mxu0 0.0
        %3047 = vmatpush1.msra.mxu0 0.0
        %3048 = vmatprep.subr.mxu0 0.0
        %3049 = vmatpush1.msra.mxu0 0.0
        %3050 = vmatprep.subr.mxu0 0.0
        %3051 = vmatpush1.msra.mxu0 0.0
        %3052 = vmatprep.subr.mxu0 0.0
        %3053 = vmatpush1.msra.mxu0 0.0
        %3054 = vmatprep.subr.mxu0 0.0
        %3055 = vmatpush1.msra.mxu0 0.0
        %3056 = vmatprep.subr.mxu0 0.0
        %3057 = vmatpush1.msra.mxu0 0.0
        %3058 = vmatprep.subr.mxu0 0.0
        %3059 = vmatpush1.msra.mxu0 0.0
        %3060 = vmatprep.subr.mxu0 0.0
        %3061 = vmatpush1.msra.mxu0 0.0
        %3062 = vmatprep.subr.mxu0 0.0
        %3063 = vmatpush1.msra.mxu0 0.0
        %3064 = vmatprep.subr.mxu0 0.0
        %3065 = vmatpush1.msra.mxu0 0.0
        %3066 = vmatprep.subr.mxu0 0.0
        %3067 = vmatpush1.msra.mxu0 0.0
        %3068 = vmatprep.subr.mxu0 0.0
        %3069 = vmatpush1.msra.mxu0 0.0
        %3070 = vmatprep.subr.mxu0 0.0
        %3071 = vmatpush1.msra.mxu0 0.0
        %3072 = vmatprep.subr.mxu0 0.0
        %3073 = vmatpush1.msra.mxu0 0.0
        %3074 = vmatprep.mubr.f32.mxu0 0.0
        %v3075 = vand.u32 %v2162, 4294901760
        %3076 = vmatmul.mubr.f32.gmra.mrb[0].mxu0 %v3075
        %v3077 = vpop.f32.mrb[0].mxu0
        %v3078 = vadd.f32 %v2974, %v3077
        %v3079 = vpop.f32.mrb[0].mxu0
        %v3080 = vadd.f32 %v2976, %v3079
        %3081 = vdwg.mxu0
        %v3082 = vand.u32 %v2166, 4294901760
        %3083 = vmatprep.subr.mxu0 %v3082
        %v3084 = vand.u32 %v2165, 4294901760
        %3085 = vmatpush1.msra.mxu0 %v3084
        %v3086 = vand.u32 %v2170, 4294901760
        %3087 = vmatprep.subr.mxu0 %v3086
        %v3088 = vand.u32 %v2169, 4294901760
        %3089 = vmatpush1.msra.mxu0 %v3088
        %v3090 = vand.u32 %v2174, 4294901760
        %3091 = vmatprep.subr.mxu0 %v3090
        %v3092 = vand.u32 %v2173, 4294901760
        %3093 = vmatpush1.msra.mxu0 %v3092
        %v3094 = vand.u32 %v2178, 4294901760
        %3095 = vmatprep.subr.mxu0 %v3094
        %v3096 = vand.u32 %v2177, 4294901760
        %3097 = vmatpush1.msra.mxu0 %v3096
        %v3098 = vand.u32 %v2182, 4294901760
        %3099 = vmatprep.subr.mxu0 %v3098
        %v3100 = vand.u32 %v2181, 4294901760
        %3101 = vmatpush1.msra.mxu0 %v3100
        %v3102 = vand.u32 %v2186, 4294901760
        %3103 = vmatprep.subr.mxu0 %v3102
        %v3104 = vand.u32 %v2185, 4294901760
        %3105 = vmatpush1.msra.mxu0 %v3104
        %v3106 = vand.u32 %v2190, 4294901760
        %3107 = vmatprep.subr.mxu0 %v3106
        %v3108 = vand.u32 %v2189, 4294901760
        %3109 = vmatpush1.msra.mxu0 %v3108
        %v3110 = vand.u32 %v2194, 4294901760
        %3111 = vmatprep.subr.mxu0 %v3110
        %v3112 = vand.u32 %v2193, 4294901760
        %3113 = vmatpush1.msra.mxu0 %v3112
        %v3114 = vand.u32 %v2198, 4294901760
        %3115 = vmatprep.subr.mxu0 %v3114
        %v3116 = vand.u32 %v2197, 4294901760
        %3117 = vmatpush1.msra.mxu0 %v3116
        %v3118 = vand.u32 %v2202, 4294901760
        %3119 = vmatprep.subr.mxu0 %v3118
        %v3120 = vand.u32 %v2201, 4294901760
        %3121 = vmatpush1.msra.mxu0 %v3120
        %v3122 = vand.u32 %v2206, 4294901760
        %3123 = vmatprep.subr.mxu0 %v3122
        %v3124 = vand.u32 %v2205, 4294901760
        %3125 = vmatpush1.msra.mxu0 %v3124
        %v3126 = vand.u32 %v2210, 4294901760
        %3127 = vmatprep.subr.mxu0 %v3126
        %v3128 = vand.u32 %v2209, 4294901760
        %3129 = vmatpush1.msra.mxu0 %v3128
        %v3130 = vand.u32 %v2214, 4294901760
        %3131 = vmatprep.subr.mxu0 %v3130
        %v3132 = vand.u32 %v2213, 4294901760
        %3133 = vmatpush1.msra.mxu0 %v3132
        %v3134 = vand.u32 %v2218, 4294901760
        %3135 = vmatprep.subr.mxu0 %v3134
        %v3136 = vand.u32 %v2217, 4294901760
        %3137 = vmatpush1.msra.mxu0 %v3136
        %v3138 = vand.u32 %v2222, 4294901760
        %3139 = vmatprep.subr.mxu0 %v3138
        %v3140 = vand.u32 %v2221, 4294901760
        %3141 = vmatpush1.msra.mxu0 %v3140
        %v3142 = vand.u32 %v2226, 4294901760
        %3143 = vmatprep.subr.mxu0 %v3142
        %v3144 = vand.u32 %v2225, 4294901760
        %3145 = vmatpush1.msra.mxu0 %v3144
        %3146 = vmatprep.subr.mxu0 0.0
        %3147 = vmatpush1.msra.mxu0 0.0
        %3148 = vmatprep.subr.mxu0 0.0
        %3149 = vmatpush1.msra.mxu0 0.0
        %3150 = vmatprep.subr.mxu0 0.0
        %3151 = vmatpush1.msra.mxu0 0.0
        %3152 = vmatprep.subr.mxu0 0.0
        %3153 = vmatpush1.msra.mxu0 0.0
        %3154 = vmatprep.subr.mxu0 0.0
        %3155 = vmatpush1.msra.mxu0 0.0
        %3156 = vmatprep.subr.mxu0 0.0
        %3157 = vmatpush1.msra.mxu0 0.0
        %3158 = vmatprep.subr.mxu0 0.0
        %3159 = vmatpush1.msra.mxu0 0.0
        %3160 = vmatprep.subr.mxu0 0.0
        %3161 = vmatpush1.msra.mxu0 0.0
        %3162 = vmatprep.subr.mxu0 0.0
        %3163 = vmatpush1.msra.mxu0 0.0
        %3164 = vmatprep.subr.mxu0 0.0
        %3165 = vmatpush1.msra.mxu0 0.0
        %3166 = vmatprep.subr.mxu0 0.0
        %3167 = vmatpush1.msra.mxu0 0.0
        %3168 = vmatprep.subr.mxu0 0.0
        %3169 = vmatpush1.msra.mxu0 0.0
        %3170 = vmatprep.subr.mxu0 0.0
        %3171 = vmatpush1.msra.mxu0 0.0
        %3172 = vmatprep.subr.mxu0 0.0
        %3173 = vmatpush1.msra.mxu0 0.0
        %3174 = vmatprep.subr.mxu0 0.0
        %3175 = vmatpush1.msra.mxu0 0.0
        %3176 = vmatprep.subr.mxu0 0.0
        %3177 = vmatpush1.msra.mxu0 0.0
        %3178 = vmatprep.mubr.f32.mxu0 0.0
        %v3179 = vand.u32 %v2162, 4294901760
        %v3180 = vsub.f32 %v2162, %v3179
        %v3181 = vand.u32 %v3180, 4294901760
        %v3182 = vsub.f32 %v3180, %v3181
        %v3183 = vand.u32 %v3182, 4294901760
        %3184 = vmatmul.mubr.f32.gmra.mrb[0].mxu0 %v3183
        %v3185 = vpop.f32.mrb[0].mxu0
        %v3186 = vadd.f32 0.0, %v3185
        %v3187 = vpop.f32.mrb[0].mxu0
        %v3188 = vadd.f32 0.0, %v3187
        %3189 = vdwg.mxu0
        %v3190 = vand.u32 %v2166, 4294901760
        %v3191 = vsub.f32 %v2166, %v3190
        %v3192 = vand.u32 %v3191, 4294901760
        %v3193 = vsub.f32 %v3191, %v3192
        %v3194 = vand.u32 %v3193, 4294901760
        %3195 = vmatprep.subr.mxu0 %v3194
        %v3196 = vand.u32 %v2165, 4294901760
        %v3197 = vsub.f32 %v2165, %v3196
        %v3198 = vand.u32 %v3197, 4294901760
        %v3199 = vsub.f32 %v3197, %v3198
        %v3200 = vand.u32 %v3199, 4294901760
        %3201 = vmatpush1.msra.mxu0 %v3200
        %v3202 = vand.u32 %v2170, 4294901760
        %v3203 = vsub.f32 %v2170, %v3202
        %v3204 = vand.u32 %v3203, 4294901760
        %v3205 = vsub.f32 %v3203, %v3204
        %v3206 = vand.u32 %v3205, 4294901760
        %3207 = vmatprep.subr.mxu0 %v3206
        %v3208 = vand.u32 %v2169, 4294901760
        %v3209 = vsub.f32 %v2169, %v3208
        %v3210 = vand.u32 %v3209, 4294901760
        %v3211 = vsub.f32 %v3209, %v3210
        %v3212 = vand.u32 %v3211, 4294901760
        %3213 = vmatpush1.msra.mxu0 %v3212
        %v3214 = vand.u32 %v2174, 4294901760
        %v3215 = vsub.f32 %v2174, %v3214
        %v3216 = vand.u32 %v3215, 4294901760
        %v3217 = vsub.f32 %v3215, %v3216
        %v3218 = vand.u32 %v3217, 4294901760
        %3219 = vmatprep.subr.mxu0 %v3218
        %v3220 = vand.u32 %v2173, 4294901760
        %v3221 = vsub.f32 %v2173, %v3220
        %v3222 = vand.u32 %v3221, 4294901760
        %v3223 = vsub.f32 %v3221, %v3222
        %v3224 = vand.u32 %v3223, 4294901760
        %3225 = vmatpush1.msra.mxu0 %v3224
        %v3226 = vand.u32 %v2178, 4294901760
        %v3227 = vsub.f32 %v2178, %v3226
        %v3228 = vand.u32 %v3227, 4294901760
        %v3229 = vsub.f32 %v3227, %v3228
        %v3230 = vand.u32 %v3229, 4294901760
        %3231 = vmatprep.subr.mxu0 %v3230
        %v3232 = vand.u32 %v2177, 4294901760
        %v3233 = vsub.f32 %v2177, %v3232
        %v3234 = vand.u32 %v3233, 4294901760
        %v3235 = vsub.f32 %v3233, %v3234
        %v3236 = vand.u32 %v3235, 4294901760
        %3237 = vmatpush1.msra.mxu0 %v3236
        %v3238 = vand.u32 %v2182, 4294901760
        %v3239 = vsub.f32 %v2182, %v3238
        %v3240 = vand.u32 %v3239, 4294901760
        %v3241 = vsub.f32 %v3239, %v3240
        %v3242 = vand.u32 %v3241, 4294901760
        %3243 = vmatprep.subr.mxu0 %v3242
        %v3244 = vand.u32 %v2181, 4294901760
        %v3245 = vsub.f32 %v2181, %v3244
        %v3246 = vand.u32 %v3245, 4294901760
        %v3247 = vsub.f32 %v3245, %v3246
        %v3248 = vand.u32 %v3247, 4294901760
        %3249 = vmatpush1.msra.mxu0 %v3248
        %v3250 = vand.u32 %v2186, 4294901760
        %v3251 = vsub.f32 %v2186, %v3250
        %v3252 = vand.u32 %v3251, 4294901760
        %v3253 = vsub.f32 %v3251, %v3252
        %v3254 = vand.u32 %v3253, 4294901760
        %3255 = vmatprep.subr.mxu0 %v3254
        %v3256 = vand.u32 %v2185, 4294901760
        %v3257 = vsub.f32 %v2185, %v3256
        %v3258 = vand.u32 %v3257, 4294901760
        %v3259 = vsub.f32 %v3257, %v3258
        %v3260 = vand.u32 %v3259, 4294901760
        %3261 = vmatpush1.msra.mxu0 %v3260
        %v3262 = vand.u32 %v2190, 4294901760
        %v3263 = vsub.f32 %v2190, %v3262
        %v3264 = vand.u32 %v3263, 4294901760
        %v3265 = vsub.f32 %v3263, %v3264
        %v3266 = vand.u32 %v3265, 4294901760
        %3267 = vmatprep.subr.mxu0 %v3266
        %v3268 = vand.u32 %v2189, 4294901760
        %v3269 = vsub.f32 %v2189, %v3268
        %v3270 = vand.u32 %v3269, 4294901760
        %v3271 = vsub.f32 %v3269, %v3270
        %v3272 = vand.u32 %v3271, 4294901760
        %3273 = vmatpush1.msra.mxu0 %v3272
        %v3274 = vand.u32 %v2194, 4294901760
        %v3275 = vsub.f32 %v2194, %v3274
        %v3276 = vand.u32 %v3275, 4294901760
        %v3277 = vsub.f32 %v3275, %v3276
        %v3278 = vand.u32 %v3277, 4294901760
        %3279 = vmatprep.subr.mxu0 %v3278
        %v3280 = vand.u32 %v2193, 4294901760
        %v3281 = vsub.f32 %v2193, %v3280
        %v3282 = vand.u32 %v3281, 4294901760
        %v3283 = vsub.f32 %v3281, %v3282
        %v3284 = vand.u32 %v3283, 4294901760
        %3285 = vmatpush1.msra.mxu0 %v3284
        %v3286 = vand.u32 %v2198, 4294901760
        %v3287 = vsub.f32 %v2198, %v3286
        %v3288 = vand.u32 %v3287, 4294901760
        %v3289 = vsub.f32 %v3287, %v3288
        %v3290 = vand.u32 %v3289, 4294901760
        %3291 = vmatprep.subr.mxu0 %v3290
        %v3292 = vand.u32 %v2197, 4294901760
        %v3293 = vsub.f32 %v2197, %v3292
        %v3294 = vand.u32 %v3293, 4294901760
        %v3295 = vsub.f32 %v3293, %v3294
        %v3296 = vand.u32 %v3295, 4294901760
        %3297 = vmatpush1.msra.mxu0 %v3296
        %v3298 = vand.u32 %v2202, 4294901760
        %v3299 = vsub.f32 %v2202, %v3298
        %v3300 = vand.u32 %v3299, 4294901760
        %v3301 = vsub.f32 %v3299, %v3300
        %v3302 = vand.u32 %v3301, 4294901760
        %3303 = vmatprep.subr.mxu0 %v3302
        %v3304 = vand.u32 %v2201, 4294901760
        %v3305 = vsub.f32 %v2201, %v3304
        %v3306 = vand.u32 %v3305, 4294901760
        %v3307 = vsub.f32 %v3305, %v3306
        %v3308 = vand.u32 %v3307, 4294901760
        %3309 = vmatpush1.msra.mxu0 %v3308
        %v3310 = vand.u32 %v2206, 4294901760
        %v3311 = vsub.f32 %v2206, %v3310
        %v3312 = vand.u32 %v3311, 4294901760
        %v3313 = vsub.f32 %v3311, %v3312
        %v3314 = vand.u32 %v3313, 4294901760
        %3315 = vmatprep.subr.mxu0 %v3314
        %v3316 = vand.u32 %v2205, 4294901760
        %v3317 = vsub.f32 %v2205, %v3316
        %v3318 = vand.u32 %v3317, 4294901760
        %v3319 = vsub.f32 %v3317, %v3318
        %v3320 = vand.u32 %v3319, 4294901760
        %3321 = vmatpush1.msra.mxu0 %v3320
        %v3322 = vand.u32 %v2210, 4294901760
        %v3323 = vsub.f32 %v2210, %v3322
        %v3324 = vand.u32 %v3323, 4294901760
        %v3325 = vsub.f32 %v3323, %v3324
        %v3326 = vand.u32 %v3325, 4294901760
        %3327 = vmatprep.subr.mxu0 %v3326
        %v3328 = vand.u32 %v2209, 4294901760
        %v3329 = vsub.f32 %v2209, %v3328
        %v3330 = vand.u32 %v3329, 4294901760
        %v3331 = vsub.f32 %v3329, %v3330
        %v3332 = vand.u32 %v3331, 4294901760
        %3333 = vmatpush1.msra.mxu0 %v3332
        %v3334 = vand.u32 %v2214, 4294901760
        %v3335 = vsub.f32 %v2214, %v3334
        %v3336 = vand.u32 %v3335, 4294901760
        %v3337 = vsub.f32 %v3335, %v3336
        %v3338 = vand.u32 %v3337, 4294901760
        %3339 = vmatprep.subr.mxu0 %v3338
        %v3340 = vand.u32 %v2213, 4294901760
        %v3341 = vsub.f32 %v2213, %v3340
        %v3342 = vand.u32 %v3341, 4294901760
        %v3343 = vsub.f32 %v3341, %v3342
        %v3344 = vand.u32 %v3343, 4294901760
        %3345 = vmatpush1.msra.mxu0 %v3344
        %v3346 = vand.u32 %v2218, 4294901760
        %v3347 = vsub.f32 %v2218, %v3346
        %v3348 = vand.u32 %v3347, 4294901760
        %v3349 = vsub.f32 %v3347, %v3348
        %v3350 = vand.u32 %v3349, 4294901760
        %3351 = vmatprep.subr.mxu0 %v3350
        %v3352 = vand.u32 %v2217, 4294901760
        %v3353 = vsub.f32 %v2217, %v3352
        %v3354 = vand.u32 %v3353, 4294901760
        %v3355 = vsub.f32 %v3353, %v3354
        %v3356 = vand.u32 %v3355, 4294901760
        %3357 = vmatpush1.msra.mxu0 %v3356
        %v3358 = vand.u32 %v2222, 4294901760
        %v3359 = vsub.f32 %v2222, %v3358
        %v3360 = vand.u32 %v3359, 4294901760
        %v3361 = vsub.f32 %v3359, %v3360
        %v3362 = vand.u32 %v3361, 4294901760
        %3363 = vmatprep.subr.mxu0 %v3362
        %v3364 = vand.u32 %v2221, 4294901760
        %v3365 = vsub.f32 %v2221, %v3364
        %v3366 = vand.u32 %v3365, 4294901760
        %v3367 = vsub.f32 %v3365, %v3366
        %v3368 = vand.u32 %v3367, 4294901760
        %3369 = vmatpush1.msra.mxu0 %v3368
        %v3370 = vand.u32 %v2226, 4294901760
        %v3371 = vsub.f32 %v2226, %v3370
        %v3372 = vand.u32 %v3371, 4294901760
        %v3373 = vsub.f32 %v3371, %v3372
        %v3374 = vand.u32 %v3373, 4294901760
        %3375 = vmatprep.subr.mxu0 %v3374
        %v3376 = vand.u32 %v2225, 4294901760
        %v3377 = vsub.f32 %v2225, %v3376
        %v3378 = vand.u32 %v3377, 4294901760
        %v3379 = vsub.f32 %v3377, %v3378
        %v3380 = vand.u32 %v3379, 4294901760
        %3381 = vmatpush1.msra.mxu0 %v3380
        %3382 = vmatprep.subr.mxu0 0.0
        %3383 = vmatpush1.msra.mxu0 0.0
        %3384 = vmatprep.subr.mxu0 0.0
        %3385 = vmatpush1.msra.mxu0 0.0
        %3386 = vmatprep.subr.mxu0 0.0
        %3387 = vmatpush1.msra.mxu0 0.0
        %3388 = vmatprep.subr.mxu0 0.0
        %3389 = vmatpush1.msra.mxu0 0.0
        %3390 = vmatprep.subr.mxu0 0.0
        %3391 = vmatpush1.msra.mxu0 0.0
        %3392 = vmatprep.subr.mxu0 0.0
        %3393 = vmatpush1.msra.mxu0 0.0
        %3394 = vmatprep.subr.mxu0 0.0
        %3395 = vmatpush1.msra.mxu0 0.0
        %3396 = vmatprep.subr.mxu0 0.0
        %3397 = vmatpush1.msra.mxu0 0.0
        %3398 = vmatprep.subr.mxu0 0.0
        %3399 = vmatpush1.msra.mxu0 0.0
        %3400 = vmatprep.subr.mxu0 0.0
        %3401 = vmatpush1.msra.mxu0 0.0
        %3402 = vmatprep.subr.mxu0 0.0
        %3403 = vmatpush1.msra.mxu0 0.0
        %3404 = vmatprep.subr.mxu0 0.0
        %3405 = vmatpush1.msra.mxu0 0.0
        %3406 = vmatprep.subr.mxu0 0.0
        %3407 = vmatpush1.msra.mxu0 0.0
        %3408 = vmatprep.subr.mxu0 0.0
        %3409 = vmatpush1.msra.mxu0 0.0
        %3410 = vmatprep.subr.mxu0 0.0
        %3411 = vmatpush1.msra.mxu0 0.0
        %3412 = vmatprep.subr.mxu0 0.0
        %3413 = vmatpush1.msra.mxu0 0.0
        %3414 = vmatprep.mubr.f32.mxu0 0.0
        %v3415 = vand.u32 %v2162, 4294901760
        %3416 = vmatmul.mubr.f32.gmra.mrb[0].mxu0 %v3415
        %v3417 = vpop.f32.mrb[0].mxu0
        %v3418 = vadd.f32 %v3186, %v3417
        %v3419 = vpop.f32.mrb[0].mxu0
        %v3420 = vadd.f32 %v3188, %v3419
        %3421 = vdwg.mxu0
        %v3422 = vand.u32 %v2166, 4294901760
        %v3423 = vsub.f32 %v2166, %v3422
        %3424 = vmatprep.subr.mxu0 %v3423
        %v3425 = vand.u32 %v2165, 4294901760
        %v3426 = vsub.f32 %v2165, %v3425
        %3427 = vmatpush1.msra.mxu0 %v3426
        %v3428 = vand.u32 %v2170, 4294901760
        %v3429 = vsub.f32 %v2170, %v3428
        %3430 = vmatprep.subr.mxu0 %v3429
        %v3431 = vand.u32 %v2169, 4294901760
        %v3432 = vsub.f32 %v2169, %v3431
        %3433 = vmatpush1.msra.mxu0 %v3432
        %v3434 = vand.u32 %v2174, 4294901760
        %v3435 = vsub.f32 %v2174, %v3434
        %3436 = vmatprep.subr.mxu0 %v3435
        %v3437 = vand.u32 %v2173, 4294901760
        %v3438 = vsub.f32 %v2173, %v3437
        %3439 = vmatpush1.msra.mxu0 %v3438
        %v3440 = vand.u32 %v2178, 4294901760
        %v3441 = vsub.f32 %v2178, %v3440
        %3442 = vmatprep.subr.mxu0 %v3441
        %v3443 = vand.u32 %v2177, 4294901760
        %v3444 = vsub.f32 %v2177, %v3443
        %3445 = vmatpush1.msra.mxu0 %v3444
        %v3446 = vand.u32 %v2182, 4294901760
        %v3447 = vsub.f32 %v2182, %v3446
        %3448 = vmatprep.subr.mxu0 %v3447
        %v3449 = vand.u32 %v2181, 4294901760
        %v3450 = vsub.f32 %v2181, %v3449
        %3451 = vmatpush1.msra.mxu0 %v3450
        %v3452 = vand.u32 %v2186, 4294901760
        %v3453 = vsub.f32 %v2186, %v3452
        %3454 = vmatprep.subr.mxu0 %v3453
        %v3455 = vand.u32 %v2185, 4294901760
        %v3456 = vsub.f32 %v2185, %v3455
        %3457 = vmatpush1.msra.mxu0 %v3456
        %v3458 = vand.u32 %v2190, 4294901760
        %v3459 = vsub.f32 %v2190, %v3458
        %3460 = vmatprep.subr.mxu0 %v3459
        %v3461 = vand.u32 %v2189, 4294901760
        %v3462 = vsub.f32 %v2189, %v3461
        %3463 = vmatpush1.msra.mxu0 %v3462
        %v3464 = vand.u32 %v2194, 4294901760
        %v3465 = vsub.f32 %v2194, %v3464
        %3466 = vmatprep.subr.mxu0 %v3465
        %v3467 = vand.u32 %v2193, 4294901760
        %v3468 = vsub.f32 %v2193, %v3467
        %3469 = vmatpush1.msra.mxu0 %v3468
        %v3470 = vand.u32 %v2198, 4294901760
        %v3471 = vsub.f32 %v2198, %v3470
        %3472 = vmatprep.subr.mxu0 %v3471
        %v3473 = vand.u32 %v2197, 4294901760
        %v3474 = vsub.f32 %v2197, %v3473
        %3475 = vmatpush1.msra.mxu0 %v3474
        %v3476 = vand.u32 %v2202, 4294901760
        %v3477 = vsub.f32 %v2202, %v3476
        %3478 = vmatprep.subr.mxu0 %v3477
        %v3479 = vand.u32 %v2201, 4294901760
        %v3480 = vsub.f32 %v2201, %v3479
        %3481 = vmatpush1.msra.mxu0 %v3480
        %v3482 = vand.u32 %v2206, 4294901760
        %v3483 = vsub.f32 %v2206, %v3482
        %3484 = vmatprep.subr.mxu0 %v3483
        %v3485 = vand.u32 %v2205, 4294901760
        %v3486 = vsub.f32 %v2205, %v3485
        %3487 = vmatpush1.msra.mxu0 %v3486
        %v3488 = vand.u32 %v2210, 4294901760
        %v3489 = vsub.f32 %v2210, %v3488
        %3490 = vmatprep.subr.mxu0 %v3489
        %v3491 = vand.u32 %v2209, 4294901760
        %v3492 = vsub.f32 %v2209, %v3491
        %3493 = vmatpush1.msra.mxu0 %v3492
        %v3494 = vand.u32 %v2214, 4294901760
        %v3495 = vsub.f32 %v2214, %v3494
        %3496 = vmatprep.subr.mxu0 %v3495
        %v3497 = vand.u32 %v2213, 4294901760
        %v3498 = vsub.f32 %v2213, %v3497
        %3499 = vmatpush1.msra.mxu0 %v3498
        %v3500 = vand.u32 %v2218, 4294901760
        %v3501 = vsub.f32 %v2218, %v3500
        %3502 = vmatprep.subr.mxu0 %v3501
        %v3503 = vand.u32 %v2217, 4294901760
        %v3504 = vsub.f32 %v2217, %v3503
        %3505 = vmatpush1.msra.mxu0 %v3504
        %v3506 = vand.u32 %v2222, 4294901760
        %v3507 = vsub.f32 %v2222, %v3506
        %3508 = vmatprep.subr.mxu0 %v3507
        %v3509 = vand.u32 %v2221, 4294901760
        %v3510 = vsub.f32 %v2221, %v3509
        %3511 = vmatpush1.msra.mxu0 %v3510
        %v3512 = vand.u32 %v2226, 4294901760
        %v3513 = vsub.f32 %v2226, %v3512
        %3514 = vmatprep.subr.mxu0 %v3513
        %v3515 = vand.u32 %v2225, 4294901760
        %v3516 = vsub.f32 %v2225, %v3515
        %3517 = vmatpush1.msra.mxu0 %v3516
        %3518 = vmatprep.subr.mxu0 0.0
        %3519 = vmatpush1.msra.mxu0 0.0
        %3520 = vmatprep.subr.mxu0 0.0
        %3521 = vmatpush1.msra.mxu0 0.0
        %3522 = vmatprep.subr.mxu0 0.0
        %3523 = vmatpush1.msra.mxu0 0.0
        %3524 = vmatprep.subr.mxu0 0.0
        %3525 = vmatpush1.msra.mxu0 0.0
        %3526 = vmatprep.subr.mxu0 0.0
        %3527 = vmatpush1.msra.mxu0 0.0
        %3528 = vmatprep.subr.mxu0 0.0
        %3529 = vmatpush1.msra.mxu0 0.0
        %3530 = vmatprep.subr.mxu0 0.0
        %3531 = vmatpush1.msra.mxu0 0.0
        %3532 = vmatprep.subr.mxu0 0.0
        %3533 = vmatpush1.msra.mxu0 0.0
        %3534 = vmatprep.subr.mxu0 0.0
        %3535 = vmatpush1.msra.mxu0 0.0
        %3536 = vmatprep.subr.mxu0 0.0
        %3537 = vmatpush1.msra.mxu0 0.0
        %3538 = vmatprep.subr.mxu0 0.0
        %3539 = vmatpush1.msra.mxu0 0.0
        %3540 = vmatprep.subr.mxu0 0.0
        %3541 = vmatpush1.msra.mxu0 0.0
        %3542 = vmatprep.subr.mxu0 0.0
        %3543 = vmatpush1.msra.mxu0 0.0
        %3544 = vmatprep.subr.mxu0 0.0
        %3545 = vmatpush1.msra.mxu0 0.0
        %3546 = vmatprep.subr.mxu0 0.0
        %3547 = vmatpush1.msra.mxu0 0.0
        %3548 = vmatprep.subr.mxu0 0.0
        %3549 = vmatpush1.msra.mxu0 0.0
        %3550 = vmatprep.mubr.f32.mxu0 0.0
        %v3551 = vand.u32 %v2162, 4294901760
        %v3552 = vsub.f32 %v2162, %v3551
        %3553 = vmatmul.mubr.f32.gmra.mrb[0].mxu0 %v3552
        %v3554 = vpop.f32.mrb[0].mxu0
        %v3555 = vadd.f32 %v3418, %v3554
        %v3556 = vpop.f32.mrb[0].mxu0
        %v3557 = vadd.f32 %v3420, %v3556
        %3558 = vdwg.mxu0
        %v3559 = vand.u32 %v2166, 4294901760
        %3560 = vmatprep.subr.mxu0 %v3559
        %v3561 = vand.u32 %v2165, 4294901760
        %3562 = vmatpush1.msra.mxu0 %v3561
        %v3563 = vand.u32 %v2170, 4294901760
        %3564 = vmatprep.subr.mxu0 %v3563
        %v3565 = vand.u32 %v2169, 4294901760
        %3566 = vmatpush1.msra.mxu0 %v3565
        %v3567 = vand.u32 %v2174, 4294901760
        %3568 = vmatprep.subr.mxu0 %v3567
        %v3569 = vand.u32 %v2173, 4294901760
        %3570 = vmatpush1.msra.mxu0 %v3569
        %v3571 = vand.u32 %v2178, 4294901760
        %3572 = vmatprep.subr.mxu0 %v3571
        %v3573 = vand.u32 %v2177, 4294901760
        %3574 = vmatpush1.msra.mxu0 %v3573
        %v3575 = vand.u32 %v2182, 4294901760
        %3576 = vmatprep.subr.mxu0 %v3575
        %v3577 = vand.u32 %v2181, 4294901760
        %3578 = vmatpush1.msra.mxu0 %v3577
        %v3579 = vand.u32 %v2186, 4294901760
        %3580 = vmatprep.subr.mxu0 %v3579
        %v3581 = vand.u32 %v2185, 4294901760
        %3582 = vmatpush1.msra.mxu0 %v3581
        %v3583 = vand.u32 %v2190, 4294901760
        %3584 = vmatprep.subr.mxu0 %v3583
        %v3585 = vand.u32 %v2189, 4294901760
        %3586 = vmatpush1.msra.mxu0 %v3585
        %v3587 = vand.u32 %v2194, 4294901760
        %3588 = vmatprep.subr.mxu0 %v3587
        %v3589 = vand.u32 %v2193, 4294901760
        %3590 = vmatpush1.msra.mxu0 %v3589
        %v3591 = vand.u32 %v2198, 4294901760
        %3592 = vmatprep.subr.mxu0 %v3591
        %v3593 = vand.u32 %v2197, 4294901760
        %3594 = vmatpush1.msra.mxu0 %v3593
        %v3595 = vand.u32 %v2202, 4294901760
        %3596 = vmatprep.subr.mxu0 %v3595
        %v3597 = vand.u32 %v2201, 4294901760
        %3598 = vmatpush1.msra.mxu0 %v3597
        %v3599 = vand.u32 %v2206, 4294901760
        %3600 = vmatprep.subr.mxu0 %v3599
        %v3601 = vand.u32 %v2205, 4294901760
        %3602 = vmatpush1.msra.mxu0 %v3601
        %v3603 = vand.u32 %v2210, 4294901760
        %3604 = vmatprep.subr.mxu0 %v3603
        %v3605 = vand.u32 %v2209, 4294901760
        %3606 = vmatpush1.msra.mxu0 %v3605
        %v3607 = vand.u32 %v2214, 4294901760
        %3608 = vmatprep.subr.mxu0 %v3607
        %v3609 = vand.u32 %v2213, 4294901760
        %3610 = vmatpush1.msra.mxu0 %v3609
        %v3611 = vand.u32 %v2218, 4294901760
        %3612 = vmatprep.subr.mxu0 %v3611
        %v3613 = vand.u32 %v2217, 4294901760
        %3614 = vmatpush1.msra.mxu0 %v3613
        %v3615 = vand.u32 %v2222, 4294901760
        %3616 = vmatprep.subr.mxu0 %v3615
        %v3617 = vand.u32 %v2221, 4294901760
        %3618 = vmatpush1.msra.mxu0 %v3617
        %v3619 = vand.u32 %v2226, 4294901760
        %3620 = vmatprep.subr.mxu0 %v3619
        %v3621 = vand.u32 %v2225, 4294901760
        %3622 = vmatpush1.msra.mxu0 %v3621
        %3623 = vmatprep.subr.mxu0 0.0
        %3624 = vmatpush1.msra.mxu0 0.0
        %3625 = vmatprep.subr.mxu0 0.0
        %3626 = vmatpush1.msra.mxu0 0.0
        %3627 = vmatprep.subr.mxu0 0.0
        %3628 = vmatpush1.msra.mxu0 0.0
        %3629 = vmatprep.subr.mxu0 0.0
        %3630 = vmatpush1.msra.mxu0 0.0
        %3631 = vmatprep.subr.mxu0 0.0
        %3632 = vmatpush1.msra.mxu0 0.0
        %3633 = vmatprep.subr.mxu0 0.0
        %3634 = vmatpush1.msra.mxu0 0.0
        %3635 = vmatprep.subr.mxu0 0.0
        %3636 = vmatpush1.msra.mxu0 0.0
        %3637 = vmatprep.subr.mxu0 0.0
        %3638 = vmatpush1.msra.mxu0 0.0
        %3639 = vmatprep.subr.mxu0 0.0
        %3640 = vmatpush1.msra.mxu0 0.0
        %3641 = vmatprep.subr.mxu0 0.0
        %3642 = vmatpush1.msra.mxu0 0.0
        %3643 = vmatprep.subr.mxu0 0.0
        %3644 = vmatpush1.msra.mxu0 0.0
        %3645 = vmatprep.subr.mxu0 0.0
        %3646 = vmatpush1.msra.mxu0 0.0
        %3647 = vmatprep.subr.mxu0 0.0
        %3648 = vmatpush1.msra.mxu0 0.0
        %3649 = vmatprep.subr.mxu0 0.0
        %3650 = vmatpush1.msra.mxu0 0.0
        %3651 = vmatprep.subr.mxu0 0.0
        %3652 = vmatpush1.msra.mxu0 0.0
        %3653 = vmatprep.subr.mxu0 0.0
        %3654 = vmatpush1.msra.mxu0 0.0
        %3655 = vmatprep.mubr.f32.mxu0 0.0
        %v3656 = vand.u32 %v2162, 4294901760
        %v3657 = vsub.f32 %v2162, %v3656
        %v3658 = vand.u32 %v3657, 4294901760
        %3659 = vmatmul.mubr.f32.gmra.mrb[0].mxu0 %v3658
        %v3660 = vpop.f32.mrb[0].mxu0
        %v3661 = vadd.f32 %v3555, %v3660
        %v3662 = vpop.f32.mrb[0].mxu0
        %v3663 = vadd.f32 %v3557, %v3662
        %3664 = vdwg.mxu0
        %v3665 = vand.u32 %v2166, 4294901760
        %v3666 = vsub.f32 %v2166, %v3665
        %v3667 = vand.u32 %v3666, 4294901760
        %3668 = vmatprep.subr.mxu0 %v3667
        %v3669 = vand.u32 %v2165, 4294901760
        %v3670 = vsub.f32 %v2165, %v3669
        %v3671 = vand.u32 %v3670, 4294901760
        %3672 = vmatpush1.msra.mxu0 %v3671
        %v3673 = vand.u32 %v2170, 4294901760
        %v3674 = vsub.f32 %v2170, %v3673
        %v3675 = vand.u32 %v3674, 4294901760
        %3676 = vmatprep.subr.mxu0 %v3675
        %v3677 = vand.u32 %v2169, 4294901760
        %v3678 = vsub.f32 %v2169, %v3677
        %v3679 = vand.u32 %v3678, 4294901760
        %3680 = vmatpush1.msra.mxu0 %v3679
        %v3681 = vand.u32 %v2174, 4294901760
        %v3682 = vsub.f32 %v2174, %v3681
        %v3683 = vand.u32 %v3682, 4294901760
        %3684 = vmatprep.subr.mxu0 %v3683
        %v3685 = vand.u32 %v2173, 4294901760
        %v3686 = vsub.f32 %v2173, %v3685
        %v3687 = vand.u32 %v3686, 4294901760
        %3688 = vmatpush1.msra.mxu0 %v3687
        %v3689 = vand.u32 %v2178, 4294901760
        %v3690 = vsub.f32 %v2178, %v3689
        %v3691 = vand.u32 %v3690, 4294901760
        %3692 = vmatprep.subr.mxu0 %v3691
        %v3693 = vand.u32 %v2177, 4294901760
        %v3694 = vsub.f32 %v2177, %v3693
        %v3695 = vand.u32 %v3694, 4294901760
        %3696 = vmatpush1.msra.mxu0 %v3695
        %v3697 = vand.u32 %v2182, 4294901760
        %v3698 = vsub.f32 %v2182, %v3697
        %v3699 = vand.u32 %v3698, 4294901760
        %3700 = vmatprep.subr.mxu0 %v3699
        %v3701 = vand.u32 %v2181, 4294901760
        %v3702 = vsub.f32 %v2181, %v3701
        %v3703 = vand.u32 %v3702, 4294901760
        %3704 = vmatpush1.msra.mxu0 %v3703
        %v3705 = vand.u32 %v2186, 4294901760
        %v3706 = vsub.f32 %v2186, %v3705
        %v3707 = vand.u32 %v3706, 4294901760
        %3708 = vmatprep.subr.mxu0 %v3707
        %v3709 = vand.u32 %v2185, 4294901760
        %v3710 = vsub.f32 %v2185, %v3709
        %v3711 = vand.u32 %v3710, 4294901760
        %3712 = vmatpush1.msra.mxu0 %v3711
        %v3713 = vand.u32 %v2190, 4294901760
        %v3714 = vsub.f32 %v2190, %v3713
        %v3715 = vand.u32 %v3714, 4294901760
        %3716 = vmatprep.subr.mxu0 %v3715
        %v3717 = vand.u32 %v2189, 4294901760
        %v3718 = vsub.f32 %v2189, %v3717
        %v3719 = vand.u32 %v3718, 4294901760
        %3720 = vmatpush1.msra.mxu0 %v3719
        %v3721 = vand.u32 %v2194, 4294901760
        %v3722 = vsub.f32 %v2194, %v3721
        %v3723 = vand.u32 %v3722, 4294901760
        %3724 = vmatprep.subr.mxu0 %v3723
        %v3725 = vand.u32 %v2193, 4294901760
        %v3726 = vsub.f32 %v2193, %v3725
        %v3727 = vand.u32 %v3726, 4294901760
        %3728 = vmatpush1.msra.mxu0 %v3727
        %v3729 = vand.u32 %v2198, 4294901760
        %v3730 = vsub.f32 %v2198, %v3729
        %v3731 = vand.u32 %v3730, 4294901760
        %3732 = vmatprep.subr.mxu0 %v3731
        %v3733 = vand.u32 %v2197, 4294901760
        %v3734 = vsub.f32 %v2197, %v3733
        %v3735 = vand.u32 %v3734, 4294901760
        %3736 = vmatpush1.msra.mxu0 %v3735
        %v3737 = vand.u32 %v2202, 4294901760
        %v3738 = vsub.f32 %v2202, %v3737
        %v3739 = vand.u32 %v3738, 4294901760
        %3740 = vmatprep.subr.mxu0 %v3739
        %v3741 = vand.u32 %v2201, 4294901760
        %v3742 = vsub.f32 %v2201, %v3741
        %v3743 = vand.u32 %v3742, 4294901760
        %3744 = vmatpush1.msra.mxu0 %v3743
        %v3745 = vand.u32 %v2206, 4294901760
        %v3746 = vsub.f32 %v2206, %v3745
        %v3747 = vand.u32 %v3746, 4294901760
        %3748 = vmatprep.subr.mxu0 %v3747
        %v3749 = vand.u32 %v2205, 4294901760
        %v3750 = vsub.f32 %v2205, %v3749
        %v3751 = vand.u32 %v3750, 4294901760
        %3752 = vmatpush1.msra.mxu0 %v3751
        %v3753 = vand.u32 %v2210, 4294901760
        %v3754 = vsub.f32 %v2210, %v3753
        %v3755 = vand.u32 %v3754, 4294901760
        %3756 = vmatprep.subr.mxu0 %v3755
        %v3757 = vand.u32 %v2209, 4294901760
        %v3758 = vsub.f32 %v2209, %v3757
        %v3759 = vand.u32 %v3758, 4294901760
        %3760 = vmatpush1.msra.mxu0 %v3759
        %v3761 = vand.u32 %v2214, 4294901760
        %v3762 = vsub.f32 %v2214, %v3761
        %v3763 = vand.u32 %v3762, 4294901760
        %3764 = vmatprep.subr.mxu0 %v3763
        %v3765 = vand.u32 %v2213, 4294901760
        %v3766 = vsub.f32 %v2213, %v3765
        %v3767 = vand.u32 %v3766, 4294901760
        %3768 = vmatpush1.msra.mxu0 %v3767
        %v3769 = vand.u32 %v2218, 4294901760
        %v3770 = vsub.f32 %v2218, %v3769
        %v3771 = vand.u32 %v3770, 4294901760
        %3772 = vmatprep.subr.mxu0 %v3771
        %v3773 = vand.u32 %v2217, 4294901760
        %v3774 = vsub.f32 %v2217, %v3773
        %v3775 = vand.u32 %v3774, 4294901760
        %3776 = vmatpush1.msra.mxu0 %v3775
        %v3777 = vand.u32 %v2222, 4294901760
        %v3778 = vsub.f32 %v2222, %v3777
        %v3779 = vand.u32 %v3778, 4294901760
        %3780 = vmatprep.subr.mxu0 %v3779
        %v3781 = vand.u32 %v2221, 4294901760
        %v3782 = vsub.f32 %v2221, %v3781
        %v3783 = vand.u32 %v3782, 4294901760
        %3784 = vmatpush1.msra.mxu0 %v3783
        %v3785 = vand.u32 %v2226, 4294901760
        %v3786 = vsub.f32 %v2226, %v3785
        %v3787 = vand.u32 %v3786, 4294901760
        %3788 = vmatprep.subr.mxu0 %v3787
        %v3789 = vand.u32 %v2225, 4294901760
        %v3790 = vsub.f32 %v2225, %v3789
        %v3791 = vand.u32 %v3790, 4294901760
        %3792 = vmatpush1.msra.mxu0 %v3791
        %3793 = vmatprep.subr.mxu0 0.0
        %3794 = vmatpush1.msra.mxu0 0.0
        %3795 = vmatprep.subr.mxu0 0.0
        %3796 = vmatpush1.msra.mxu0 0.0
        %3797 = vmatprep.subr.mxu0 0.0
        %3798 = vmatpush1.msra.mxu0 0.0
        %3799 = vmatprep.subr.mxu0 0.0
        %3800 = vmatpush1.msra.mxu0 0.0
        %3801 = vmatprep.subr.mxu0 0.0
        %3802 = vmatpush1.msra.mxu0 0.0
        %3803 = vmatprep.subr.mxu0 0.0
        %3804 = vmatpush1.msra.mxu0 0.0
        %3805 = vmatprep.subr.mxu0 0.0
        %3806 = vmatpush1.msra.mxu0 0.0
        %3807 = vmatprep.subr.mxu0 0.0
        %3808 = vmatpush1.msra.mxu0 0.0
        %3809 = vmatprep.subr.mxu0 0.0
        %3810 = vmatpush1.msra.mxu0 0.0
        %3811 = vmatprep.subr.mxu0 0.0
        %3812 = vmatpush1.msra.mxu0 0.0
        %3813 = vmatprep.subr.mxu0 0.0
        %3814 = vmatpush1.msra.mxu0 0.0
        %3815 = vmatprep.subr.mxu0 0.0
        %3816 = vmatpush1.msra.mxu0 0.0
        %3817 = vmatprep.subr.mxu0 0.0
        %3818 = vmatpush1.msra.mxu0 0.0
        %3819 = vmatprep.subr.mxu0 0.0
        %3820 = vmatpush1.msra.mxu0 0.0
        %3821 = vmatprep.subr.mxu0 0.0
        %3822 = vmatpush1.msra.mxu0 0.0
        %3823 = vmatprep.subr.mxu0 0.0
        %3824 = vmatpush1.msra.mxu0 0.0
        %3825 = vmatprep.mubr.f32.mxu0 0.0
        %v3826 = vand.u32 %v2162, 4294901760
        %3827 = vmatmul.mubr.f32.gmra.mrb[0].mxu0 %v3826
        %v3828 = vpop.f32.mrb[0].mxu0
        %v3829 = vadd.f32 %v3661, %v3828
        %v3830 = vpop.f32.mrb[0].mxu0
        %v3831 = vadd.f32 %v3663, %v3830
        %3832 = vdwg.mxu0
        %v3833 = vand.u32 %v2166, 4294901760
        %3834 = vmatprep.subr.mxu0 %v3833
        %v3835 = vand.u32 %v2165, 4294901760
        %3836 = vmatpush1.msra.mxu0 %v3835
        %v3837 = vand.u32 %v2170, 4294901760
        %3838 = vmatprep.subr.mxu0 %v3837
        %v3839 = vand.u32 %v2169, 4294901760
        %3840 = vmatpush1.msra.mxu0 %v3839
        %v3841 = vand.u32 %v2174, 4294901760
        %3842 = vmatprep.subr.mxu0 %v3841
        %v3843 = vand.u32 %v2173, 4294901760
        %3844 = vmatpush1.msra.mxu0 %v3843
        %v3845 = vand.u32 %v2178, 4294901760
        %3846 = vmatprep.subr.mxu0 %v3845
        %v3847 = vand.u32 %v2177, 4294901760
        %3848 = vmatpush1.msra.mxu0 %v3847
        %v3849 = vand.u32 %v2182, 4294901760
        %3850 = vmatprep.subr.mxu0 %v3849
        %v3851 = vand.u32 %v2181, 4294901760
        %3852 = vmatpush1.msra.mxu0 %v3851
        %v3853 = vand.u32 %v2186, 4294901760
        %3854 = vmatprep.subr.mxu0 %v3853
        %v3855 = vand.u32 %v2185, 4294901760
        %3856 = vmatpush1.msra.mxu0 %v3855
        %v3857 = vand.u32 %v2190, 4294901760
        %3858 = vmatprep.subr.mxu0 %v3857
        %v3859 = vand.u32 %v2189, 4294901760
        %3860 = vmatpush1.msra.mxu0 %v3859
        %v3861 = vand.u32 %v2194, 4294901760
        %3862 = vmatprep.subr.mxu0 %v3861
        %v3863 = vand.u32 %v2193, 4294901760
        %3864 = vmatpush1.msra.mxu0 %v3863
        %v3865 = vand.u32 %v2198, 4294901760
        %3866 = vmatprep.subr.mxu0 %v3865
        %v3867 = vand.u32 %v2197, 4294901760
        %3868 = vmatpush1.msra.mxu0 %v3867
        %v3869 = vand.u32 %v2202, 4294901760
        %3870 = vmatprep.subr.mxu0 %v3869
        %v3871 = vand.u32 %v2201, 4294901760
        %3872 = vmatpush1.msra.mxu0 %v3871
        %v3873 = vand.u32 %v2206, 4294901760
        %3874 = vmatprep.subr.mxu0 %v3873
        %v3875 = vand.u32 %v2205, 4294901760
        %3876 = vmatpush1.msra.mxu0 %v3875
        %v3877 = vand.u32 %v2210, 4294901760
        %3878 = vmatprep.subr.mxu0 %v3877
        %v3879 = vand.u32 %v2209, 4294901760
        %3880 = vmatpush1.msra.mxu0 %v3879
        %v3881 = vand.u32 %v2214, 4294901760
        %3882 = vmatprep.subr.mxu0 %v3881
        %v3883 = vand.u32 %v2213, 4294901760
        %3884 = vmatpush1.msra.mxu0 %v3883
        %v3885 = vand.u32 %v2218, 4294901760
        %3886 = vmatprep.subr.mxu0 %v3885
        %v3887 = vand.u32 %v2217, 4294901760
        %3888 = vmatpush1.msra.mxu0 %v3887
        %v3889 = vand.u32 %v2222, 4294901760
        %3890 = vmatprep.subr.mxu0 %v3889
        %v3891 = vand.u32 %v2221, 4294901760
        %3892 = vmatpush1.msra.mxu0 %v3891
        %v3893 = vand.u32 %v2226, 4294901760
        %3894 = vmatprep.subr.mxu0 %v3893
        %v3895 = vand.u32 %v2225, 4294901760
        %3896 = vmatpush1.msra.mxu0 %v3895
        %3897 = vmatprep.subr.mxu0 0.0
        %3898 = vmatpush1.msra.mxu0 0.0
        %3899 = vmatprep.subr.mxu0 0.0
        %3900 = vmatpush1.msra.mxu0 0.0
        %3901 = vmatprep.subr.mxu0 0.0
        %3902 = vmatpush1.msra.mxu0 0.0
        %3903 = vmatprep.subr.mxu0 0.0
        %3904 = vmatpush1.msra.mxu0 0.0
        %3905 = vmatprep.subr.mxu0 0.0
        %3906 = vmatpush1.msra.mxu0 0.0
        %3907 = vmatprep.subr.mxu0 0.0
        %3908 = vmatpush1.msra.mxu0 0.0
        %3909 = vmatprep.subr.mxu0 0.0
        %3910 = vmatpush1.msra.mxu0 0.0
        %3911 = vmatprep.subr.mxu0 0.0
        %3912 = vmatpush1.msra.mxu0 0.0
        %3913 = vmatprep.subr.mxu0 0.0
        %3914 = vmatpush1.msra.mxu0 0.0
        %3915 = vmatprep.subr.mxu0 0.0
        %3916 = vmatpush1.msra.mxu0 0.0
        %3917 = vmatprep.subr.mxu0 0.0
        %3918 = vmatpush1.msra.mxu0 0.0
        %3919 = vmatprep.subr.mxu0 0.0
        %3920 = vmatpush1.msra.mxu0 0.0
        %3921 = vmatprep.subr.mxu0 0.0
        %3922 = vmatpush1.msra.mxu0 0.0
        %3923 = vmatprep.subr.mxu0 0.0
        %3924 = vmatpush1.msra.mxu0 0.0
        %3925 = vmatprep.subr.mxu0 0.0
        %3926 = vmatpush1.msra.mxu0 0.0
        %3927 = vmatprep.subr.mxu0 0.0
        %3928 = vmatpush1.msra.mxu0 0.0
        %3929 = vmatprep.mubr.f32.mxu0 0.0
        %v3930 = vand.u32 %v2162, 4294901760
        %3931 = vmatmul.mubr.f32.gmra.mrb[0].mxu0 %v3930
        %v3932 = vpop.f32.mrb[0].mxu0
        %v3933 = vadd.f32 %v3829, %v3932
        %v3934 = vpop.f32.mrb[0].mxu0
        %v3935 = vadd.f32 %v3831, %v3934
        %3936 = vdwg.mxu0
        %v3941 = vcombine.low %v3078, %v3080
        %v3942 = vcombine.low %v3933, %v3935
        %v3944 = vunpack.c.l.s4 1983009808
        %v3945 = vunpack.c.0.s8 %v3944
        %v3946 = vlaneseq
        %v3947 = vshrl.u32 %v3946, 7
        %v3948 = vsub.s32 %v3945, %v3947
        %v3949 = vrot.slane %v3941, %v3948
        %v3951 = vunpack.c.l.s4 1983009808
        %v3952 = vunpack.c.0.s8 %v3951
        %v3953 = vlaneseq
        %v3954 = vshrl.u32 %v3953, 7
        %v3955 = vsub.s32 %v3952, %v3954
        %v3956 = vrot.slane %v3942, %v3955
        %v3957 = vcombine.low %v3949, %v3956
        %s3959 = scalar_lea.vmem %s318, 8
        %3960 = vst [vmem:[%s3959] sm:$0xff] %v3957
        %v3961 = vld [vmem:[%s309] sm:$0xff]
        %v3962 = vld [vmem:[%s309 + $0x8] sm:$0xff]
        %s3963 = scalar_lea.vmem %s318, 16
        %3964 = vst [vmem:[%s3963] sm:$0xff] %v3961
        %3965 = vst [vmem:[%s3963 + $0x8] sm:$0xff] %v3962
        %p3966 = scmp.lt.s32.totalorder %s22, 1
        %s3967 = scalar_select %p3966, %s22, 1
        %p3968 = scmp.lt.s32.totalorder %s23, 0
        %s3969 = scalar_select %p3968, %s23, 0
        %s3970 = smul.addr %s3969, 4
        %s3971 = smul.addr %s3967, 16
        %s3972 = sadd.s32 %s3970, %s3971
        %s3973 = smul.addr %s3972, 2
        %s3974 = scalar_lea.vmem %s5, %s3973
        // Predicated region
        $region49: #{upsample_forward.1} parent=39 // pred_check
          %p3975 = pneg %p169
        $region50: #{upsample_forward.1} parent=39 // pred_check_branch
          %3977 = sbr.rel (%p3975) target = $region52
        $region51: #{upsample_forward.1} parent=39 // pred_region
          _
        $region52: #{upsample_forward.1} parent=39 // pred_fallthru
          _
      $region40: #{upsample_forward.1} parent=5 // pred_fallthru
        _
      %p3978 = scmp.le.s32.totalorder 2, %s13
      // Predicated region
      $region53: #{upsample_forward.1} parent=5 // pred_check
        %p3979 = pneg %p3978
      $region54: #{upsample_forward.1} parent=5 // pred_check_branch
        %3981 = sbr.rel (%p3979) target = $region56
      $region55: #{upsample_forward.1} parent=5 // pred_region
        %s3982 = ssub.s32 %s13, 2
        // Predicated region
        $region57: #{upsample_forward.1} parent=55 // pred_check
          %p3983 = pneg %p175
        $region58: #{upsample_forward.1} parent=55 // pred_check_branch
          %3985 = sbr.rel (%p3983) target = $region60
        $region59: #{upsample_forward.1} parent=55 // pred_region
          %p3986 = scmp.lt.s32.totalorder %s24, 1
          %s3987 = scalar_select %p3986, %s24, 1
          %p3988 = scmp.lt.s32.totalorder %s25, 0
          %s3989 = scalar_select %p3988, %s25, 0
          %s3990 = smul.addr %s3989, 4
          %s3991 = smul.addr %s3987, 16
          %s3992 = sadd.s32 %s3990, %s3991
          %s3993 = smul.addr %s3992, 2
          %s3994 = scalar_lea.vmem %s5, %s3993
        $region60: #{upsample_forward.1} parent=55 // pred_fallthru
          _
      $region56: #{upsample_forward.1} parent=5 // pred_fallthru
        _
    $region6: #{upsample_forward.1} parent=1 // loop_footer
      %s17 = sadd.s32 1, %s13
    $region7: #{upsample_forward.1} parent=1 // loop_footer_branch
      %12 = sbr.rel target = $region3
    $region8: #{upsample_forward.1} parent=1 // loop_exit
      _
    %3995 = vsyncpa [#allocation3], 1
    %s3996 = scalar_lea.sflag [#allocation3], 1
    %3997 = vsyncpa %s3996, 1
    %3998 = vsyncpa [#allocation5], 1

</llo_original>
